<compile_context>
chip_gen: v7x
topology: tpu7x:2x2x1
jax: 0.10.0
libtpu: 0.0.40
codegen_flags: <defaults>
</compile_context>

<pallas_src>
import math

import jax
import jax.numpy as jnp
from jax.experimental import pallas as pl
from jax.experimental.pallas import tpu as pltpu

# ----------------------------- configuration --------------------------------
EMBED_DIM   = 64
FF_DIM      = 256
NUM_HEADS   = 2
NUM_LAYERS  = 4
LATENT_DIM  = 16
OUT_DIM     = 1
VOCAB_SIZE  = 8
PADDING_IDX = 0
SEP_IDX     = 2
MAX_LEN     = 8          # sequence length used below (== self.max_len)
LN_EPS      = 1e-5       # nn.TransformerEncoderLayer default layer_norm_eps


# ----------------------------- kernel helpers --------------------------------
def _layer_norm(x, g, b):
    """Post-LN, biased variance, f32 math (matches nn.LayerNorm eval)."""
    mu = jnp.mean(x, axis=-1, keepdims=True)
    xc = x - mu
    var = jnp.mean(xc * xc, axis=-1, keepdims=True)
    return xc * jax.lax.rsqrt(var + LN_EPS) * g + b


def _attention(qkv, w_o, b_o, bias3, num_heads, model_dim):
    """Multi-head self-attention from a pre-projected fused qkv tensor.

    qkv:    (B, S, 3*model_dim) f32, columns = [q_h0..q_hH | k ... | v ...]
    w_o:    (model_dim, model_dim) bf16 output projection
    b_o:    (1, model_dim) f32
    bias3:  (B, 1, S) f32 additive key-padding bias (0 valid / -1e9 padded)
    """
    dh = model_dim // num_heads
    scale = 1.0 / math.sqrt(dh)
    qkv16 = qkv.astype(jnp.bfloat16)        # cast once, slice per head below

    out = b_o                               # (1,model_dim) broadcasts to (B,S,·)
    for h in range(num_heads):              # static unroll (tiny head count)
        qh = qkv16[:, :, h * dh:(h + 1) * dh]
        kh = qkv16[:, :, model_dim + h * dh:model_dim + (h + 1) * dh]
        vh = qkv16[:, :, 2 * model_dim + h * dh:2 * model_dim + (h + 1) * dh]
        s = jnp.einsum('bqd,bkd->bqk', qh, kh,
                       preferred_element_type=jnp.float32) * scale + bias3
        m = jnp.max(s, axis=-1, keepdims=True)            # f32 softmax
        p = jnp.exp(s - m)
        p = p * pl.reciprocal(jnp.sum(p, axis=-1, keepdims=True), approx=True)
        oh = jnp.einsum('bqk,bkd->bqd', p.astype(jnp.bfloat16), vh,
                        preferred_element_type=jnp.float32)            # (B,S,dh)
        # Fold the head concat into the output projection: sublane-aligned
        # weight row slice instead of a lane-axis activation concatenate.
        out = out + jnp.einsum('bsd,de->bse', oh.astype(jnp.bfloat16),
                               w_o[h * dh:(h + 1) * dh, :],
                               preferred_element_type=jnp.float32)
    return out


# ----------------------------- fused Pallas kernel ----------------------------
def transformer_kernel(x_ref, bias_ref, pool_ref,
                       # encoder stack (stacked over NUM_LAYERS on axis 0)
                       wqkv_ref, bqkv_ref, wo_ref, bo_ref,
                       ln1g_ref, ln1b_ref, w1_ref, b1_ref, w2_ref, b2_ref,
                       ln2g_ref, ln2b_ref,
                       # FunctionHead (embed2latent folded into its qkv proj)
                       hwqkv_ref, hbqkv_ref, hwo_ref, hbo_ref,
                       pooled_ref):
    x = x_ref[...]                                   # (B,S,E) f32
    bias3 = bias_ref[...][:, None, :]                # (B,1,S) hoisted once

    # ---- num_layers post-LN TransformerEncoder layers (batch_first, ReLU) ----
    for l in range(NUM_LAYERS):                      # static unroll
        qkv = jnp.einsum('bse,ef->bsf', x.astype(jnp.bfloat16), wqkv_ref[l],
                         preferred_element_type=jnp.float32) + bqkv_ref[l]
        attn = _attention(qkv, wo_ref[l], bo_ref[l], bias3,
                          NUM_HEADS, EMBED_DIM)
        x = _layer_norm(x + attn, ln1g_ref[l], ln1b_ref[l])
        h = jnp.einsum('bse,ef->bsf', x.astype(jnp.bfloat16), w1_ref[l],
                       preferred_element_type=jnp.float32) + b1_ref[l]
        h = jnp.maximum(h, 0.0)                      # ReLU
        ff = jnp.einsum('bsf,fe->bse', h.astype(jnp.bfloat16), w2_ref[l],
                        preferred_element_type=jnp.float32) + b2_ref[l]
        x = _layer_norm(x + ff, ln2g_ref[l], ln2b_ref[l])

    # ---- FunctionHead: (embed2latent ∘ qkv-proj) fused matmul, MHA, pool ----
    hqkv = jnp.einsum('bse,ef->bsf', x.astype(jnp.bfloat16), hwqkv_ref[...],
                      preferred_element_type=jnp.float32) + hbqkv_ref[...]
    attn = _attention(hqkv, hwo_ref[...], hbo_ref[...], bias3,
                      NUM_HEADS, LATENT_DIM)                            # (B,S,L)
    pm = pool_ref[...]                                                  # (B,S)
    num = jnp.sum(pm[:, :, None] * attn, axis=1)                        # (B,L)
    den = jnp.sum(pm, axis=-1, keepdims=True) + 1e-6                    # (B,1)
    pooled_ref[...] = num * pl.reciprocal(den, approx=True)


# ----------------------------- wrapper ----------------------------------------
def run_transformer(x, attn_bias, pooling_mask, enc_args, head_args):
    args = (x, attn_bias, pooling_mask) + enc_args + head_args
    return pl.pallas_call(
        transformer_kernel,
        out_shape=jax.ShapeDtypeStruct((x.shape[0], LATENT_DIM), jnp.float32),
        in_specs=[pl.BlockSpec(memory_space=pltpu.MemorySpace.VMEM)] * len(args),
        out_specs=pl.BlockSpec(memory_space=pltpu.MemorySpace.VMEM),
    )(*args)


# ----------------------------- parameter init --------------------------------
def init_params(key):
    keys = iter(jax.random.split(key, 32))

    def w(shape, scale=0.05, dtype=jnp.float32):
        return (scale * jax.random.normal(next(keys), shape)).astype(dtype)

    L, E, F, Dl = NUM_LAYERS, EMBED_DIM, FF_DIM, LATENT_DIM
    bf16 = jnp.bfloat16

    emb = w((VOCAB_SIZE, E), 1.0)
    emb = emb.at[PADDING_IDX].set(0.0)   # nn.Embedding(padding_idx=...) zero row

    enc = (
        w((L, E, 3 * E), dtype=bf16),                  # fused q/k/v weight
        w((L, 1, 3 * E), 0.01),                        # fused q/k/v bias (f32)
        w((L, E, E), dtype=bf16), w((L, 1, E), 0.01),  # wo, bo
        jnp.ones((L, 1, E), jnp.float32), jnp.zeros((L, 1, E), jnp.float32),
        w((L, E, F), dtype=bf16), w((L, 1, F), 0.01),  # ffn w1, b1
        w((L, F, E), dtype=bf16), w((L, 1, E), 0.01),  # ffn w2, b2
        jnp.ones((L, 1, E), jnp.float32), jnp.zeros((L, 1, E), jnp.float32),
    )

    # FunctionHead: embed2latent (E->L) and the head's fused q/k/v (L->3L) are
    # folded in f32 on the host (no nonlinearity between them):
    #   qkv = (x @ We2l + be2l) @ Wqkv + bqkv = x @ (We2l@Wqkv) + (be2l@Wqkv + bqkv)
    we2l, be2l = w((E, Dl)), w((1, Dl), 0.01)
    hwqkv, hbqkv = w((Dl, 3 * Dl)), w((1, 3 * Dl), 0.01)
    head = (
        (we2l @ hwqkv).astype(bf16),                   # fused (E, 3L) weight
        be2l @ hwqkv + hbqkv,                          # fused (1, 3L) bias (f32)
        w((Dl, Dl), dtype=bf16), w((1, Dl), 0.01),     # head wo, bo
    )
    final = (w((Dl, OUT_DIM)), w((1, OUT_DIM), 0.01))  # final Linear (JAX)
    return emb, enc, head, final


# ----------------------------- main -------------------------------------------
if __name__ == "__main__":
    B, S = 2, MAX_LEN
    key = jax.random.PRNGKey(0)
    k_tok, k_par = jax.random.split(key)

    tok = jax.random.randint(k_tok, (B, S), 1, VOCAB_SIZE).astype(jnp.int32)
    tok = tok.at[1, S - 2:].set(PADDING_IDX)   # padded tail in batch element 1
    tok = tok.at[0, S - 1].set(SEP_IDX)        # separator token (excluded from pool)

    emb, enc_args, head_args, (w_final, b_final) = init_params(k_par)

    # glue: embedding gather, sqrt(E) scale, sinusoidal positional encoding
    pos = jnp.arange(MAX_LEN, dtype=jnp.float32)[:, None]
    div = jnp.exp(jnp.arange(0, EMBED_DIM, 2, dtype=jnp.float32)
                  * (-math.log(10000.0) / EMBED_DIM))
    pe = jnp.zeros((MAX_LEN, EMBED_DIM), jnp.float32)
    pe = pe.at[:, 0::2].set(jnp.sin(pos * div))
    pe = pe.at[:, 1::2].set(jnp.cos(pos * div))
    x = emb[tok] * math.sqrt(EMBED_DIM) + pe[None, :S, :]
    # TODO(synk): dropout in PositionalEncoding / encoder / FunctionHead is
    # identity in eval mode and is intentionally omitted.

    key_pad = (tok == PADDING_IDX)
    attn_bias = jnp.where(key_pad, -1e9, 0.0).astype(jnp.float32)     # (B,S)
    src_mask = (~key_pad).astype(jnp.float32)                         # (B,S)
    pooling_mask = src_mask * (tok != SEP_IDX).astype(jnp.float32)    # (B,S)

    pooled = run_transformer(x.astype(jnp.float32), attn_bias, pooling_mask,
                             enc_args, head_args)                     # (B, LATENT)
    # Tiny OUT_DIM=1 projection kept in JAX so the kernel output stays lane-dense
    # (avoids a last-dim-1 masked-store output inside the kernel).
    out = pooled @ w_final + b_final                                  # (B, OUT_DIM)
    out = jax.block_until_ready(out)
    assert out.shape == (B, OUT_DIM) and bool(jnp.all(jnp.isfinite(out)))
    print("KERNEL_OK")
</pallas_src>

<mosaic_0001>
module attributes {stable_mosaic.version = 11 : i64} {
  func.func @transformer_kernel(%arg0: memref<2x8x64xf32, #tpu.memory_space<vmem>>, %arg1: memref<2x8xf32, #tpu.memory_space<vmem>>, %arg2: memref<2x8xf32, #tpu.memory_space<vmem>>, %arg3: memref<4x64x192xbf16, #tpu.memory_space<vmem>>, %arg4: memref<4x1x192xf32, #tpu.memory_space<vmem>>, %arg5: memref<4x64x64xbf16, #tpu.memory_space<vmem>>, %arg6: memref<4x1x64xf32, #tpu.memory_space<vmem>>, %arg7: memref<4x1x64xf32, #tpu.memory_space<vmem>>, %arg8: memref<4x1x64xf32, #tpu.memory_space<vmem>>, %arg9: memref<4x64x256xbf16, #tpu.memory_space<vmem>>, %arg10: memref<4x1x256xf32, #tpu.memory_space<vmem>>, %arg11: memref<4x256x64xbf16, #tpu.memory_space<vmem>>, %arg12: memref<4x1x64xf32, #tpu.memory_space<vmem>>, %arg13: memref<4x1x64xf32, #tpu.memory_space<vmem>>, %arg14: memref<4x1x64xf32, #tpu.memory_space<vmem>>, %arg15: memref<64x48xbf16, #tpu.memory_space<vmem>>, %arg16: memref<1x48xf32, #tpu.memory_space<vmem>>, %arg17: memref<16x16xbf16, #tpu.memory_space<vmem>>, %arg18: memref<1x16xf32, #tpu.memory_space<vmem>>, %arg19: memref<2x16xf32, #tpu.memory_space<vmem>>) attributes {dimension_semantics = [], scalar_prefetch = 0 : i64, scratch_operands = 0 : i64, tpu.core_type = #tpu.core_type<tc>} {
    %c0 = arith.constant 0 : index
    %c0_0 = arith.constant 0 : index
    %c0_1 = arith.constant 0 : index
    %0 = vector.load %arg0[%c0, %c0_0, %c0_1] : memref<2x8x64xf32, #tpu.memory_space<vmem>>, vector<2x8x64xf32>
    %c0_2 = arith.constant 0 : index
    %c0_3 = arith.constant 0 : index
    %1 = vector.load %arg1[%c0_2, %c0_3] : memref<2x8xf32, #tpu.memory_space<vmem>>, vector<2x8xf32>
    %2 = vector.shape_cast %1 : vector<2x8xf32> to vector<2x1x8xf32>
    %3 = arith.truncf %0 : vector<2x8x64xf32> to vector<2x8x64xbf16>
    %c0_4 = arith.constant 0 : index
    %c0_5 = arith.constant 0 : index
    %c0_6 = arith.constant 0 : index
    %4 = vector.load %arg3[%c0_4, %c0_5, %c0_6] : memref<4x64x192xbf16, #tpu.memory_space<vmem>>, vector<1x64x192xbf16>
    %5 = vector.shape_cast %4 : vector<1x64x192xbf16> to vector<64x192xbf16>
    "tpu.trace_start"() <{level = 10 : i32, message = "bse,ef->bsf"}> : () -> ()
    %cst = arith.constant dense<0.000000e+00> : vector<2x8x192xf32>
    %6 = tpu.matmul %3, %5, %cst {dimension_numbers = #tpu.dot_dimension_numbers<[2], [0], [0, 1], [1], [0, 0, 0, 1, 1, 1], [], []>} : vector<2x8x64xbf16>, vector<64x192xbf16>, vector<2x8x192xf32> -> vector<2x8x192xf32>
    "tpu.trace_stop"() : () -> ()
    %c0_7 = arith.constant 0 : index
    %c0_8 = arith.constant 0 : index
    %c0_9 = arith.constant 0 : index
    %7 = vector.load %arg4[%c0_7, %c0_8, %c0_9] : memref<4x1x192xf32, #tpu.memory_space<vmem>>, vector<1x1x192xf32>
    %8 = vector.shape_cast %7 : vector<1x1x192xf32> to vector<1x192xf32>
    %9 = vector.shape_cast %8 : vector<1x192xf32> to vector<1x1x192xf32>
    %10 = vector.broadcast %9 : vector<1x1x192xf32> to vector<2x8x192xf32>
    %11 = arith.addf %6, %10 : vector<2x8x192xf32>
    %c0_10 = arith.constant 0 : index
    %c0_11 = arith.constant 0 : index
    %c0_12 = arith.constant 0 : index
    %12 = vector.load %arg5[%c0_10, %c0_11, %c0_12] : memref<4x64x64xbf16, #tpu.memory_space<vmem>>, vector<1x64x64xbf16>
    %13 = vector.shape_cast %12 : vector<1x64x64xbf16> to vector<64x64xbf16>
    %c0_13 = arith.constant 0 : index
    %c0_14 = arith.constant 0 : index
    %c0_15 = arith.constant 0 : index
    %14 = vector.load %arg6[%c0_13, %c0_14, %c0_15] : memref<4x1x64xf32, #tpu.memory_space<vmem>>, vector<1x1x64xf32>
    %15 = vector.shape_cast %14 : vector<1x1x64xf32> to vector<1x64xf32>
    %16 = arith.truncf %11 : vector<2x8x192xf32> to vector<2x8x192xbf16>
    %17 = vector.extract_strided_slice %16 {offsets = [0, 0, 0], sizes = [2, 8, 32], strides = [1, 1, 1]} : vector<2x8x192xbf16> to vector<2x8x32xbf16>
    %18 = vector.extract_strided_slice %16 {offsets = [0, 0, 64], sizes = [2, 8, 32], strides = [1, 1, 1]} : vector<2x8x192xbf16> to vector<2x8x32xbf16>
    %19 = vector.extract_strided_slice %16 {offsets = [0, 0, 128], sizes = [2, 8, 32], strides = [1, 1, 1]} : vector<2x8x192xbf16> to vector<2x8x32xbf16>
    "tpu.trace_start"() <{level = 10 : i32, message = "bqd,bkd->bqk"}> : () -> ()
    %cst_16 = arith.constant dense<0.000000e+00> : vector<2x8x8xf32>
    %20 = tpu.matmul %17, %18, %cst_16 {dimension_numbers = #tpu.dot_dimension_numbers<[2], [2], [1], [1], [0, 0, 0, 1, 1, 1], [0], [0]>} : vector<2x8x32xbf16>, vector<2x8x32xbf16>, vector<2x8x8xf32> -> vector<2x8x8xf32>
    "tpu.trace_stop"() : () -> ()
    %cst_17 = arith.constant 0.176776692 : f32
    %21 = vector.broadcast %cst_17 : f32 to vector<2x8x8xf32>
    %22 = arith.mulf %20, %21 : vector<2x8x8xf32>
    %23 = vector.broadcast %2 : vector<2x1x8xf32> to vector<2x8x8xf32>
    %24 = arith.addf %22, %23 : vector<2x8x8xf32>
    %cst_18 = arith.constant dense<0xFF800000> : vector<2x8xf32>
    %25 = vector.multi_reduction <maximumf>, %24, %cst_18 [2] : vector<2x8x8xf32> to vector<2x8xf32>
    %26 = vector.shape_cast %25 : vector<2x8xf32> to vector<2x8x1xf32>
    %27 = vector.broadcast %26 : vector<2x8x1xf32> to vector<2x8x8xf32>
    %28 = arith.subf %24, %27 : vector<2x8x8xf32>
    %29 = math.exp %28 : vector<2x8x8xf32>
    %cst_19 = arith.constant dense<0.000000e+00> : vector<2x8xf32>
    %30 = vector.multi_reduction <add>, %29, %cst_19 [2] : vector<2x8x8xf32> to vector<2x8xf32>
    %31 = vector.shape_cast %30 : vector<2x8xf32> to vector<2x8x1xf32>
    %32 = tpu.reciprocal %31 {approx = true} : vector<2x8x1xf32> -> vector<2x8x1xf32>
    %33 = vector.broadcast %32 : vector<2x8x1xf32> to vector<2x8x8xf32>
    %34 = arith.mulf %29, %33 : vector<2x8x8xf32>
    %35 = arith.truncf %34 : vector<2x8x8xf32> to vector<2x8x8xbf16>
    "tpu.trace_start"() <{level = 10 : i32, message = "bqk,bkd->bqd"}> : () -> ()
    %cst_20 = arith.constant dense<0.000000e+00> : vector<2x8x32xf32>
    %36 = tpu.matmul %35, %19, %cst_20 {dimension_numbers = #tpu.dot_dimension_numbers<[2], [1], [1], [2], [0, 0, 0, 1, 1, 2], [0], [0]>} : vector<2x8x8xbf16>, vector<2x8x32xbf16>, vector<2x8x32xf32> -> vector<2x8x32xf32>
    "tpu.trace_stop"() : () -> ()
    %37 = arith.truncf %36 : vector<2x8x32xf32> to vector<2x8x32xbf16>
    %38 = vector.extract_strided_slice %13 {offsets = [0, 0], sizes = [32, 64], strides = [1, 1]} : vector<64x64xbf16> to vector<32x64xbf16>
    "tpu.trace_start"() <{level = 10 : i32, message = "bsd,de->bse"}> : () -> ()
    %cst_21 = arith.constant dense<0.000000e+00> : vector<2x8x64xf32>
    %39 = tpu.matmul %37, %38, %cst_21 {dimension_numbers = #tpu.dot_dimension_numbers<[2], [0], [0, 1], [1], [0, 0, 0, 1, 1, 1], [], []>} : vector<2x8x32xbf16>, vector<32x64xbf16>, vector<2x8x64xf32> -> vector<2x8x64xf32>
    "tpu.trace_stop"() : () -> ()
    %40 = vector.shape_cast %15 : vector<1x64xf32> to vector<1x1x64xf32>
    %41 = vector.broadcast %40 : vector<1x1x64xf32> to vector<2x8x64xf32>
    %42 = arith.addf %41, %39 : vector<2x8x64xf32>
    %43 = vector.extract_strided_slice %16 {offsets = [0, 0, 32], sizes = [2, 8, 32], strides = [1, 1, 1]} : vector<2x8x192xbf16> to vector<2x8x32xbf16>
    %44 = vector.extract_strided_slice %16 {offsets = [0, 0, 96], sizes = [2, 8, 32], strides = [1, 1, 1]} : vector<2x8x192xbf16> to vector<2x8x32xbf16>
    %45 = vector.extract_strided_slice %16 {offsets = [0, 0, 160], sizes = [2, 8, 32], strides = [1, 1, 1]} : vector<2x8x192xbf16> to vector<2x8x32xbf16>
    "tpu.trace_start"() <{level = 10 : i32, message = "bqd,bkd->bqk"}> : () -> ()
    %cst_22 = arith.constant dense<0.000000e+00> : vector<2x8x8xf32>
    %46 = tpu.matmul %43, %44, %cst_22 {dimension_numbers = #tpu.dot_dimension_numbers<[2], [2], [1], [1], [0, 0, 0, 1, 1, 1], [0], [0]>} : vector<2x8x32xbf16>, vector<2x8x32xbf16>, vector<2x8x8xf32> -> vector<2x8x8xf32>
    "tpu.trace_stop"() : () -> ()
    %cst_23 = arith.constant 0.176776692 : f32
    %47 = vector.broadcast %cst_23 : f32 to vector<2x8x8xf32>
    %48 = arith.mulf %46, %47 : vector<2x8x8xf32>
    %49 = vector.broadcast %2 : vector<2x1x8xf32> to vector<2x8x8xf32>
    %50 = arith.addf %48, %49 : vector<2x8x8xf32>
    %cst_24 = arith.constant dense<0xFF800000> : vector<2x8xf32>
    %51 = vector.multi_reduction <maximumf>, %50, %cst_24 [2] : vector<2x8x8xf32> to vector<2x8xf32>
    %52 = vector.shape_cast %51 : vector<2x8xf32> to vector<2x8x1xf32>
    %53 = vector.broadcast %52 : vector<2x8x1xf32> to vector<2x8x8xf32>
    %54 = arith.subf %50, %53 : vector<2x8x8xf32>
    %55 = math.exp %54 : vector<2x8x8xf32>
    %cst_25 = arith.constant dense<0.000000e+00> : vector<2x8xf32>
    %56 = vector.multi_reduction <add>, %55, %cst_25 [2] : vector<2x8x8xf32> to vector<2x8xf32>
    %57 = vector.shape_cast %56 : vector<2x8xf32> to vector<2x8x1xf32>
    %58 = tpu.reciprocal %57 {approx = true} : vector<2x8x1xf32> -> vector<2x8x1xf32>
    %59 = vector.broadcast %58 : vector<2x8x1xf32> to vector<2x8x8xf32>
    %60 = arith.mulf %55, %59 : vector<2x8x8xf32>
    %61 = arith.truncf %60 : vector<2x8x8xf32> to vector<2x8x8xbf16>
    "tpu.trace_start"() <{level = 10 : i32, message = "bqk,bkd->bqd"}> : () -> ()
    %cst_26 = arith.constant dense<0.000000e+00> : vector<2x8x32xf32>
    %62 = tpu.matmul %61, %45, %cst_26 {dimension_numbers = #tpu.dot_dimension_numbers<[2], [1], [1], [2], [0, 0, 0, 1, 1, 2], [0], [0]>} : vector<2x8x8xbf16>, vector<2x8x32xbf16>, vector<2x8x32xf32> -> vector<2x8x32xf32>
    "tpu.trace_stop"() : () -> ()
    %63 = arith.truncf %62 : vector<2x8x32xf32> to vector<2x8x32xbf16>
    %64 = vector.extract_strided_slice %13 {offsets = [32, 0], sizes = [32, 64], strides = [1, 1]} : vector<64x64xbf16> to vector<32x64xbf16>
    "tpu.trace_start"() <{level = 10 : i32, message = "bsd,de->bse"}> : () -> ()
    %cst_27 = arith.constant dense<0.000000e+00> : vector<2x8x64xf32>
    %65 = tpu.matmul %63, %64, %cst_27 {dimension_numbers = #tpu.dot_dimension_numbers<[2], [0], [0, 1], [1], [0, 0, 0, 1, 1, 1], [], []>} : vector<2x8x32xbf16>, vector<32x64xbf16>, vector<2x8x64xf32> -> vector<2x8x64xf32>
    "tpu.trace_stop"() : () -> ()
    %66 = arith.addf %42, %65 : vector<2x8x64xf32>
    %67 = arith.addf %0, %66 : vector<2x8x64xf32>
    %c0_28 = arith.constant 0 : index
    %c0_29 = arith.constant 0 : index
    %c0_30 = arith.constant 0 : index
    %68 = vector.load %arg7[%c0_28, %c0_29, %c0_30] : memref<4x1x64xf32, #tpu.memory_space<vmem>>, vector<1x1x64xf32>
    %69 = vector.shape_cast %68 : vector<1x1x64xf32> to vector<1x64xf32>
    %c0_31 = arith.constant 0 : index
    %c0_32 = arith.constant 0 : index
    %c0_33 = arith.constant 0 : index
    %70 = vector.load %arg8[%c0_31, %c0_32, %c0_33] : memref<4x1x64xf32, #tpu.memory_space<vmem>>, vector<1x1x64xf32>
    %71 = vector.shape_cast %70 : vector<1x1x64xf32> to vector<1x64xf32>
    %cst_34 = arith.constant dense<0.000000e+00> : vector<2x8xf32>
    %72 = vector.multi_reduction <add>, %67, %cst_34 [2] : vector<2x8x64xf32> to vector<2x8xf32>
    %73 = vector.shape_cast %72 : vector<2x8xf32> to vector<2x8x1xf32>
    %cst_35 = arith.constant 6.400000e+01 : f32
    %74 = vector.broadcast %cst_35 : f32 to vector<2x8x1xf32>
    %75 = arith.divf %73, %74 : vector<2x8x1xf32>
    %76 = vector.broadcast %75 : vector<2x8x1xf32> to vector<2x8x64xf32>
    %77 = arith.subf %67, %76 : vector<2x8x64xf32>
    %78 = arith.mulf %77, %77 : vector<2x8x64xf32>
    %cst_36 = arith.constant dense<0.000000e+00> : vector<2x8xf32>
    %79 = vector.multi_reduction <add>, %78, %cst_36 [2] : vector<2x8x64xf32> to vector<2x8xf32>
    %80 = vector.shape_cast %79 : vector<2x8xf32> to vector<2x8x1xf32>
    %cst_37 = arith.constant 6.400000e+01 : f32
    %81 = vector.broadcast %cst_37 : f32 to vector<2x8x1xf32>
    %82 = arith.divf %80, %81 : vector<2x8x1xf32>
    %cst_38 = arith.constant 9.99999974E-6 : f32
    %83 = vector.broadcast %cst_38 : f32 to vector<2x8x1xf32>
    %84 = arith.addf %82, %83 : vector<2x8x1xf32>
    %85 = math.rsqrt %84 : vector<2x8x1xf32>
    %86 = vector.broadcast %85 : vector<2x8x1xf32> to vector<2x8x64xf32>
    %87 = arith.mulf %77, %86 : vector<2x8x64xf32>
    %88 = vector.shape_cast %69 : vector<1x64xf32> to vector<1x1x64xf32>
    %89 = vector.broadcast %88 : vector<1x1x64xf32> to vector<2x8x64xf32>
    %90 = arith.mulf %87, %89 : vector<2x8x64xf32>
    %91 = vector.shape_cast %71 : vector<1x64xf32> to vector<1x1x64xf32>
    %92 = vector.broadcast %91 : vector<1x1x64xf32> to vector<2x8x64xf32>
    %93 = arith.addf %90, %92 : vector<2x8x64xf32>
    %94 = arith.truncf %93 : vector<2x8x64xf32> to vector<2x8x64xbf16>
    %c0_39 = arith.constant 0 : index
    %c0_40 = arith.constant 0 : index
    %c0_41 = arith.constant 0 : index
    %95 = vector.load %arg9[%c0_39, %c0_40, %c0_41] : memref<4x64x256xbf16, #tpu.memory_space<vmem>>, vector<1x64x256xbf16>
    %96 = vector.shape_cast %95 : vector<1x64x256xbf16> to vector<64x256xbf16>
    "tpu.trace_start"() <{level = 10 : i32, message = "bse,ef->bsf"}> : () -> ()
    %cst_42 = arith.constant dense<0.000000e+00> : vector<2x8x256xf32>
    %97 = tpu.matmul %94, %96, %cst_42 {dimension_numbers = #tpu.dot_dimension_numbers<[2], [0], [0, 1], [1], [0, 0, 0, 1, 1, 1], [], []>} : vector<2x8x64xbf16>, vector<64x256xbf16>, vector<2x8x256xf32> -> vector<2x8x256xf32>
    "tpu.trace_stop"() : () -> ()
    %c0_43 = arith.constant 0 : index
    %c0_44 = arith.constant 0 : index
    %c0_45 = arith.constant 0 : index
    %98 = vector.load %arg10[%c0_43, %c0_44, %c0_45] : memref<4x1x256xf32, #tpu.memory_space<vmem>>, vector<1x1x256xf32>
    %99 = vector.shape_cast %98 : vector<1x1x256xf32> to vector<1x256xf32>
    %100 = vector.shape_cast %99 : vector<1x256xf32> to vector<1x1x256xf32>
    %101 = vector.broadcast %100 : vector<1x1x256xf32> to vector<2x8x256xf32>
    %102 = arith.addf %97, %101 : vector<2x8x256xf32>
    %cst_46 = arith.constant 0.000000e+00 : f32
    %103 = vector.broadcast %cst_46 : f32 to vector<2x8x256xf32>
    %104 = arith.maximumf %102, %103 : vector<2x8x256xf32>
    %105 = arith.truncf %104 : vector<2x8x256xf32> to vector<2x8x256xbf16>
    %c0_47 = arith.constant 0 : index
    %c0_48 = arith.constant 0 : index
    %c0_49 = arith.constant 0 : index
    %106 = vector.load %arg11[%c0_47, %c0_48, %c0_49] : memref<4x256x64xbf16, #tpu.memory_space<vmem>>, vector<1x256x64xbf16>
    %107 = vector.shape_cast %106 : vector<1x256x64xbf16> to vector<256x64xbf16>
    "tpu.trace_start"() <{level = 10 : i32, message = "bsf,fe->bse"}> : () -> ()
    %cst_50 = arith.constant dense<0.000000e+00> : vector<2x8x64xf32>
    %108 = tpu.matmul %105, %107, %cst_50 {dimension_numbers = #tpu.dot_dimension_numbers<[2], [0], [0, 1], [1], [0, 0, 0, 1, 1, 1], [], []>} : vector<2x8x256xbf16>, vector<256x64xbf16>, vector<2x8x64xf32> -> vector<2x8x64xf32>
    "tpu.trace_stop"() : () -> ()
    %c0_51 = arith.constant 0 : index
    %c0_52 = arith.constant 0 : index
    %c0_53 = arith.constant 0 : index
    %109 = vector.load %arg12[%c0_51, %c0_52, %c0_53] : memref<4x1x64xf32, #tpu.memory_space<vmem>>, vector<1x1x64xf32>
    %110 = vector.shape_cast %109 : vector<1x1x64xf32> to vector<1x64xf32>
    %111 = vector.shape_cast %110 : vector<1x64xf32> to vector<1x1x64xf32>
    %112 = vector.broadcast %111 : vector<1x1x64xf32> to vector<2x8x64xf32>
    %113 = arith.addf %108, %112 : vector<2x8x64xf32>
    %114 = arith.addf %93, %113 : vector<2x8x64xf32>
    %c0_54 = arith.constant 0 : index
    %c0_55 = arith.constant 0 : index
    %c0_56 = arith.constant 0 : index
    %115 = vector.load %arg13[%c0_54, %c0_55, %c0_56] : memref<4x1x64xf32, #tpu.memory_space<vmem>>, vector<1x1x64xf32>
    %116 = vector.shape_cast %115 : vector<1x1x64xf32> to vector<1x64xf32>
    %c0_57 = arith.constant 0 : index
    %c0_58 = arith.constant 0 : index
    %c0_59 = arith.constant 0 : index
    %117 = vector.load %arg14[%c0_57, %c0_58, %c0_59] : memref<4x1x64xf32, #tpu.memory_space<vmem>>, vector<1x1x64xf32>
    %118 = vector.shape_cast %117 : vector<1x1x64xf32> to vector<1x64xf32>
    %cst_60 = arith.constant dense<0.000000e+00> : vector<2x8xf32>
    %119 = vector.multi_reduction <add>, %114, %cst_60 [2] : vector<2x8x64xf32> to vector<2x8xf32>
    %120 = vector.shape_cast %119 : vector<2x8xf32> to vector<2x8x1xf32>
    %cst_61 = arith.constant 6.400000e+01 : f32
    %121 = vector.broadcast %cst_61 : f32 to vector<2x8x1xf32>
    %122 = arith.divf %120, %121 : vector<2x8x1xf32>
    %123 = vector.broadcast %122 : vector<2x8x1xf32> to vector<2x8x64xf32>
    %124 = arith.subf %114, %123 : vector<2x8x64xf32>
    %125 = arith.mulf %124, %124 : vector<2x8x64xf32>
    %cst_62 = arith.constant dense<0.000000e+00> : vector<2x8xf32>
    %126 = vector.multi_reduction <add>, %125, %cst_62 [2] : vector<2x8x64xf32> to vector<2x8xf32>
    %127 = vector.shape_cast %126 : vector<2x8xf32> to vector<2x8x1xf32>
    %cst_63 = arith.constant 6.400000e+01 : f32
    %128 = vector.broadcast %cst_63 : f32 to vector<2x8x1xf32>
    %129 = arith.divf %127, %128 : vector<2x8x1xf32>
    %cst_64 = arith.constant 9.99999974E-6 : f32
    %130 = vector.broadcast %cst_64 : f32 to vector<2x8x1xf32>
    %131 = arith.addf %129, %130 : vector<2x8x1xf32>
    %132 = math.rsqrt %131 : vector<2x8x1xf32>
    %133 = vector.broadcast %132 : vector<2x8x1xf32> to vector<2x8x64xf32>
    %134 = arith.mulf %124, %133 : vector<2x8x64xf32>
    %135 = vector.shape_cast %116 : vector<1x64xf32> to vector<1x1x64xf32>
    %136 = vector.broadcast %135 : vector<1x1x64xf32> to vector<2x8x64xf32>
    %137 = arith.mulf %134, %136 : vector<2x8x64xf32>
    %138 = vector.shape_cast %118 : vector<1x64xf32> to vector<1x1x64xf32>
    %139 = vector.broadcast %138 : vector<1x1x64xf32> to vector<2x8x64xf32>
    %140 = arith.addf %137, %139 : vector<2x8x64xf32>
    %141 = arith.truncf %140 : vector<2x8x64xf32> to vector<2x8x64xbf16>
    %c1 = arith.constant 1 : index
    %c0_65 = arith.constant 0 : index
    %c0_66 = arith.constant 0 : index
    %142 = vector.load %arg3[%c1, %c0_65, %c0_66] : memref<4x64x192xbf16, #tpu.memory_space<vmem>>, vector<1x64x192xbf16>
    %143 = vector.shape_cast %142 : vector<1x64x192xbf16> to vector<64x192xbf16>
    "tpu.trace_start"() <{level = 10 : i32, message = "bse,ef->bsf"}> : () -> ()
    %cst_67 = arith.constant dense<0.000000e+00> : vector<2x8x192xf32>
    %144 = tpu.matmul %141, %143, %cst_67 {dimension_numbers = #tpu.dot_dimension_numbers<[2], [0], [0, 1], [1], [0, 0, 0, 1, 1, 1], [], []>} : vector<2x8x64xbf16>, vector<64x192xbf16>, vector<2x8x192xf32> -> vector<2x8x192xf32>
    "tpu.trace_stop"() : () -> ()
    %c1_68 = arith.constant 1 : index
    %c0_69 = arith.constant 0 : index
    %c0_70 = arith.constant 0 : index
    %145 = vector.load %arg4[%c1_68, %c0_69, %c0_70] : memref<4x1x192xf32, #tpu.memory_space<vmem>>, vector<1x1x192xf32>
    %146 = vector.shape_cast %145 : vector<1x1x192xf32> to vector<1x192xf32>
    %147 = vector.shape_cast %146 : vector<1x192xf32> to vector<1x1x192xf32>
    %148 = vector.broadcast %147 : vector<1x1x192xf32> to vector<2x8x192xf32>
    %149 = arith.addf %144, %148 : vector<2x8x192xf32>
    %c1_71 = arith.constant 1 : index
    %c0_72 = arith.constant 0 : index
    %c0_73 = arith.constant 0 : index
    %150 = vector.load %arg5[%c1_71, %c0_72, %c0_73] : memref<4x64x64xbf16, #tpu.memory_space<vmem>>, vector<1x64x64xbf16>
    %151 = vector.shape_cast %150 : vector<1x64x64xbf16> to vector<64x64xbf16>
    %c1_74 = arith.constant 1 : index
    %c0_75 = arith.constant 0 : index
    %c0_76 = arith.constant 0 : index
    %152 = vector.load %arg6[%c1_74, %c0_75, %c0_76] : memref<4x1x64xf32, #tpu.memory_space<vmem>>, vector<1x1x64xf32>
    %153 = vector.shape_cast %152 : vector<1x1x64xf32> to vector<1x64xf32>
    %154 = arith.truncf %149 : vector<2x8x192xf32> to vector<2x8x192xbf16>
    %155 = vector.extract_strided_slice %154 {offsets = [0, 0, 0], sizes = [2, 8, 32], strides = [1, 1, 1]} : vector<2x8x192xbf16> to vector<2x8x32xbf16>
    %156 = vector.extract_strided_slice %154 {offsets = [0, 0, 64], sizes = [2, 8, 32], strides = [1, 1, 1]} : vector<2x8x192xbf16> to vector<2x8x32xbf16>
    %157 = vector.extract_strided_slice %154 {offsets = [0, 0, 128], sizes = [2, 8, 32], strides = [1, 1, 1]} : vector<2x8x192xbf16> to vector<2x8x32xbf16>
    "tpu.trace_start"() <{level = 10 : i32, message = "bqd,bkd->bqk"}> : () -> ()
    %cst_77 = arith.constant dense<0.000000e+00> : vector<2x8x8xf32>
    %158 = tpu.matmul %155, %156, %cst_77 {dimension_numbers = #tpu.dot_dimension_numbers<[2], [2], [1], [1], [0, 0, 0, 1, 1, 1], [0], [0]>} : vector<2x8x32xbf16>, vector<2x8x32xbf16>, vector<2x8x8xf32> -> vector<2x8x8xf32>
    "tpu.trace_stop"() : () -> ()
    %cst_78 = arith.constant 0.176776692 : f32
    %159 = vector.broadcast %cst_78 : f32 to vector<2x8x8xf32>
    %160 = arith.mulf %158, %159 : vector<2x8x8xf32>
    %161 = vector.broadcast %2 : vector<2x1x8xf32> to vector<2x8x8xf32>
    %162 = arith.addf %160, %161 : vector<2x8x8xf32>
    %cst_79 = arith.constant dense<0xFF800000> : vector<2x8xf32>
    %163 = vector.multi_reduction <maximumf>, %162, %cst_79 [2] : vector<2x8x8xf32> to vector<2x8xf32>
    %164 = vector.shape_cast %163 : vector<2x8xf32> to vector<2x8x1xf32>
    %165 = vector.broadcast %164 : vector<2x8x1xf32> to vector<2x8x8xf32>
    %166 = arith.subf %162, %165 : vector<2x8x8xf32>
    %167 = math.exp %166 : vector<2x8x8xf32>
    %cst_80 = arith.constant dense<0.000000e+00> : vector<2x8xf32>
    %168 = vector.multi_reduction <add>, %167, %cst_80 [2] : vector<2x8x8xf32> to vector<2x8xf32>
    %169 = vector.shape_cast %168 : vector<2x8xf32> to vector<2x8x1xf32>
    %170 = tpu.reciprocal %169 {approx = true} : vector<2x8x1xf32> -> vector<2x8x1xf32>
    %171 = vector.broadcast %170 : vector<2x8x1xf32> to vector<2x8x8xf32>
    %172 = arith.mulf %167, %171 : vector<2x8x8xf32>
    %173 = arith.truncf %172 : vector<2x8x8xf32> to vector<2x8x8xbf16>
    "tpu.trace_start"() <{level = 10 : i32, message = "bqk,bkd->bqd"}> : () -> ()
    %cst_81 = arith.constant dense<0.000000e+00> : vector<2x8x32xf32>
    %174 = tpu.matmul %173, %157, %cst_81 {dimension_numbers = #tpu.dot_dimension_numbers<[2], [1], [1], [2], [0, 0, 0, 1, 1, 2], [0], [0]>} : vector<2x8x8xbf16>, vector<2x8x32xbf16>, vector<2x8x32xf32> -> vector<2x8x32xf32>
    "tpu.trace_stop"() : () -> ()
    %175 = arith.truncf %174 : vector<2x8x32xf32> to vector<2x8x32xbf16>
    %176 = vector.extract_strided_slice %151 {offsets = [0, 0], sizes = [32, 64], strides = [1, 1]} : vector<64x64xbf16> to vector<32x64xbf16>
    "tpu.trace_start"() <{level = 10 : i32, message = "bsd,de->bse"}> : () -> ()
    %cst_82 = arith.constant dense<0.000000e+00> : vector<2x8x64xf32>
    %177 = tpu.matmul %175, %176, %cst_82 {dimension_numbers = #tpu.dot_dimension_numbers<[2], [0], [0, 1], [1], [0, 0, 0, 1, 1, 1], [], []>} : vector<2x8x32xbf16>, vector<32x64xbf16>, vector<2x8x64xf32> -> vector<2x8x64xf32>
    "tpu.trace_stop"() : () -> ()
    %178 = vector.shape_cast %153 : vector<1x64xf32> to vector<1x1x64xf32>
    %179 = vector.broadcast %178 : vector<1x1x64xf32> to vector<2x8x64xf32>
    %180 = arith.addf %179, %177 : vector<2x8x64xf32>
    %181 = vector.extract_strided_slice %154 {offsets = [0, 0, 32], sizes = [2, 8, 32], strides = [1, 1, 1]} : vector<2x8x192xbf16> to vector<2x8x32xbf16>
    %182 = vector.extract_strided_slice %154 {offsets = [0, 0, 96], sizes = [2, 8, 32], strides = [1, 1, 1]} : vector<2x8x192xbf16> to vector<2x8x32xbf16>
    %183 = vector.extract_strided_slice %154 {offsets = [0, 0, 160], sizes = [2, 8, 32], strides = [1, 1, 1]} : vector<2x8x192xbf16> to vector<2x8x32xbf16>
    "tpu.trace_start"() <{level = 10 : i32, message = "bqd,bkd->bqk"}> : () -> ()
    %cst_83 = arith.constant dense<0.000000e+00> : vector<2x8x8xf32>
    %184 = tpu.matmul %181, %182, %cst_83 {dimension_numbers = #tpu.dot_dimension_numbers<[2], [2], [1], [1], [0, 0, 0, 1, 1, 1], [0], [0]>} : vector<2x8x32xbf16>, vector<2x8x32xbf16>, vector<2x8x8xf32> -> vector<2x8x8xf32>
    "tpu.trace_stop"() : () -> ()
    %cst_84 = arith.constant 0.176776692 : f32
    %185 = vector.broadcast %cst_84 : f32 to vector<2x8x8xf32>
    %186 = arith.mulf %184, %185 : vector<2x8x8xf32>
    %187 = vector.broadcast %2 : vector<2x1x8xf32> to vector<2x8x8xf32>
    %188 = arith.addf %186, %187 : vector<2x8x8xf32>
    %cst_85 = arith.constant dense<0xFF800000> : vector<2x8xf32>
    %189 = vector.multi_reduction <maximumf>, %188, %cst_85 [2] : vector<2x8x8xf32> to vector<2x8xf32>
    %190 = vector.shape_cast %189 : vector<2x8xf32> to vector<2x8x1xf32>
    %191 = vector.broadcast %190 : vector<2x8x1xf32> to vector<2x8x8xf32>
    %192 = arith.subf %188, %191 : vector<2x8x8xf32>
    %193 = math.exp %192 : vector<2x8x8xf32>
    %cst_86 = arith.constant dense<0.000000e+00> : vector<2x8xf32>
    %194 = vector.multi_reduction <add>, %193, %cst_86 [2] : vector<2x8x8xf32> to vector<2x8xf32>
    %195 = vector.shape_cast %194 : vector<2x8xf32> to vector<2x8x1xf32>
    %196 = tpu.reciprocal %195 {approx = true} : vector<2x8x1xf32> -> vector<2x8x1xf32>
    %197 = vector.broadcast %196 : vector<2x8x1xf32> to vector<2x8x8xf32>
    %198 = arith.mulf %193, %197 : vector<2x8x8xf32>
    %199 = arith.truncf %198 : vector<2x8x8xf32> to vector<2x8x8xbf16>
    "tpu.trace_start"() <{level = 10 : i32, message = "bqk,bkd->bqd"}> : () -> ()
    %cst_87 = arith.constant dense<0.000000e+00> : vector<2x8x32xf32>
    %200 = tpu.matmul %199, %183, %cst_87 {dimension_numbers = #tpu.dot_dimension_numbers<[2], [1], [1], [2], [0, 0, 0, 1, 1, 2], [0], [0]>} : vector<2x8x8xbf16>, vector<2x8x32xbf16>, vector<2x8x32xf32> -> vector<2x8x32xf32>
    "tpu.trace_stop"() : () -> ()
    %201 = arith.truncf %200 : vector<2x8x32xf32> to vector<2x8x32xbf16>
    %202 = vector.extract_strided_slice %151 {offsets = [32, 0], sizes = [32, 64], strides = [1, 1]} : vector<64x64xbf16> to vector<32x64xbf16>
    "tpu.trace_start"() <{level = 10 : i32, message = "bsd,de->bse"}> : () -> ()
    %cst_88 = arith.constant dense<0.000000e+00> : vector<2x8x64xf32>
    %203 = tpu.matmul %201, %202, %cst_88 {dimension_numbers = #tpu.dot_dimension_numbers<[2], [0], [0, 1], [1], [0, 0, 0, 1, 1, 1], [], []>} : vector<2x8x32xbf16>, vector<32x64xbf16>, vector<2x8x64xf32> -> vector<2x8x64xf32>
    "tpu.trace_stop"() : () -> ()
    %204 = arith.addf %180, %203 : vector<2x8x64xf32>
    %205 = arith.addf %140, %204 : vector<2x8x64xf32>
    %c1_89 = arith.constant 1 : index
    %c0_90 = arith.constant 0 : index
    %c0_91 = arith.constant 0 : index
    %206 = vector.load %arg7[%c1_89, %c0_90, %c0_91] : memref<4x1x64xf32, #tpu.memory_space<vmem>>, vector<1x1x64xf32>
    %207 = vector.shape_cast %206 : vector<1x1x64xf32> to vector<1x64xf32>
    %c1_92 = arith.constant 1 : index
    %c0_93 = arith.constant 0 : index
    %c0_94 = arith.constant 0 : index
    %208 = vector.load %arg8[%c1_92, %c0_93, %c0_94] : memref<4x1x64xf32, #tpu.memory_space<vmem>>, vector<1x1x64xf32>
    %209 = vector.shape_cast %208 : vector<1x1x64xf32> to vector<1x64xf32>
    %cst_95 = arith.constant dense<0.000000e+00> : vector<2x8xf32>
    %210 = vector.multi_reduction <add>, %205, %cst_95 [2] : vector<2x8x64xf32> to vector<2x8xf32>
    %211 = vector.shape_cast %210 : vector<2x8xf32> to vector<2x8x1xf32>
    %cst_96 = arith.constant 6.400000e+01 : f32
    %212 = vector.broadcast %cst_96 : f32 to vector<2x8x1xf32>
    %213 = arith.divf %211, %212 : vector<2x8x1xf32>
    %214 = vector.broadcast %213 : vector<2x8x1xf32> to vector<2x8x64xf32>
    %215 = arith.subf %205, %214 : vector<2x8x64xf32>
    %216 = arith.mulf %215, %215 : vector<2x8x64xf32>
    %cst_97 = arith.constant dense<0.000000e+00> : vector<2x8xf32>
    %217 = vector.multi_reduction <add>, %216, %cst_97 [2] : vector<2x8x64xf32> to vector<2x8xf32>
    %218 = vector.shape_cast %217 : vector<2x8xf32> to vector<2x8x1xf32>
    %cst_98 = arith.constant 6.400000e+01 : f32
    %219 = vector.broadcast %cst_98 : f32 to vector<2x8x1xf32>
    %220 = arith.divf %218, %219 : vector<2x8x1xf32>
    %cst_99 = arith.constant 9.99999974E-6 : f32
    %221 = vector.broadcast %cst_99 : f32 to vector<2x8x1xf32>
    %222 = arith.addf %220, %221 : vector<2x8x1xf32>
    %223 = math.rsqrt %222 : vector<2x8x1xf32>
    %224 = vector.broadcast %223 : vector<2x8x1xf32> to vector<2x8x64xf32>
    %225 = arith.mulf %215, %224 : vector<2x8x64xf32>
    %226 = vector.shape_cast %207 : vector<1x64xf32> to vector<1x1x64xf32>
    %227 = vector.broadcast %226 : vector<1x1x64xf32> to vector<2x8x64xf32>
    %228 = arith.mulf %225, %227 : vector<2x8x64xf32>
    %229 = vector.shape_cast %209 : vector<1x64xf32> to vector<1x1x64xf32>
    %230 = vector.broadcast %229 : vector<1x1x64xf32> to vector<2x8x64xf32>
    %231 = arith.addf %228, %230 : vector<2x8x64xf32>
    %232 = arith.truncf %231 : vector<2x8x64xf32> to vector<2x8x64xbf16>
    %c1_100 = arith.constant 1 : index
    %c0_101 = arith.constant 0 : index
    %c0_102 = arith.constant 0 : index
    %233 = vector.load %arg9[%c1_100, %c0_101, %c0_102] : memref<4x64x256xbf16, #tpu.memory_space<vmem>>, vector<1x64x256xbf16>
    %234 = vector.shape_cast %233 : vector<1x64x256xbf16> to vector<64x256xbf16>
    "tpu.trace_start"() <{level = 10 : i32, message = "bse,ef->bsf"}> : () -> ()
    %cst_103 = arith.constant dense<0.000000e+00> : vector<2x8x256xf32>
    %235 = tpu.matmul %232, %234, %cst_103 {dimension_numbers = #tpu.dot_dimension_numbers<[2], [0], [0, 1], [1], [0, 0, 0, 1, 1, 1], [], []>} : vector<2x8x64xbf16>, vector<64x256xbf16>, vector<2x8x256xf32> -> vector<2x8x256xf32>
    "tpu.trace_stop"() : () -> ()
    %c1_104 = arith.constant 1 : index
    %c0_105 = arith.constant 0 : index
    %c0_106 = arith.constant 0 : index
    %236 = vector.load %arg10[%c1_104, %c0_105, %c0_106] : memref<4x1x256xf32, #tpu.memory_space<vmem>>, vector<1x1x256xf32>
    %237 = vector.shape_cast %236 : vector<1x1x256xf32> to vector<1x256xf32>
    %238 = vector.shape_cast %237 : vector<1x256xf32> to vector<1x1x256xf32>
    %239 = vector.broadcast %238 : vector<1x1x256xf32> to vector<2x8x256xf32>
    %240 = arith.addf %235, %239 : vector<2x8x256xf32>
    %cst_107 = arith.constant 0.000000e+00 : f32
    %241 = vector.broadcast %cst_107 : f32 to vector<2x8x256xf32>
    %242 = arith.maximumf %240, %241 : vector<2x8x256xf32>
    %243 = arith.truncf %242 : vector<2x8x256xf32> to vector<2x8x256xbf16>
    %c1_108 = arith.constant 1 : index
    %c0_109 = arith.constant 0 : index
    %c0_110 = arith.constant 0 : index
    %244 = vector.load %arg11[%c1_108, %c0_109, %c0_110] : memref<4x256x64xbf16, #tpu.memory_space<vmem>>, vector<1x256x64xbf16>
    %245 = vector.shape_cast %244 : vector<1x256x64xbf16> to vector<256x64xbf16>
    "tpu.trace_start"() <{level = 10 : i32, message = "bsf,fe->bse"}> : () -> ()
    %cst_111 = arith.constant dense<0.000000e+00> : vector<2x8x64xf32>
    %246 = tpu.matmul %243, %245, %cst_111 {dimension_numbers = #tpu.dot_dimension_numbers<[2], [0], [0, 1], [1], [0, 0, 0, 1, 1, 1], [], []>} : vector<2x8x256xbf16>, vector<256x64xbf16>, vector<2x8x64xf32> -> vector<2x8x64xf32>
    "tpu.trace_stop"() : () -> ()
    %c1_112 = arith.constant 1 : index
    %c0_113 = arith.constant 0 : index
    %c0_114 = arith.constant 0 : index
    %247 = vector.load %arg12[%c1_112, %c0_113, %c0_114] : memref<4x1x64xf32, #tpu.memory_space<vmem>>, vector<1x1x64xf32>
    %248 = vector.shape_cast %247 : vector<1x1x64xf32> to vector<1x64xf32>
    %249 = vector.shape_cast %248 : vector<1x64xf32> to vector<1x1x64xf32>
    %250 = vector.broadcast %249 : vector<1x1x64xf32> to vector<2x8x64xf32>
    %251 = arith.addf %246, %250 : vector<2x8x64xf32>
    %252 = arith.addf %231, %251 : vector<2x8x64xf32>
    %c1_115 = arith.constant 1 : index
    %c0_116 = arith.constant 0 : index
    %c0_117 = arith.constant 0 : index
    %253 = vector.load %arg13[%c1_115, %c0_116, %c0_117] : memref<4x1x64xf32, #tpu.memory_space<vmem>>, vector<1x1x64xf32>
    %254 = vector.shape_cast %253 : vector<1x1x64xf32> to vector<1x64xf32>
    %c1_118 = arith.constant 1 : index
    %c0_119 = arith.constant 0 : index
    %c0_120 = arith.constant 0 : index
    %255 = vector.load %arg14[%c1_118, %c0_119, %c0_120] : memref<4x1x64xf32, #tpu.memory_space<vmem>>, vector<1x1x64xf32>
    %256 = vector.shape_cast %255 : vector<1x1x64xf32> to vector<1x64xf32>
    %cst_121 = arith.constant dense<0.000000e+00> : vector<2x8xf32>
    %257 = vector.multi_reduction <add>, %252, %cst_121 [2] : vector<2x8x64xf32> to vector<2x8xf32>
    %258 = vector.shape_cast %257 : vector<2x8xf32> to vector<2x8x1xf32>
    %cst_122 = arith.constant 6.400000e+01 : f32
    %259 = vector.broadcast %cst_122 : f32 to vector<2x8x1xf32>
    %260 = arith.divf %258, %259 : vector<2x8x1xf32>
    %261 = vector.broadcast %260 : vector<2x8x1xf32> to vector<2x8x64xf32>
    %262 = arith.subf %252, %261 : vector<2x8x64xf32>
    %263 = arith.mulf %262, %262 : vector<2x8x64xf32>
    %cst_123 = arith.constant dense<0.000000e+00> : vector<2x8xf32>
    %264 = vector.multi_reduction <add>, %263, %cst_123 [2] : vector<2x8x64xf32> to vector<2x8xf32>
    %265 = vector.shape_cast %264 : vector<2x8xf32> to vector<2x8x1xf32>
    %cst_124 = arith.constant 6.400000e+01 : f32
    %266 = vector.broadcast %cst_124 : f32 to vector<2x8x1xf32>
    %267 = arith.divf %265, %266 : vector<2x8x1xf32>
    %cst_125 = arith.constant 9.99999974E-6 : f32
    %268 = vector.broadcast %cst_125 : f32 to vector<2x8x1xf32>
    %269 = arith.addf %267, %268 : vector<2x8x1xf32>
    %270 = math.rsqrt %269 : vector<2x8x1xf32>
    %271 = vector.broadcast %270 : vector<2x8x1xf32> to vector<2x8x64xf32>
    %272 = arith.mulf %262, %271 : vector<2x8x64xf32>
    %273 = vector.shape_cast %254 : vector<1x64xf32> to vector<1x1x64xf32>
    %274 = vector.broadcast %273 : vector<1x1x64xf32> to vector<2x8x64xf32>
    %275 = arith.mulf %272, %274 : vector<2x8x64xf32>
    %276 = vector.shape_cast %256 : vector<1x64xf32> to vector<1x1x64xf32>
    %277 = vector.broadcast %276 : vector<1x1x64xf32> to vector<2x8x64xf32>
    %278 = arith.addf %275, %277 : vector<2x8x64xf32>
    %279 = arith.truncf %278 : vector<2x8x64xf32> to vector<2x8x64xbf16>
    %c2 = arith.constant 2 : index
    %c0_126 = arith.constant 0 : index
    %c0_127 = arith.constant 0 : index
    %280 = vector.load %arg3[%c2, %c0_126, %c0_127] : memref<4x64x192xbf16, #tpu.memory_space<vmem>>, vector<1x64x192xbf16>
    %281 = vector.shape_cast %280 : vector<1x64x192xbf16> to vector<64x192xbf16>
    "tpu.trace_start"() <{level = 10 : i32, message = "bse,ef->bsf"}> : () -> ()
    %cst_128 = arith.constant dense<0.000000e+00> : vector<2x8x192xf32>
    %282 = tpu.matmul %279, %281, %cst_128 {dimension_numbers = #tpu.dot_dimension_numbers<[2], [0], [0, 1], [1], [0, 0, 0, 1, 1, 1], [], []>} : vector<2x8x64xbf16>, vector<64x192xbf16>, vector<2x8x192xf32> -> vector<2x8x192xf32>
    "tpu.trace_stop"() : () -> ()
    %c2_129 = arith.constant 2 : index
    %c0_130 = arith.constant 0 : index
    %c0_131 = arith.constant 0 : index
    %283 = vector.load %arg4[%c2_129, %c0_130, %c0_131] : memref<4x1x192xf32, #tpu.memory_space<vmem>>, vector<1x1x192xf32>
    %284 = vector.shape_cast %283 : vector<1x1x192xf32> to vector<1x192xf32>
    %285 = vector.shape_cast %284 : vector<1x192xf32> to vector<1x1x192xf32>
    %286 = vector.broadcast %285 : vector<1x1x192xf32> to vector<2x8x192xf32>
    %287 = arith.addf %282, %286 : vector<2x8x192xf32>
    %c2_132 = arith.constant 2 : index
    %c0_133 = arith.constant 0 : index
    %c0_134 = arith.constant 0 : index
    %288 = vector.load %arg5[%c2_132, %c0_133, %c0_134] : memref<4x64x64xbf16, #tpu.memory_space<vmem>>, vector<1x64x64xbf16>
    %289 = vector.shape_cast %288 : vector<1x64x64xbf16> to vector<64x64xbf16>
    %c2_135 = arith.constant 2 : index
    %c0_136 = arith.constant 0 : index
    %c0_137 = arith.constant 0 : index
    %290 = vector.load %arg6[%c2_135, %c0_136, %c0_137] : memref<4x1x64xf32, #tpu.memory_space<vmem>>, vector<1x1x64xf32>
    %291 = vector.shape_cast %290 : vector<1x1x64xf32> to vector<1x64xf32>
    %292 = arith.truncf %287 : vector<2x8x192xf32> to vector<2x8x192xbf16>
    %293 = vector.extract_strided_slice %292 {offsets = [0, 0, 0], sizes = [2, 8, 32], strides = [1, 1, 1]} : vector<2x8x192xbf16> to vector<2x8x32xbf16>
    %294 = vector.extract_strided_slice %292 {offsets = [0, 0, 64], sizes = [2, 8, 32], strides = [1, 1, 1]} : vector<2x8x192xbf16> to vector<2x8x32xbf16>
    %295 = vector.extract_strided_slice %292 {offsets = [0, 0, 128], sizes = [2, 8, 32], strides = [1, 1, 1]} : vector<2x8x192xbf16> to vector<2x8x32xbf16>
    "tpu.trace_start"() <{level = 10 : i32, message = "bqd,bkd->bqk"}> : () -> ()
    %cst_138 = arith.constant dense<0.000000e+00> : vector<2x8x8xf32>
    %296 = tpu.matmul %293, %294, %cst_138 {dimension_numbers = #tpu.dot_dimension_numbers<[2], [2], [1], [1], [0, 0, 0, 1, 1, 1], [0], [0]>} : vector<2x8x32xbf16>, vector<2x8x32xbf16>, vector<2x8x8xf32> -> vector<2x8x8xf32>
    "tpu.trace_stop"() : () -> ()
    %cst_139 = arith.constant 0.176776692 : f32
    %297 = vector.broadcast %cst_139 : f32 to vector<2x8x8xf32>
    %298 = arith.mulf %296, %297 : vector<2x8x8xf32>
    %299 = vector.broadcast %2 : vector<2x1x8xf32> to vector<2x8x8xf32>
    %300 = arith.addf %298, %299 : vector<2x8x8xf32>
    %cst_140 = arith.constant dense<0xFF800000> : vector<2x8xf32>
    %301 = vector.multi_reduction <maximumf>, %300, %cst_140 [2] : vector<2x8x8xf32> to vector<2x8xf32>
    %302 = vector.shape_cast %301 : vector<2x8xf32> to vector<2x8x1xf32>
    %303 = vector.broadcast %302 : vector<2x8x1xf32> to vector<2x8x8xf32>
    %304 = arith.subf %300, %303 : vector<2x8x8xf32>
    %305 = math.exp %304 : vector<2x8x8xf32>
    %cst_141 = arith.constant dense<0.000000e+00> : vector<2x8xf32>
    %306 = vector.multi_reduction <add>, %305, %cst_141 [2] : vector<2x8x8xf32> to vector<2x8xf32>
    %307 = vector.shape_cast %306 : vector<2x8xf32> to vector<2x8x1xf32>
    %308 = tpu.reciprocal %307 {approx = true} : vector<2x8x1xf32> -> vector<2x8x1xf32>
    %309 = vector.broadcast %308 : vector<2x8x1xf32> to vector<2x8x8xf32>
    %310 = arith.mulf %305, %309 : vector<2x8x8xf32>
    %311 = arith.truncf %310 : vector<2x8x8xf32> to vector<2x8x8xbf16>
    "tpu.trace_start"() <{level = 10 : i32, message = "bqk,bkd->bqd"}> : () -> ()
    %cst_142 = arith.constant dense<0.000000e+00> : vector<2x8x32xf32>
    %312 = tpu.matmul %311, %295, %cst_142 {dimension_numbers = #tpu.dot_dimension_numbers<[2], [1], [1], [2], [0, 0, 0, 1, 1, 2], [0], [0]>} : vector<2x8x8xbf16>, vector<2x8x32xbf16>, vector<2x8x32xf32> -> vector<2x8x32xf32>
    "tpu.trace_stop"() : () -> ()
    %313 = arith.truncf %312 : vector<2x8x32xf32> to vector<2x8x32xbf16>
    %314 = vector.extract_strided_slice %289 {offsets = [0, 0], sizes = [32, 64], strides = [1, 1]} : vector<64x64xbf16> to vector<32x64xbf16>
    "tpu.trace_start"() <{level = 10 : i32, message = "bsd,de->bse"}> : () -> ()
    %cst_143 = arith.constant dense<0.000000e+00> : vector<2x8x64xf32>
    %315 = tpu.matmul %313, %314, %cst_143 {dimension_numbers = #tpu.dot_dimension_numbers<[2], [0], [0, 1], [1], [0, 0, 0, 1, 1, 1], [], []>} : vector<2x8x32xbf16>, vector<32x64xbf16>, vector<2x8x64xf32> -> vector<2x8x64xf32>
    "tpu.trace_stop"() : () -> ()
    %316 = vector.shape_cast %291 : vector<1x64xf32> to vector<1x1x64xf32>
    %317 = vector.broadcast %316 : vector<1x1x64xf32> to vector<2x8x64xf32>
    %318 = arith.addf %317, %315 : vector<2x8x64xf32>
    %319 = vector.extract_strided_slice %292 {offsets = [0, 0, 32], sizes = [2, 8, 32], strides = [1, 1, 1]} : vector<2x8x192xbf16> to vector<2x8x32xbf16>
    %320 = vector.extract_strided_slice %292 {offsets = [0, 0, 96], sizes = [2, 8, 32], strides = [1, 1, 1]} : vector<2x8x192xbf16> to vector<2x8x32xbf16>
    %321 = vector.extract_strided_slice %292 {offsets = [0, 0, 160], sizes = [2, 8, 32], strides = [1, 1, 1]} : vector<2x8x192xbf16> to vector<2x8x32xbf16>
    "tpu.trace_start"() <{level = 10 : i32, message = "bqd,bkd->bqk"}> : () -> ()
    %cst_144 = arith.constant dense<0.000000e+00> : vector<2x8x8xf32>
    %322 = tpu.matmul %319, %320, %cst_144 {dimension_numbers = #tpu.dot_dimension_numbers<[2], [2], [1], [1], [0, 0, 0, 1, 1, 1], [0], [0]>} : vector<2x8x32xbf16>, vector<2x8x32xbf16>, vector<2x8x8xf32> -> vector<2x8x8xf32>
    "tpu.trace_stop"() : () -> ()
    %cst_145 = arith.constant 0.176776692 : f32
    %323 = vector.broadcast %cst_145 : f32 to vector<2x8x8xf32>
    %324 = arith.mulf %322, %323 : vector<2x8x8xf32>
    %325 = vector.broadcast %2 : vector<2x1x8xf32> to vector<2x8x8xf32>
    %326 = arith.addf %324, %325 : vector<2x8x8xf32>
    %cst_146 = arith.constant dense<0xFF800000> : vector<2x8xf32>
    %327 = vector.multi_reduction <maximumf>, %326, %cst_146 [2] : vector<2x8x8xf32> to vector<2x8xf32>
    %328 = vector.shape_cast %327 : vector<2x8xf32> to vector<2x8x1xf32>
    %329 = vector.broadcast %328 : vector<2x8x1xf32> to vector<2x8x8xf32>
    %330 = arith.subf %326, %329 : vector<2x8x8xf32>
    %331 = math.exp %330 : vector<2x8x8xf32>
    %cst_147 = arith.constant dense<0.000000e+00> : vector<2x8xf32>
    %332 = vector.multi_reduction <add>, %331, %cst_147 [2] : vector<2x8x8xf32> to vector<2x8xf32>
    %333 = vector.shape_cast %332 : vector<2x8xf32> to vector<2x8x1xf32>
    %334 = tpu.reciprocal %333 {approx = true} : vector<2x8x1xf32> -> vector<2x8x1xf32>
    %335 = vector.broadcast %334 : vector<2x8x1xf32> to vector<2x8x8xf32>
    %336 = arith.mulf %331, %335 : vector<2x8x8xf32>
    %337 = arith.truncf %336 : vector<2x8x8xf32> to vector<2x8x8xbf16>
    "tpu.trace_start"() <{level = 10 : i32, message = "bqk,bkd->bqd"}> : () -> ()
    %cst_148 = arith.constant dense<0.000000e+00> : vector<2x8x32xf32>
    %338 = tpu.matmul %337, %321, %cst_148 {dimension_numbers = #tpu.dot_dimension_numbers<[2], [1], [1], [2], [0, 0, 0, 1, 1, 2], [0], [0]>} : vector<2x8x8xbf16>, vector<2x8x32xbf16>, vector<2x8x32xf32> -> vector<2x8x32xf32>
    "tpu.trace_stop"() : () -> ()
    %339 = arith.truncf %338 : vector<2x8x32xf32> to vector<2x8x32xbf16>
    %340 = vector.extract_strided_slice %289 {offsets = [32, 0], sizes = [32, 64], strides = [1, 1]} : vector<64x64xbf16> to vector<32x64xbf16>
    "tpu.trace_start"() <{level = 10 : i32, message = "bsd,de->bse"}> : () -> ()
    %cst_149 = arith.constant dense<0.000000e+00> : vector<2x8x64xf32>
    %341 = tpu.matmul %339, %340, %cst_149 {dimension_numbers = #tpu.dot_dimension_numbers<[2], [0], [0, 1], [1], [0, 0, 0, 1, 1, 1], [], []>} : vector<2x8x32xbf16>, vector<32x64xbf16>, vector<2x8x64xf32> -> vector<2x8x64xf32>
    "tpu.trace_stop"() : () -> ()
    %342 = arith.addf %318, %341 : vector<2x8x64xf32>
    %343 = arith.addf %278, %342 : vector<2x8x64xf32>
    %c2_150 = arith.constant 2 : index
    %c0_151 = arith.constant 0 : index
    %c0_152 = arith.constant 0 : index
    %344 = vector.load %arg7[%c2_150, %c0_151, %c0_152] : memref<4x1x64xf32, #tpu.memory_space<vmem>>, vector<1x1x64xf32>
    %345 = vector.shape_cast %344 : vector<1x1x64xf32> to vector<1x64xf32>
    %c2_153 = arith.constant 2 : index
    %c0_154 = arith.constant 0 : index
    %c0_155 = arith.constant 0 : index
    %346 = vector.load %arg8[%c2_153, %c0_154, %c0_155] : memref<4x1x64xf32, #tpu.memory_space<vmem>>, vector<1x1x64xf32>
    %347 = vector.shape_cast %346 : vector<1x1x64xf32> to vector<1x64xf32>
    %cst_156 = arith.constant dense<0.000000e+00> : vector<2x8xf32>
    %348 = vector.multi_reduction <add>, %343, %cst_156 [2] : vector<2x8x64xf32> to vector<2x8xf32>
    %349 = vector.shape_cast %348 : vector<2x8xf32> to vector<2x8x1xf32>
    %cst_157 = arith.constant 6.400000e+01 : f32
    %350 = vector.broadcast %cst_157 : f32 to vector<2x8x1xf32>
    %351 = arith.divf %349, %350 : vector<2x8x1xf32>
    %352 = vector.broadcast %351 : vector<2x8x1xf32> to vector<2x8x64xf32>
    %353 = arith.subf %343, %352 : vector<2x8x64xf32>
    %354 = arith.mulf %353, %353 : vector<2x8x64xf32>
    %cst_158 = arith.constant dense<0.000000e+00> : vector<2x8xf32>
    %355 = vector.multi_reduction <add>, %354, %cst_158 [2] : vector<2x8x64xf32> to vector<2x8xf32>
    %356 = vector.shape_cast %355 : vector<2x8xf32> to vector<2x8x1xf32>
    %cst_159 = arith.constant 6.400000e+01 : f32
    %357 = vector.broadcast %cst_159 : f32 to vector<2x8x1xf32>
    %358 = arith.divf %356, %357 : vector<2x8x1xf32>
    %cst_160 = arith.constant 9.99999974E-6 : f32
    %359 = vector.broadcast %cst_160 : f32 to vector<2x8x1xf32>
    %360 = arith.addf %358, %359 : vector<2x8x1xf32>
    %361 = math.rsqrt %360 : vector<2x8x1xf32>
    %362 = vector.broadcast %361 : vector<2x8x1xf32> to vector<2x8x64xf32>
    %363 = arith.mulf %353, %362 : vector<2x8x64xf32>
    %364 = vector.shape_cast %345 : vector<1x64xf32> to vector<1x1x64xf32>
    %365 = vector.broadcast %364 : vector<1x1x64xf32> to vector<2x8x64xf32>
    %366 = arith.mulf %363, %365 : vector<2x8x64xf32>
    %367 = vector.shape_cast %347 : vector<1x64xf32> to vector<1x1x64xf32>
    %368 = vector.broadcast %367 : vector<1x1x64xf32> to vector<2x8x64xf32>
    %369 = arith.addf %366, %368 : vector<2x8x64xf32>
    %370 = arith.truncf %369 : vector<2x8x64xf32> to vector<2x8x64xbf16>
    %c2_161 = arith.constant 2 : index
    %c0_162 = arith.constant 0 : index
    %c0_163 = arith.constant 0 : index
    %371 = vector.load %arg9[%c2_161, %c0_162, %c0_163] : memref<4x64x256xbf16, #tpu.memory_space<vmem>>, vector<1x64x256xbf16>
    %372 = vector.shape_cast %371 : vector<1x64x256xbf16> to vector<64x256xbf16>
    "tpu.trace_start"() <{level = 10 : i32, message = "bse,ef->bsf"}> : () -> ()
    %cst_164 = arith.constant dense<0.000000e+00> : vector<2x8x256xf32>
    %373 = tpu.matmul %370, %372, %cst_164 {dimension_numbers = #tpu.dot_dimension_numbers<[2], [0], [0, 1], [1], [0, 0, 0, 1, 1, 1], [], []>} : vector<2x8x64xbf16>, vector<64x256xbf16>, vector<2x8x256xf32> -> vector<2x8x256xf32>
    "tpu.trace_stop"() : () -> ()
    %c2_165 = arith.constant 2 : index
    %c0_166 = arith.constant 0 : index
    %c0_167 = arith.constant 0 : index
    %374 = vector.load %arg10[%c2_165, %c0_166, %c0_167] : memref<4x1x256xf32, #tpu.memory_space<vmem>>, vector<1x1x256xf32>
    %375 = vector.shape_cast %374 : vector<1x1x256xf32> to vector<1x256xf32>
    %376 = vector.shape_cast %375 : vector<1x256xf32> to vector<1x1x256xf32>
    %377 = vector.broadcast %376 : vector<1x1x256xf32> to vector<2x8x256xf32>
    %378 = arith.addf %373, %377 : vector<2x8x256xf32>
    %cst_168 = arith.constant 0.000000e+00 : f32
    %379 = vector.broadcast %cst_168 : f32 to vector<2x8x256xf32>
    %380 = arith.maximumf %378, %379 : vector<2x8x256xf32>
    %381 = arith.truncf %380 : vector<2x8x256xf32> to vector<2x8x256xbf16>
    %c2_169 = arith.constant 2 : index
    %c0_170 = arith.constant 0 : index
    %c0_171 = arith.constant 0 : index
    %382 = vector.load %arg11[%c2_169, %c0_170, %c0_171] : memref<4x256x64xbf16, #tpu.memory_space<vmem>>, vector<1x256x64xbf16>
    %383 = vector.shape_cast %382 : vector<1x256x64xbf16> to vector<256x64xbf16>
    "tpu.trace_start"() <{level = 10 : i32, message = "bsf,fe->bse"}> : () -> ()
    %cst_172 = arith.constant dense<0.000000e+00> : vector<2x8x64xf32>
    %384 = tpu.matmul %381, %383, %cst_172 {dimension_numbers = #tpu.dot_dimension_numbers<[2], [0], [0, 1], [1], [0, 0, 0, 1, 1, 1], [], []>} : vector<2x8x256xbf16>, vector<256x64xbf16>, vector<2x8x64xf32> -> vector<2x8x64xf32>
    "tpu.trace_stop"() : () -> ()
    %c2_173 = arith.constant 2 : index
    %c0_174 = arith.constant 0 : index
    %c0_175 = arith.constant 0 : index
    %385 = vector.load %arg12[%c2_173, %c0_174, %c0_175] : memref<4x1x64xf32, #tpu.memory_space<vmem>>, vector<1x1x64xf32>
    %386 = vector.shape_cast %385 : vector<1x1x64xf32> to vector<1x64xf32>
    %387 = vector.shape_cast %386 : vector<1x64xf32> to vector<1x1x64xf32>
    %388 = vector.broadcast %387 : vector<1x1x64xf32> to vector<2x8x64xf32>
    %389 = arith.addf %384, %388 : vector<2x8x64xf32>
    %390 = arith.addf %369, %389 : vector<2x8x64xf32>
    %c2_176 = arith.constant 2 : index
    %c0_177 = arith.constant 0 : index
    %c0_178 = arith.constant 0 : index
    %391 = vector.load %arg13[%c2_176, %c0_177, %c0_178] : memref<4x1x64xf32, #tpu.memory_space<vmem>>, vector<1x1x64xf32>
    %392 = vector.shape_cast %391 : vector<1x1x64xf32> to vector<1x64xf32>
    %c2_179 = arith.constant 2 : index
    %c0_180 = arith.constant 0 : index
    %c0_181 = arith.constant 0 : index
    %393 = vector.load %arg14[%c2_179, %c0_180, %c0_181] : memref<4x1x64xf32, #tpu.memory_space<vmem>>, vector<1x1x64xf32>
    %394 = vector.shape_cast %393 : vector<1x1x64xf32> to vector<1x64xf32>
    %cst_182 = arith.constant dense<0.000000e+00> : vector<2x8xf32>
    %395 = vector.multi_reduction <add>, %390, %cst_182 [2] : vector<2x8x64xf32> to vector<2x8xf32>
    %396 = vector.shape_cast %395 : vector<2x8xf32> to vector<2x8x1xf32>
    %cst_183 = arith.constant 6.400000e+01 : f32
    %397 = vector.broadcast %cst_183 : f32 to vector<2x8x1xf32>
    %398 = arith.divf %396, %397 : vector<2x8x1xf32>
    %399 = vector.broadcast %398 : vector<2x8x1xf32> to vector<2x8x64xf32>
    %400 = arith.subf %390, %399 : vector<2x8x64xf32>
    %401 = arith.mulf %400, %400 : vector<2x8x64xf32>
    %cst_184 = arith.constant dense<0.000000e+00> : vector<2x8xf32>
    %402 = vector.multi_reduction <add>, %401, %cst_184 [2] : vector<2x8x64xf32> to vector<2x8xf32>
    %403 = vector.shape_cast %402 : vector<2x8xf32> to vector<2x8x1xf32>
    %cst_185 = arith.constant 6.400000e+01 : f32
    %404 = vector.broadcast %cst_185 : f32 to vector<2x8x1xf32>
    %405 = arith.divf %403, %404 : vector<2x8x1xf32>
    %cst_186 = arith.constant 9.99999974E-6 : f32
    %406 = vector.broadcast %cst_186 : f32 to vector<2x8x1xf32>
    %407 = arith.addf %405, %406 : vector<2x8x1xf32>
    %408 = math.rsqrt %407 : vector<2x8x1xf32>
    %409 = vector.broadcast %408 : vector<2x8x1xf32> to vector<2x8x64xf32>
    %410 = arith.mulf %400, %409 : vector<2x8x64xf32>
    %411 = vector.shape_cast %392 : vector<1x64xf32> to vector<1x1x64xf32>
    %412 = vector.broadcast %411 : vector<1x1x64xf32> to vector<2x8x64xf32>
    %413 = arith.mulf %410, %412 : vector<2x8x64xf32>
    %414 = vector.shape_cast %394 : vector<1x64xf32> to vector<1x1x64xf32>
    %415 = vector.broadcast %414 : vector<1x1x64xf32> to vector<2x8x64xf32>
    %416 = arith.addf %413, %415 : vector<2x8x64xf32>
    %417 = arith.truncf %416 : vector<2x8x64xf32> to vector<2x8x64xbf16>
    %c3 = arith.constant 3 : index
    %c0_187 = arith.constant 0 : index
    %c0_188 = arith.constant 0 : index
    %418 = vector.load %arg3[%c3, %c0_187, %c0_188] : memref<4x64x192xbf16, #tpu.memory_space<vmem>>, vector<1x64x192xbf16>
    %419 = vector.shape_cast %418 : vector<1x64x192xbf16> to vector<64x192xbf16>
    "tpu.trace_start"() <{level = 10 : i32, message = "bse,ef->bsf"}> : () -> ()
    %cst_189 = arith.constant dense<0.000000e+00> : vector<2x8x192xf32>
    %420 = tpu.matmul %417, %419, %cst_189 {dimension_numbers = #tpu.dot_dimension_numbers<[2], [0], [0, 1], [1], [0, 0, 0, 1, 1, 1], [], []>} : vector<2x8x64xbf16>, vector<64x192xbf16>, vector<2x8x192xf32> -> vector<2x8x192xf32>
    "tpu.trace_stop"() : () -> ()
    %c3_190 = arith.constant 3 : index
    %c0_191 = arith.constant 0 : index
    %c0_192 = arith.constant 0 : index
    %421 = vector.load %arg4[%c3_190, %c0_191, %c0_192] : memref<4x1x192xf32, #tpu.memory_space<vmem>>, vector<1x1x192xf32>
    %422 = vector.shape_cast %421 : vector<1x1x192xf32> to vector<1x192xf32>
    %423 = vector.shape_cast %422 : vector<1x192xf32> to vector<1x1x192xf32>
    %424 = vector.broadcast %423 : vector<1x1x192xf32> to vector<2x8x192xf32>
    %425 = arith.addf %420, %424 : vector<2x8x192xf32>
    %c3_193 = arith.constant 3 : index
    %c0_194 = arith.constant 0 : index
    %c0_195 = arith.constant 0 : index
    %426 = vector.load %arg5[%c3_193, %c0_194, %c0_195] : memref<4x64x64xbf16, #tpu.memory_space<vmem>>, vector<1x64x64xbf16>
    %427 = vector.shape_cast %426 : vector<1x64x64xbf16> to vector<64x64xbf16>
    %c3_196 = arith.constant 3 : index
    %c0_197 = arith.constant 0 : index
    %c0_198 = arith.constant 0 : index
    %428 = vector.load %arg6[%c3_196, %c0_197, %c0_198] : memref<4x1x64xf32, #tpu.memory_space<vmem>>, vector<1x1x64xf32>
    %429 = vector.shape_cast %428 : vector<1x1x64xf32> to vector<1x64xf32>
    %430 = arith.truncf %425 : vector<2x8x192xf32> to vector<2x8x192xbf16>
    %431 = vector.extract_strided_slice %430 {offsets = [0, 0, 0], sizes = [2, 8, 32], strides = [1, 1, 1]} : vector<2x8x192xbf16> to vector<2x8x32xbf16>
    %432 = vector.extract_strided_slice %430 {offsets = [0, 0, 64], sizes = [2, 8, 32], strides = [1, 1, 1]} : vector<2x8x192xbf16> to vector<2x8x32xbf16>
    %433 = vector.extract_strided_slice %430 {offsets = [0, 0, 128], sizes = [2, 8, 32], strides = [1, 1, 1]} : vector<2x8x192xbf16> to vector<2x8x32xbf16>
    "tpu.trace_start"() <{level = 10 : i32, message = "bqd,bkd->bqk"}> : () -> ()
    %cst_199 = arith.constant dense<0.000000e+00> : vector<2x8x8xf32>
    %434 = tpu.matmul %431, %432, %cst_199 {dimension_numbers = #tpu.dot_dimension_numbers<[2], [2], [1], [1], [0, 0, 0, 1, 1, 1], [0], [0]>} : vector<2x8x32xbf16>, vector<2x8x32xbf16>, vector<2x8x8xf32> -> vector<2x8x8xf32>
    "tpu.trace_stop"() : () -> ()
    %cst_200 = arith.constant 0.176776692 : f32
    %435 = vector.broadcast %cst_200 : f32 to vector<2x8x8xf32>
    %436 = arith.mulf %434, %435 : vector<2x8x8xf32>
    %437 = vector.broadcast %2 : vector<2x1x8xf32> to vector<2x8x8xf32>
    %438 = arith.addf %436, %437 : vector<2x8x8xf32>
    %cst_201 = arith.constant dense<0xFF800000> : vector<2x8xf32>
    %439 = vector.multi_reduction <maximumf>, %438, %cst_201 [2] : vector<2x8x8xf32> to vector<2x8xf32>
    %440 = vector.shape_cast %439 : vector<2x8xf32> to vector<2x8x1xf32>
    %441 = vector.broadcast %440 : vector<2x8x1xf32> to vector<2x8x8xf32>
    %442 = arith.subf %438, %441 : vector<2x8x8xf32>
    %443 = math.exp %442 : vector<2x8x8xf32>
    %cst_202 = arith.constant dense<0.000000e+00> : vector<2x8xf32>
    %444 = vector.multi_reduction <add>, %443, %cst_202 [2] : vector<2x8x8xf32> to vector<2x8xf32>
    %445 = vector.shape_cast %444 : vector<2x8xf32> to vector<2x8x1xf32>
    %446 = tpu.reciprocal %445 {approx = true} : vector<2x8x1xf32> -> vector<2x8x1xf32>
    %447 = vector.broadcast %446 : vector<2x8x1xf32> to vector<2x8x8xf32>
    %448 = arith.mulf %443, %447 : vector<2x8x8xf32>
    %449 = arith.truncf %448 : vector<2x8x8xf32> to vector<2x8x8xbf16>
    "tpu.trace_start"() <{level = 10 : i32, message = "bqk,bkd->bqd"}> : () -> ()
    %cst_203 = arith.constant dense<0.000000e+00> : vector<2x8x32xf32>
    %450 = tpu.matmul %449, %433, %cst_203 {dimension_numbers = #tpu.dot_dimension_numbers<[2], [1], [1], [2], [0, 0, 0, 1, 1, 2], [0], [0]>} : vector<2x8x8xbf16>, vector<2x8x32xbf16>, vector<2x8x32xf32> -> vector<2x8x32xf32>
    "tpu.trace_stop"() : () -> ()
    %451 = arith.truncf %450 : vector<2x8x32xf32> to vector<2x8x32xbf16>
    %452 = vector.extract_strided_slice %427 {offsets = [0, 0], sizes = [32, 64], strides = [1, 1]} : vector<64x64xbf16> to vector<32x64xbf16>
    "tpu.trace_start"() <{level = 10 : i32, message = "bsd,de->bse"}> : () -> ()
    %cst_204 = arith.constant dense<0.000000e+00> : vector<2x8x64xf32>
    %453 = tpu.matmul %451, %452, %cst_204 {dimension_numbers = #tpu.dot_dimension_numbers<[2], [0], [0, 1], [1], [0, 0, 0, 1, 1, 1], [], []>} : vector<2x8x32xbf16>, vector<32x64xbf16>, vector<2x8x64xf32> -> vector<2x8x64xf32>
    "tpu.trace_stop"() : () -> ()
    %454 = vector.shape_cast %429 : vector<1x64xf32> to vector<1x1x64xf32>
    %455 = vector.broadcast %454 : vector<1x1x64xf32> to vector<2x8x64xf32>
    %456 = arith.addf %455, %453 : vector<2x8x64xf32>
    %457 = vector.extract_strided_slice %430 {offsets = [0, 0, 32], sizes = [2, 8, 32], strides = [1, 1, 1]} : vector<2x8x192xbf16> to vector<2x8x32xbf16>
    %458 = vector.extract_strided_slice %430 {offsets = [0, 0, 96], sizes = [2, 8, 32], strides = [1, 1, 1]} : vector<2x8x192xbf16> to vector<2x8x32xbf16>
    %459 = vector.extract_strided_slice %430 {offsets = [0, 0, 160], sizes = [2, 8, 32], strides = [1, 1, 1]} : vector<2x8x192xbf16> to vector<2x8x32xbf16>
    "tpu.trace_start"() <{level = 10 : i32, message = "bqd,bkd->bqk"}> : () -> ()
    %cst_205 = arith.constant dense<0.000000e+00> : vector<2x8x8xf32>
    %460 = tpu.matmul %457, %458, %cst_205 {dimension_numbers = #tpu.dot_dimension_numbers<[2], [2], [1], [1], [0, 0, 0, 1, 1, 1], [0], [0]>} : vector<2x8x32xbf16>, vector<2x8x32xbf16>, vector<2x8x8xf32> -> vector<2x8x8xf32>
    "tpu.trace_stop"() : () -> ()
    %cst_206 = arith.constant 0.176776692 : f32
    %461 = vector.broadcast %cst_206 : f32 to vector<2x8x8xf32>
    %462 = arith.mulf %460, %461 : vector<2x8x8xf32>
    %463 = vector.broadcast %2 : vector<2x1x8xf32> to vector<2x8x8xf32>
    %464 = arith.addf %462, %463 : vector<2x8x8xf32>
    %cst_207 = arith.constant dense<0xFF800000> : vector<2x8xf32>
    %465 = vector.multi_reduction <maximumf>, %464, %cst_207 [2] : vector<2x8x8xf32> to vector<2x8xf32>
    %466 = vector.shape_cast %465 : vector<2x8xf32> to vector<2x8x1xf32>
    %467 = vector.broadcast %466 : vector<2x8x1xf32> to vector<2x8x8xf32>
    %468 = arith.subf %464, %467 : vector<2x8x8xf32>
    %469 = math.exp %468 : vector<2x8x8xf32>
    %cst_208 = arith.constant dense<0.000000e+00> : vector<2x8xf32>
    %470 = vector.multi_reduction <add>, %469, %cst_208 [2] : vector<2x8x8xf32> to vector<2x8xf32>
    %471 = vector.shape_cast %470 : vector<2x8xf32> to vector<2x8x1xf32>
    %472 = tpu.reciprocal %471 {approx = true} : vector<2x8x1xf32> -> vector<2x8x1xf32>
    %473 = vector.broadcast %472 : vector<2x8x1xf32> to vector<2x8x8xf32>
    %474 = arith.mulf %469, %473 : vector<2x8x8xf32>
    %475 = arith.truncf %474 : vector<2x8x8xf32> to vector<2x8x8xbf16>
    "tpu.trace_start"() <{level = 10 : i32, message = "bqk,bkd->bqd"}> : () -> ()
    %cst_209 = arith.constant dense<0.000000e+00> : vector<2x8x32xf32>
    %476 = tpu.matmul %475, %459, %cst_209 {dimension_numbers = #tpu.dot_dimension_numbers<[2], [1], [1], [2], [0, 0, 0, 1, 1, 2], [0], [0]>} : vector<2x8x8xbf16>, vector<2x8x32xbf16>, vector<2x8x32xf32> -> vector<2x8x32xf32>
    "tpu.trace_stop"() : () -> ()
    %477 = arith.truncf %476 : vector<2x8x32xf32> to vector<2x8x32xbf16>
    %478 = vector.extract_strided_slice %427 {offsets = [32, 0], sizes = [32, 64], strides = [1, 1]} : vector<64x64xbf16> to vector<32x64xbf16>
    "tpu.trace_start"() <{level = 10 : i32, message = "bsd,de->bse"}> : () -> ()
    %cst_210 = arith.constant dense<0.000000e+00> : vector<2x8x64xf32>
    %479 = tpu.matmul %477, %478, %cst_210 {dimension_numbers = #tpu.dot_dimension_numbers<[2], [0], [0, 1], [1], [0, 0, 0, 1, 1, 1], [], []>} : vector<2x8x32xbf16>, vector<32x64xbf16>, vector<2x8x64xf32> -> vector<2x8x64xf32>
    "tpu.trace_stop"() : () -> ()
    %480 = arith.addf %456, %479 : vector<2x8x64xf32>
    %481 = arith.addf %416, %480 : vector<2x8x64xf32>
    %c3_211 = arith.constant 3 : index
    %c0_212 = arith.constant 0 : index
    %c0_213 = arith.constant 0 : index
    %482 = vector.load %arg7[%c3_211, %c0_212, %c0_213] : memref<4x1x64xf32, #tpu.memory_space<vmem>>, vector<1x1x64xf32>
    %483 = vector.shape_cast %482 : vector<1x1x64xf32> to vector<1x64xf32>
    %c3_214 = arith.constant 3 : index
    %c0_215 = arith.constant 0 : index
    %c0_216 = arith.constant 0 : index
    %484 = vector.load %arg8[%c3_214, %c0_215, %c0_216] : memref<4x1x64xf32, #tpu.memory_space<vmem>>, vector<1x1x64xf32>
    %485 = vector.shape_cast %484 : vector<1x1x64xf32> to vector<1x64xf32>
    %cst_217 = arith.constant dense<0.000000e+00> : vector<2x8xf32>
    %486 = vector.multi_reduction <add>, %481, %cst_217 [2] : vector<2x8x64xf32> to vector<2x8xf32>
    %487 = vector.shape_cast %486 : vector<2x8xf32> to vector<2x8x1xf32>
    %cst_218 = arith.constant 6.400000e+01 : f32
    %488 = vector.broadcast %cst_218 : f32 to vector<2x8x1xf32>
    %489 = arith.divf %487, %488 : vector<2x8x1xf32>
    %490 = vector.broadcast %489 : vector<2x8x1xf32> to vector<2x8x64xf32>
    %491 = arith.subf %481, %490 : vector<2x8x64xf32>
    %492 = arith.mulf %491, %491 : vector<2x8x64xf32>
    %cst_219 = arith.constant dense<0.000000e+00> : vector<2x8xf32>
    %493 = vector.multi_reduction <add>, %492, %cst_219 [2] : vector<2x8x64xf32> to vector<2x8xf32>
    %494 = vector.shape_cast %493 : vector<2x8xf32> to vector<2x8x1xf32>
    %cst_220 = arith.constant 6.400000e+01 : f32
    %495 = vector.broadcast %cst_220 : f32 to vector<2x8x1xf32>
    %496 = arith.divf %494, %495 : vector<2x8x1xf32>
    %cst_221 = arith.constant 9.99999974E-6 : f32
    %497 = vector.broadcast %cst_221 : f32 to vector<2x8x1xf32>
    %498 = arith.addf %496, %497 : vector<2x8x1xf32>
    %499 = math.rsqrt %498 : vector<2x8x1xf32>
    %500 = vector.broadcast %499 : vector<2x8x1xf32> to vector<2x8x64xf32>
    %501 = arith.mulf %491, %500 : vector<2x8x64xf32>
    %502 = vector.shape_cast %483 : vector<1x64xf32> to vector<1x1x64xf32>
    %503 = vector.broadcast %502 : vector<1x1x64xf32> to vector<2x8x64xf32>
    %504 = arith.mulf %501, %503 : vector<2x8x64xf32>
    %505 = vector.shape_cast %485 : vector<1x64xf32> to vector<1x1x64xf32>
    %506 = vector.broadcast %505 : vector<1x1x64xf32> to vector<2x8x64xf32>
    %507 = arith.addf %504, %506 : vector<2x8x64xf32>
    %508 = arith.truncf %507 : vector<2x8x64xf32> to vector<2x8x64xbf16>
    %c3_222 = arith.constant 3 : index
    %c0_223 = arith.constant 0 : index
    %c0_224 = arith.constant 0 : index
    %509 = vector.load %arg9[%c3_222, %c0_223, %c0_224] : memref<4x64x256xbf16, #tpu.memory_space<vmem>>, vector<1x64x256xbf16>
    %510 = vector.shape_cast %509 : vector<1x64x256xbf16> to vector<64x256xbf16>
    "tpu.trace_start"() <{level = 10 : i32, message = "bse,ef->bsf"}> : () -> ()
    %cst_225 = arith.constant dense<0.000000e+00> : vector<2x8x256xf32>
    %511 = tpu.matmul %508, %510, %cst_225 {dimension_numbers = #tpu.dot_dimension_numbers<[2], [0], [0, 1], [1], [0, 0, 0, 1, 1, 1], [], []>} : vector<2x8x64xbf16>, vector<64x256xbf16>, vector<2x8x256xf32> -> vector<2x8x256xf32>
    "tpu.trace_stop"() : () -> ()
    %c3_226 = arith.constant 3 : index
    %c0_227 = arith.constant 0 : index
    %c0_228 = arith.constant 0 : index
    %512 = vector.load %arg10[%c3_226, %c0_227, %c0_228] : memref<4x1x256xf32, #tpu.memory_space<vmem>>, vector<1x1x256xf32>
    %513 = vector.shape_cast %512 : vector<1x1x256xf32> to vector<1x256xf32>
    %514 = vector.shape_cast %513 : vector<1x256xf32> to vector<1x1x256xf32>
    %515 = vector.broadcast %514 : vector<1x1x256xf32> to vector<2x8x256xf32>
    %516 = arith.addf %511, %515 : vector<2x8x256xf32>
    %cst_229 = arith.constant 0.000000e+00 : f32
    %517 = vector.broadcast %cst_229 : f32 to vector<2x8x256xf32>
    %518 = arith.maximumf %516, %517 : vector<2x8x256xf32>
    %519 = arith.truncf %518 : vector<2x8x256xf32> to vector<2x8x256xbf16>
    %c3_230 = arith.constant 3 : index
    %c0_231 = arith.constant 0 : index
    %c0_232 = arith.constant 0 : index
    %520 = vector.load %arg11[%c3_230, %c0_231, %c0_232] : memref<4x256x64xbf16, #tpu.memory_space<vmem>>, vector<1x256x64xbf16>
    %521 = vector.shape_cast %520 : vector<1x256x64xbf16> to vector<256x64xbf16>
    "tpu.trace_start"() <{level = 10 : i32, message = "bsf,fe->bse"}> : () -> ()
    %cst_233 = arith.constant dense<0.000000e+00> : vector<2x8x64xf32>
    %522 = tpu.matmul %519, %521, %cst_233 {dimension_numbers = #tpu.dot_dimension_numbers<[2], [0], [0, 1], [1], [0, 0, 0, 1, 1, 1], [], []>} : vector<2x8x256xbf16>, vector<256x64xbf16>, vector<2x8x64xf32> -> vector<2x8x64xf32>
    "tpu.trace_stop"() : () -> ()
    %c3_234 = arith.constant 3 : index
    %c0_235 = arith.constant 0 : index
    %c0_236 = arith.constant 0 : index
    %523 = vector.load %arg12[%c3_234, %c0_235, %c0_236] : memref<4x1x64xf32, #tpu.memory_space<vmem>>, vector<1x1x64xf32>
    %524 = vector.shape_cast %523 : vector<1x1x64xf32> to vector<1x64xf32>
    %525 = vector.shape_cast %524 : vector<1x64xf32> to vector<1x1x64xf32>
    %526 = vector.broadcast %525 : vector<1x1x64xf32> to vector<2x8x64xf32>
    %527 = arith.addf %522, %526 : vector<2x8x64xf32>
    %528 = arith.addf %507, %527 : vector<2x8x64xf32>
    %c3_237 = arith.constant 3 : index
    %c0_238 = arith.constant 0 : index
    %c0_239 = arith.constant 0 : index
    %529 = vector.load %arg13[%c3_237, %c0_238, %c0_239] : memref<4x1x64xf32, #tpu.memory_space<vmem>>, vector<1x1x64xf32>
    %530 = vector.shape_cast %529 : vector<1x1x64xf32> to vector<1x64xf32>
    %c3_240 = arith.constant 3 : index
    %c0_241 = arith.constant 0 : index
    %c0_242 = arith.constant 0 : index
    %531 = vector.load %arg14[%c3_240, %c0_241, %c0_242] : memref<4x1x64xf32, #tpu.memory_space<vmem>>, vector<1x1x64xf32>
    %532 = vector.shape_cast %531 : vector<1x1x64xf32> to vector<1x64xf32>
    %cst_243 = arith.constant dense<0.000000e+00> : vector<2x8xf32>
    %533 = vector.multi_reduction <add>, %528, %cst_243 [2] : vector<2x8x64xf32> to vector<2x8xf32>
    %534 = vector.shape_cast %533 : vector<2x8xf32> to vector<2x8x1xf32>
    %cst_244 = arith.constant 6.400000e+01 : f32
    %535 = vector.broadcast %cst_244 : f32 to vector<2x8x1xf32>
    %536 = arith.divf %534, %535 : vector<2x8x1xf32>
    %537 = vector.broadcast %536 : vector<2x8x1xf32> to vector<2x8x64xf32>
    %538 = arith.subf %528, %537 : vector<2x8x64xf32>
    %539 = arith.mulf %538, %538 : vector<2x8x64xf32>
    %cst_245 = arith.constant dense<0.000000e+00> : vector<2x8xf32>
    %540 = vector.multi_reduction <add>, %539, %cst_245 [2] : vector<2x8x64xf32> to vector<2x8xf32>
    %541 = vector.shape_cast %540 : vector<2x8xf32> to vector<2x8x1xf32>
    %cst_246 = arith.constant 6.400000e+01 : f32
    %542 = vector.broadcast %cst_246 : f32 to vector<2x8x1xf32>
    %543 = arith.divf %541, %542 : vector<2x8x1xf32>
    %cst_247 = arith.constant 9.99999974E-6 : f32
    %544 = vector.broadcast %cst_247 : f32 to vector<2x8x1xf32>
    %545 = arith.addf %543, %544 : vector<2x8x1xf32>
    %546 = math.rsqrt %545 : vector<2x8x1xf32>
    %547 = vector.broadcast %546 : vector<2x8x1xf32> to vector<2x8x64xf32>
    %548 = arith.mulf %538, %547 : vector<2x8x64xf32>
    %549 = vector.shape_cast %530 : vector<1x64xf32> to vector<1x1x64xf32>
    %550 = vector.broadcast %549 : vector<1x1x64xf32> to vector<2x8x64xf32>
    %551 = arith.mulf %548, %550 : vector<2x8x64xf32>
    %552 = vector.shape_cast %532 : vector<1x64xf32> to vector<1x1x64xf32>
    %553 = vector.broadcast %552 : vector<1x1x64xf32> to vector<2x8x64xf32>
    %554 = arith.addf %551, %553 : vector<2x8x64xf32>
    %555 = arith.truncf %554 : vector<2x8x64xf32> to vector<2x8x64xbf16>
    %c0_248 = arith.constant 0 : index
    %c0_249 = arith.constant 0 : index
    %556 = vector.load %arg15[%c0_248, %c0_249] : memref<64x48xbf16, #tpu.memory_space<vmem>>, vector<64x48xbf16>
    "tpu.trace_start"() <{level = 10 : i32, message = "bse,ef->bsf"}> : () -> ()
    %cst_250 = arith.constant dense<0.000000e+00> : vector<2x8x48xf32>
    %557 = tpu.matmul %555, %556, %cst_250 {dimension_numbers = #tpu.dot_dimension_numbers<[2], [0], [0, 1], [1], [0, 0, 0, 1, 1, 1], [], []>} : vector<2x8x64xbf16>, vector<64x48xbf16>, vector<2x8x48xf32> -> vector<2x8x48xf32>
    "tpu.trace_stop"() : () -> ()
    %c0_251 = arith.constant 0 : index
    %c0_252 = arith.constant 0 : index
    %558 = vector.load %arg16[%c0_251, %c0_252] : memref<1x48xf32, #tpu.memory_space<vmem>>, vector<1x48xf32>
    %559 = vector.shape_cast %558 : vector<1x48xf32> to vector<1x1x48xf32>
    %560 = vector.broadcast %559 : vector<1x1x48xf32> to vector<2x8x48xf32>
    %561 = arith.addf %557, %560 : vector<2x8x48xf32>
    %c0_253 = arith.constant 0 : index
    %c0_254 = arith.constant 0 : index
    %562 = vector.load %arg17[%c0_253, %c0_254] : memref<16x16xbf16, #tpu.memory_space<vmem>>, vector<16x16xbf16>
    %c0_255 = arith.constant 0 : index
    %c0_256 = arith.constant 0 : index
    %563 = vector.load %arg18[%c0_255, %c0_256] : memref<1x16xf32, #tpu.memory_space<vmem>>, vector<1x16xf32>
    %564 = arith.truncf %561 : vector<2x8x48xf32> to vector<2x8x48xbf16>
    %565 = vector.extract_strided_slice %564 {offsets = [0, 0, 0], sizes = [2, 8, 8], strides = [1, 1, 1]} : vector<2x8x48xbf16> to vector<2x8x8xbf16>
    %566 = vector.extract_strided_slice %564 {offsets = [0, 0, 16], sizes = [2, 8, 8], strides = [1, 1, 1]} : vector<2x8x48xbf16> to vector<2x8x8xbf16>
    %567 = vector.extract_strided_slice %564 {offsets = [0, 0, 32], sizes = [2, 8, 8], strides = [1, 1, 1]} : vector<2x8x48xbf16> to vector<2x8x8xbf16>
    "tpu.trace_start"() <{level = 10 : i32, message = "bqd,bkd->bqk"}> : () -> ()
    %cst_257 = arith.constant dense<0.000000e+00> : vector<2x8x8xf32>
    %568 = tpu.matmul %565, %566, %cst_257 {dimension_numbers = #tpu.dot_dimension_numbers<[2], [2], [1], [1], [0, 0, 0, 1, 1, 1], [0], [0]>} : vector<2x8x8xbf16>, vector<2x8x8xbf16>, vector<2x8x8xf32> -> vector<2x8x8xf32>
    "tpu.trace_stop"() : () -> ()
    %cst_258 = arith.constant 0.353553385 : f32
    %569 = vector.broadcast %cst_258 : f32 to vector<2x8x8xf32>
    %570 = arith.mulf %568, %569 : vector<2x8x8xf32>
    %571 = vector.broadcast %2 : vector<2x1x8xf32> to vector<2x8x8xf32>
    %572 = arith.addf %570, %571 : vector<2x8x8xf32>
    %cst_259 = arith.constant dense<0xFF800000> : vector<2x8xf32>
    %573 = vector.multi_reduction <maximumf>, %572, %cst_259 [2] : vector<2x8x8xf32> to vector<2x8xf32>
    %574 = vector.shape_cast %573 : vector<2x8xf32> to vector<2x8x1xf32>
    %575 = vector.broadcast %574 : vector<2x8x1xf32> to vector<2x8x8xf32>
    %576 = arith.subf %572, %575 : vector<2x8x8xf32>
    %577 = math.exp %576 : vector<2x8x8xf32>
    %cst_260 = arith.constant dense<0.000000e+00> : vector<2x8xf32>
    %578 = vector.multi_reduction <add>, %577, %cst_260 [2] : vector<2x8x8xf32> to vector<2x8xf32>
    %579 = vector.shape_cast %578 : vector<2x8xf32> to vector<2x8x1xf32>
    %580 = tpu.reciprocal %579 {approx = true} : vector<2x8x1xf32> -> vector<2x8x1xf32>
    %581 = vector.broadcast %580 : vector<2x8x1xf32> to vector<2x8x8xf32>
    %582 = arith.mulf %577, %581 : vector<2x8x8xf32>
    %583 = arith.truncf %582 : vector<2x8x8xf32> to vector<2x8x8xbf16>
    "tpu.trace_start"() <{level = 10 : i32, message = "bqk,bkd->bqd"}> : () -> ()
    %cst_261 = arith.constant dense<0.000000e+00> : vector<2x8x8xf32>
    %584 = tpu.matmul %583, %567, %cst_261 {dimension_numbers = #tpu.dot_dimension_numbers<[2], [1], [1], [2], [0, 0, 0, 1, 1, 2], [0], [0]>} : vector<2x8x8xbf16>, vector<2x8x8xbf16>, vector<2x8x8xf32> -> vector<2x8x8xf32>
    "tpu.trace_stop"() : () -> ()
    %585 = arith.truncf %584 : vector<2x8x8xf32> to vector<2x8x8xbf16>
    %586 = vector.extract_strided_slice %562 {offsets = [0, 0], sizes = [8, 16], strides = [1, 1]} : vector<16x16xbf16> to vector<8x16xbf16>
    "tpu.trace_start"() <{level = 10 : i32, message = "bsd,de->bse"}> : () -> ()
    %cst_262 = arith.constant dense<0.000000e+00> : vector<2x8x16xf32>
    %587 = tpu.matmul %585, %586, %cst_262 {dimension_numbers = #tpu.dot_dimension_numbers<[2], [0], [0, 1], [1], [0, 0, 0, 1, 1, 1], [], []>} : vector<2x8x8xbf16>, vector<8x16xbf16>, vector<2x8x16xf32> -> vector<2x8x16xf32>
    "tpu.trace_stop"() : () -> ()
    %588 = vector.shape_cast %563 : vector<1x16xf32> to vector<1x1x16xf32>
    %589 = vector.broadcast %588 : vector<1x1x16xf32> to vector<2x8x16xf32>
    %590 = arith.addf %589, %587 : vector<2x8x16xf32>
    %591 = vector.extract_strided_slice %564 {offsets = [0, 0, 8], sizes = [2, 8, 8], strides = [1, 1, 1]} : vector<2x8x48xbf16> to vector<2x8x8xbf16>
    %592 = vector.extract_strided_slice %564 {offsets = [0, 0, 24], sizes = [2, 8, 8], strides = [1, 1, 1]} : vector<2x8x48xbf16> to vector<2x8x8xbf16>
    %593 = vector.extract_strided_slice %564 {offsets = [0, 0, 40], sizes = [2, 8, 8], strides = [1, 1, 1]} : vector<2x8x48xbf16> to vector<2x8x8xbf16>
    "tpu.trace_start"() <{level = 10 : i32, message = "bqd,bkd->bqk"}> : () -> ()
    %cst_263 = arith.constant dense<0.000000e+00> : vector<2x8x8xf32>
    %594 = tpu.matmul %591, %592, %cst_263 {dimension_numbers = #tpu.dot_dimension_numbers<[2], [2], [1], [1], [0, 0, 0, 1, 1, 1], [0], [0]>} : vector<2x8x8xbf16>, vector<2x8x8xbf16>, vector<2x8x8xf32> -> vector<2x8x8xf32>
    "tpu.trace_stop"() : () -> ()
    %cst_264 = arith.constant 0.353553385 : f32
    %595 = vector.broadcast %cst_264 : f32 to vector<2x8x8xf32>
    %596 = arith.mulf %594, %595 : vector<2x8x8xf32>
    %597 = vector.broadcast %2 : vector<2x1x8xf32> to vector<2x8x8xf32>
    %598 = arith.addf %596, %597 : vector<2x8x8xf32>
    %cst_265 = arith.constant dense<0xFF800000> : vector<2x8xf32>
    %599 = vector.multi_reduction <maximumf>, %598, %cst_265 [2] : vector<2x8x8xf32> to vector<2x8xf32>
    %600 = vector.shape_cast %599 : vector<2x8xf32> to vector<2x8x1xf32>
    %601 = vector.broadcast %600 : vector<2x8x1xf32> to vector<2x8x8xf32>
    %602 = arith.subf %598, %601 : vector<2x8x8xf32>
    %603 = math.exp %602 : vector<2x8x8xf32>
    %cst_266 = arith.constant dense<0.000000e+00> : vector<2x8xf32>
    %604 = vector.multi_reduction <add>, %603, %cst_266 [2] : vector<2x8x8xf32> to vector<2x8xf32>
    %605 = vector.shape_cast %604 : vector<2x8xf32> to vector<2x8x1xf32>
    %606 = tpu.reciprocal %605 {approx = true} : vector<2x8x1xf32> -> vector<2x8x1xf32>
    %607 = vector.broadcast %606 : vector<2x8x1xf32> to vector<2x8x8xf32>
    %608 = arith.mulf %603, %607 : vector<2x8x8xf32>
    %609 = arith.truncf %608 : vector<2x8x8xf32> to vector<2x8x8xbf16>
    "tpu.trace_start"() <{level = 10 : i32, message = "bqk,bkd->bqd"}> : () -> ()
    %cst_267 = arith.constant dense<0.000000e+00> : vector<2x8x8xf32>
    %610 = tpu.matmul %609, %593, %cst_267 {dimension_numbers = #tpu.dot_dimension_numbers<[2], [1], [1], [2], [0, 0, 0, 1, 1, 2], [0], [0]>} : vector<2x8x8xbf16>, vector<2x8x8xbf16>, vector<2x8x8xf32> -> vector<2x8x8xf32>
    "tpu.trace_stop"() : () -> ()
    %611 = arith.truncf %610 : vector<2x8x8xf32> to vector<2x8x8xbf16>
    %612 = vector.extract_strided_slice %562 {offsets = [8, 0], sizes = [8, 16], strides = [1, 1]} : vector<16x16xbf16> to vector<8x16xbf16>
    "tpu.trace_start"() <{level = 10 : i32, message = "bsd,de->bse"}> : () -> ()
    %cst_268 = arith.constant dense<0.000000e+00> : vector<2x8x16xf32>
    %613 = tpu.matmul %611, %612, %cst_268 {dimension_numbers = #tpu.dot_dimension_numbers<[2], [0], [0, 1], [1], [0, 0, 0, 1, 1, 1], [], []>} : vector<2x8x8xbf16>, vector<8x16xbf16>, vector<2x8x16xf32> -> vector<2x8x16xf32>
    "tpu.trace_stop"() : () -> ()
    %614 = arith.addf %590, %613 : vector<2x8x16xf32>
    %c0_269 = arith.constant 0 : index
    %c0_270 = arith.constant 0 : index
    %615 = vector.load %arg2[%c0_269, %c0_270] : memref<2x8xf32, #tpu.memory_space<vmem>>, vector<2x8xf32>
    %616 = vector.shape_cast %615 : vector<2x8xf32> to vector<2x8x1xf32>
    %617 = vector.broadcast %616 : vector<2x8x1xf32> to vector<2x8x16xf32>
    %618 = arith.mulf %617, %614 : vector<2x8x16xf32>
    %cst_271 = arith.constant dense<0.000000e+00> : vector<2x16xf32>
    %619 = vector.multi_reduction <add>, %618, %cst_271 [1] : vector<2x8x16xf32> to vector<2x16xf32>
    %cst_272 = arith.constant dense<0.000000e+00> : vector<2xf32>
    %620 = vector.multi_reduction <add>, %615, %cst_272 [1] : vector<2x8xf32> to vector<2xf32>
    %621 = vector.shape_cast %620 : vector<2xf32> to vector<2x1xf32>
    %cst_273 = arith.constant 9.99999997E-7 : f32
    %622 = vector.broadcast %cst_273 : f32 to vector<2x1xf32>
    %623 = arith.addf %621, %622 : vector<2x1xf32>
    %624 = tpu.reciprocal %623 {approx = true} : vector<2x1xf32> -> vector<2x1xf32>
    %625 = vector.broadcast %624 : vector<2x1xf32> to vector<2x16xf32>
    %626 = arith.mulf %619, %625 : vector<2x16xf32>
    %c0_274 = arith.constant 0 : index
    %c0_275 = arith.constant 0 : index
    %627 = vector.load %arg19[%c0_274, %c0_275] : memref<2x16xf32, #tpu.memory_space<vmem>>, vector<2x16xf32>
    tpu.vector_store %arg19[%c0_274, %c0_275], %626 {strides = array<i32>} : memref<2x16xf32, #tpu.memory_space<vmem>>, vector<2x16xf32>,
    return
  }
}

</mosaic_0001>

<llo_original>
// kernel: tpu_custom_call.1
$region0: #{tpu_custom_call.1}
  #allocation0 [shape = 'u32[]', space=smem, size = 0x4, offset = 0x4, fixed_abs, tag = 'smem constant byte address 0x4 - core index']
  #allocation1 [shape = 'u32[144,128]{1,0:T(1,128)}', space=vmem, size = 0x12000, scoped, tag = 'internal scratch']
  %s0 = inlined_call_operand.vmem [shape: f32[2,8,64], index: 0, kind: input, shape index: {}]
  %s1 = inlined_call_operand.vmem [shape: f32[2,8], index: 1, kind: input, shape index: {}]
  %s2 = inlined_call_operand.vmem [shape: f32[2,8], index: 2, kind: input, shape index: {}]
  %s3 = inlined_call_operand.vmem [shape: bf16[4,64,192], index: 3, kind: input, shape index: {}]
  %s4 = inlined_call_operand.vmem [shape: f32[4,1,192], index: 4, kind: input, shape index: {}]
  %s5 = inlined_call_operand.vmem [shape: bf16[4,64,64], index: 5, kind: input, shape index: {}]
  %s6 = inlined_call_operand.vmem [shape: f32[4,1,64], index: 6, kind: input, shape index: {}]
  %s7 = inlined_call_operand.vmem [shape: f32[4,1,64], index: 7, kind: input, shape index: {}]
  %s8 = inlined_call_operand.vmem [shape: f32[4,1,64], index: 8, kind: input, shape index: {}]
  %s9 = inlined_call_operand.vmem [shape: bf16[4,64,256], index: 9, kind: input, shape index: {}]
  %s10 = inlined_call_operand.vmem [shape: f32[4,1,256], index: 10, kind: input, shape index: {}]
  %s11 = inlined_call_operand.vmem [shape: bf16[4,256,64], index: 11, kind: input, shape index: {}]
  %s12 = inlined_call_operand.vmem [shape: f32[4,1,64], index: 12, kind: input, shape index: {}]
  %s13 = inlined_call_operand.vmem [shape: f32[4,1,64], index: 13, kind: input, shape index: {}]
  %s14 = inlined_call_operand.vmem [shape: f32[4,1,64], index: 14, kind: input, shape index: {}]
  %s15 = inlined_call_operand.vmem [shape: bf16[64,48], index: 15, kind: input, shape index: {}]
  %s16 = inlined_call_operand.vmem [shape: f32[1,48], index: 16, kind: input, shape index: {}]
  %s17 = inlined_call_operand.vmem [shape: bf16[16,16], index: 17, kind: input, shape index: {}]
  %s18 = inlined_call_operand.vmem [shape: f32[1,16], index: 18, kind: input, shape index: {}]
  %s19 = inlined_call_operand.hbm [shape: f32[2,16], index: 19, kind: output, shape index: {}]
  %s20 = sld [smem:[#allocation0]]
  $region86: #{tpu_custom_call.1} parent=0
    _
  %s22 = ssub.s32 1, %s20
  %s23 = scalar_select 0, %s22, %s20
  $region1: #{tpu_custom_call.1} parent=0
    #allocation2 [shape = 'u8[1024]{0}', space=vmem, size = 0x400, scoped, tag = 'output window, operand 0, single buffered']
    #allocation3 [shape = 's32[1]{0}', space=sflag, size = 0x4, scoped, tag = 'scoped memory for tpu_custom_call.1']
    %24 = vsyncpa [#allocation3], 0
    // Predicated region
    $region2: #{tpu_custom_call.1} parent=1 // pred_check
      _
    $region3: #{tpu_custom_call.1} parent=1 // pred_check_branch
      %26 = sbr.rel (0) target = $region5
    $region4: #{tpu_custom_call.1} parent=1 // pred_region
      _
    $region5: #{tpu_custom_call.1} parent=1 // pred_fallthru
      _
    // Predicated region
    $region6: #{tpu_custom_call.1} parent=1 // pred_check
      _
    $region7: #{tpu_custom_call.1} parent=1 // pred_check_branch
      %28 = sbr.rel (0) target = $region9
    $region8: #{tpu_custom_call.1} parent=1 // pred_region
      _
    $region9: #{tpu_custom_call.1} parent=1 // pred_fallthru
      _
    // Predicated region
    $region10: #{tpu_custom_call.1} parent=1 // pred_check
      _
    $region11: #{tpu_custom_call.1} parent=1 // pred_check_branch
      %30 = sbr.rel (0) target = $region13
    $region12: #{tpu_custom_call.1} parent=1 // pred_region
      _
    $region13: #{tpu_custom_call.1} parent=1 // pred_fallthru
      _
    // Predicated region
    $region14: #{tpu_custom_call.1} parent=1 // pred_check
      _
    $region15: #{tpu_custom_call.1} parent=1 // pred_check_branch
      %32 = sbr.rel (0) target = $region17
    $region16: #{tpu_custom_call.1} parent=1 // pred_region
      _
    $region17: #{tpu_custom_call.1} parent=1 // pred_fallthru
      _
    // Predicated region
    $region18: #{tpu_custom_call.1} parent=1 // pred_check
      _
    $region19: #{tpu_custom_call.1} parent=1 // pred_check_branch
      %34 = sbr.rel (0) target = $region21
    $region20: #{tpu_custom_call.1} parent=1 // pred_region
      _
    $region21: #{tpu_custom_call.1} parent=1 // pred_fallthru
      _
    // Predicated region
    $region22: #{tpu_custom_call.1} parent=1 // pred_check
      _
    $region23: #{tpu_custom_call.1} parent=1 // pred_check_branch
      %36 = sbr.rel (0) target = $region25
    $region24: #{tpu_custom_call.1} parent=1 // pred_region
      _
    $region25: #{tpu_custom_call.1} parent=1 // pred_fallthru
      _
    // Predicated region
    $region26: #{tpu_custom_call.1} parent=1 // pred_check
      _
    $region27: #{tpu_custom_call.1} parent=1 // pred_check_branch
      %38 = sbr.rel (0) target = $region29
    $region28: #{tpu_custom_call.1} parent=1 // pred_region
      _
    $region29: #{tpu_custom_call.1} parent=1 // pred_fallthru
      _
    // Predicated region
    $region30: #{tpu_custom_call.1} parent=1 // pred_check
      _
    $region31: #{tpu_custom_call.1} parent=1 // pred_check_branch
      %40 = sbr.rel (0) target = $region33
    $region32: #{tpu_custom_call.1} parent=1 // pred_region
      _
    $region33: #{tpu_custom_call.1} parent=1 // pred_fallthru
      _
    // Predicated region
    $region34: #{tpu_custom_call.1} parent=1 // pred_check
      _
    $region35: #{tpu_custom_call.1} parent=1 // pred_check_branch
      %42 = sbr.rel (0) target = $region37
    $region36: #{tpu_custom_call.1} parent=1 // pred_region
      _
    $region37: #{tpu_custom_call.1} parent=1 // pred_fallthru
      _
    // Predicated region
    $region38: #{tpu_custom_call.1} parent=1 // pred_check
      _
    $region39: #{tpu_custom_call.1} parent=1 // pred_check_branch
      %44 = sbr.rel (0) target = $region41
    $region40: #{tpu_custom_call.1} parent=1 // pred_region
      _
    $region41: #{tpu_custom_call.1} parent=1 // pred_fallthru
      _
    // Predicated region
    $region42: #{tpu_custom_call.1} parent=1 // pred_check
      _
    $region43: #{tpu_custom_call.1} parent=1 // pred_check_branch
      %46 = sbr.rel (0) target = $region45
    $region44: #{tpu_custom_call.1} parent=1 // pred_region
      _
    $region45: #{tpu_custom_call.1} parent=1 // pred_fallthru
      _
    // Predicated region
    $region46: #{tpu_custom_call.1} parent=1 // pred_check
      _
    $region47: #{tpu_custom_call.1} parent=1 // pred_check_branch
      %48 = sbr.rel (0) target = $region49
    $region48: #{tpu_custom_call.1} parent=1 // pred_region
      _
    $region49: #{tpu_custom_call.1} parent=1 // pred_fallthru
      _
    // Predicated region
    $region50: #{tpu_custom_call.1} parent=1 // pred_check
      _
    $region51: #{tpu_custom_call.1} parent=1 // pred_check_branch
      %50 = sbr.rel (0) target = $region53
    $region52: #{tpu_custom_call.1} parent=1 // pred_region
      _
    $region53: #{tpu_custom_call.1} parent=1 // pred_fallthru
      _
    // Predicated region
    $region54: #{tpu_custom_call.1} parent=1 // pred_check
      _
    $region55: #{tpu_custom_call.1} parent=1 // pred_check_branch
      %52 = sbr.rel (0) target = $region57
    $region56: #{tpu_custom_call.1} parent=1 // pred_region
      _
    $region57: #{tpu_custom_call.1} parent=1 // pred_fallthru
      _
    // Predicated region
    $region58: #{tpu_custom_call.1} parent=1 // pred_check
      _
    $region59: #{tpu_custom_call.1} parent=1 // pred_check_branch
      %54 = sbr.rel (0) target = $region61
    $region60: #{tpu_custom_call.1} parent=1 // pred_region
      _
    $region61: #{tpu_custom_call.1} parent=1 // pred_fallthru
      _
    // Predicated region
    $region62: #{tpu_custom_call.1} parent=1 // pred_check
      _
    $region63: #{tpu_custom_call.1} parent=1 // pred_check_branch
      %56 = sbr.rel (0) target = $region65
    $region64: #{tpu_custom_call.1} parent=1 // pred_region
      _
    $region65: #{tpu_custom_call.1} parent=1 // pred_fallthru
      _
    // Predicated region
    $region66: #{tpu_custom_call.1} parent=1 // pred_check
      _
    $region67: #{tpu_custom_call.1} parent=1 // pred_check_branch
      %58 = sbr.rel (0) target = $region69
    $region68: #{tpu_custom_call.1} parent=1 // pred_region
      _
    $region69: #{tpu_custom_call.1} parent=1 // pred_fallthru
      _
    // Predicated region
    $region70: #{tpu_custom_call.1} parent=1 // pred_check
      _
    $region71: #{tpu_custom_call.1} parent=1 // pred_check_branch
      %60 = sbr.rel (0) target = $region73
    $region72: #{tpu_custom_call.1} parent=1 // pred_region
      _
    $region73: #{tpu_custom_call.1} parent=1 // pred_fallthru
      _
    // Predicated region
    $region74: #{tpu_custom_call.1} parent=1 // pred_check
      _
    $region75: #{tpu_custom_call.1} parent=1 // pred_check_branch
      %62 = sbr.rel (0) target = $region77
    $region76: #{tpu_custom_call.1} parent=1 // pred_region
      _
    $region77: #{tpu_custom_call.1} parent=1 // pred_fallthru
      _
    %v64 = vld [vmem:[%s0] sm:$0xff]
    %v65 = vld [vmem:[%s0 + $0x8] sm:$0xff]
    %v66 = vld [vmem:[%s1] sm:$0x3]
    %v69 = vunpack.c.l.s4 1966171168
    %v70 = vunpack.c.0.s8 %v69
    %v71 = vlaneseq
    %v72 = vshrl.u32 %v71, 7
    %v73 = vsub.s32 %v70, %v72
    %v74 = vrot.slane %v66, %v73
    %v75 = vcombine.high %v74, %v74
    %v77 = vunpack.c.l.s4 1966171168
    %v78 = vunpack.c.0.s8 %v77
    %v79 = vlaneseq
    %v80 = vshrl.u32 %v79, 7
    %v81 = vsub.s32 %v78, %v80
    %v82 = vrot.slane %v74, %v81
    %v84 = vunpack.c.l.s4 1966171168
    %v85 = vunpack.c.0.s8 %v84
    %v86 = vlaneseq
    %v87 = vshrl.u32 %v86, 7
    %v88 = vsub.s32 %v85, %v87
    %v89 = vrot.slane %v75, %v88
    %v90 = vpack.c.bf16 %v64, %v64
    %v91 = vpack.c.bf16 %v65, %v65
    %v92 = vld [vmem:[%s3] sm:$0xff]
    %v93 = vld [vmem:[%s3 + $0x8] sm:$0xff]
    %v94 = vld [vmem:[%s3 + $0x10] sm:$0xff]
    %v95 = vld [vmem:[%s3 + $0x18] sm:$0xff]
    %v96 = vld [vmem:[%s3 + $0x20] sm:$0xff]
    %v97 = vld [vmem:[%s3 + $0x28] sm:$0xff]
    %v98 = vld [vmem:[%s3 + $0x30] sm:$0xff]
    %v99 = vld [vmem:[%s3 + $0x38] sm:$0xff]
    %v100 = vld [vmem:[%s4] sm:$0x3]
    %v102 = vlaneseq
    %v103 = vshrl.u32 %v102, 7
    %v104 = vsub.s32 0, %v103
    %v105 = vrot.slane %v100, %v104
    %v106 = vlaneseq
    %v107 = vshrl.u32 %v106, 7
    %v108 = vsub.s32 1, %v107
    %v109 = vrot.slane %v100, %v108
    %v114 = vunpack.c.l.b16 %v90
    %v115 = vunpack.c.l.b16 %v91
    %v116 = vpack.c.b16 %v115, %v114
    %v125 = vunpack.c.l.b16 %v92
    %v126 = vunpack.c.h.b16 %v92
    %v127 = vunpack.c.l.b16 %v93
    %v128 = vunpack.c.h.b16 %v93
    %v129 = vunpack.c.l.b16 %v94
    %v130 = vunpack.c.h.b16 %v94
    %v131 = vunpack.c.l.b16 %v95
    %v132 = vunpack.c.h.b16 %v95
    %v133 = vunpack.c.l.b16 %v96
    %v134 = vunpack.c.h.b16 %v96
    %v135 = vunpack.c.l.b16 %v97
    %v136 = vunpack.c.h.b16 %v97
    %v137 = vunpack.c.l.b16 %v98
    %v138 = vunpack.c.h.b16 %v98
    %v139 = vunpack.c.l.b16 %v99
    %v140 = vunpack.c.h.b16 %v99
    %v141 = vpack.c.b16 %v127, %v125
    %v142 = vpack.c.b16 %v128, %v126
    %v143 = vpack.c.b16 %v131, %v129
    %v144 = vpack.c.b16 %v132, %v130
    %v145 = vpack.c.b16 %v135, %v133
    %v146 = vpack.c.b16 %v136, %v134
    %v147 = vpack.c.b16 %v139, %v137
    %v148 = vpack.c.b16 %v140, %v138
    %vm157 = vcmask 523264
    %v159 = vsel %vm157, %v116, 0
    %161 = vmatprep.subr.bf16.mxu0 %v142
    %162 = vmatpush1.bf16.msra.mxu0 %v141
    %163 = vmatprep.subr.bf16.mxu0 %v144
    %164 = vmatpush1.bf16.msra.mxu0 %v143
    %165 = vmatprep.subr.bf16.mxu0 %v146
    %166 = vmatpush1.bf16.msra.mxu0 %v145
    %167 = vmatprep.subr.bf16.mxu0 %v148
    %168 = vmatpush1.bf16.msra.mxu0 %v147
    %169 = vmatprep.subr.bf16.mxu0 0
    %170 = vmatpush1.bf16.msra.mxu0 0
    %171 = vmatprep.subr.bf16.mxu0 0
    %172 = vmatpush1.bf16.msra.mxu0 0
    %173 = vmatprep.subr.bf16.mxu0 0
    %174 = vmatpush1.bf16.msra.mxu0 0
    %175 = vmatprep.subr.bf16.mxu0 0
    %176 = vmatpush1.bf16.msra.mxu0 0
    %177 = vmatprep.subr.bf16.mxu0 0
    %178 = vmatpush1.bf16.msra.mxu0 0
    %179 = vmatprep.subr.bf16.mxu0 0
    %180 = vmatpush1.bf16.msra.mxu0 0
    %181 = vmatprep.subr.bf16.mxu0 0
    %182 = vmatpush1.bf16.msra.mxu0 0
    %183 = vmatprep.subr.bf16.mxu0 0
    %184 = vmatpush1.bf16.msra.mxu0 0
    %185 = vmatprep.subr.bf16.mxu0 0
    %186 = vmatpush1.bf16.msra.mxu0 0
    %187 = vmatprep.subr.bf16.mxu0 0
    %188 = vmatpush1.bf16.msra.mxu0 0
    %189 = vmatprep.subr.bf16.mxu0 0
    %190 = vmatpush1.bf16.msra.mxu0 0
    %191 = vmatprep.subr.bf16.mxu0 0
    %192 = vmatpush1.bf16.msra.mxu0 0
    %193 = vmatprep.mubr.bf16.mxu0 0
    %194 = vmatmul.mubr.bf16.gmra.mrb[0].mxu0 %v159
    %v195 = vpop.f32.mrb[0].mxu0
    %v196 = vadd.f32 %v105, %v195
    %v197 = vpop.f32.mrb[0].mxu0
    %v198 = vadd.f32 %v109, %v197
    %v199 = vpop.f32.mrb[0].mxu0
    %v200 = vadd.f32 %v105, %v199
    %v201 = vpop.f32.mrb[0].mxu0
    %v202 = vadd.f32 %v109, %v201
    %203 = vdwg.mxu0
    %v204 = vld [vmem:[%s5] sm:$0xf]
    %v205 = vld [vmem:[%s5 + $0x4] sm:$0xf]
    %v206 = vld [vmem:[%s5 + $0x8] sm:$0xf]
    %v207 = vld [vmem:[%s5 + $0xc] sm:$0xf]
    %v208 = vld [vmem:[%s5 + $0x10] sm:$0xf]
    %v209 = vld [vmem:[%s5 + $0x14] sm:$0xf]
    %v210 = vld [vmem:[%s5 + $0x18] sm:$0xf]
    %v211 = vld [vmem:[%s5 + $0x1c] sm:$0xf]
    %v212 = vld [vmem:[%s6] sm:$0x1]
    %v213 = vpack.c.bf16 %v196, %v196
    %v214 = vpack.c.bf16 %v198, %v198
    %v215 = vpack.c.bf16 %v200, %v200
    %v216 = vpack.c.bf16 %v202, %v202
    %218 = vrot.lane.b32.xlu0 %v213, 64
    %v219 = vpop.permute.xlu0 %218
    %vm220 = vcmask 261120
    %v222 = vsel %vm220, %v213, 0
    %v225 = vsel %vm220, %v219, 0
    %227 = vmatprep.subr.bf16.mxu0 0
    %228 = vmatpush1.bf16.xpose.msra.mxu0 %v225
    %229 = vmatprep.subr.bf16.mxu0 0
    %230 = vmatpush1.bf16.xpose.msra.mxu0 0
    %231 = vmatprep.subr.bf16.mxu0 0
    %232 = vmatpush1.bf16.xpose.msra.mxu0 0
    %233 = vmatprep.subr.bf16.mxu0 0
    %234 = vmatpush1.bf16.xpose.msra.mxu0 0
    %235 = vmatprep.subr.bf16.mxu0 0
    %236 = vmatpush1.bf16.xpose.msra.mxu0 0
    %237 = vmatprep.subr.bf16.mxu0 0
    %238 = vmatpush1.bf16.xpose.msra.mxu0 0
    %239 = vmatprep.subr.bf16.mxu0 0
    %240 = vmatpush1.bf16.xpose.msra.mxu0 0
    %241 = vmatprep.subr.bf16.mxu0 0
    %242 = vmatpush1.bf16.xpose.msra.mxu0 0
    %243 = vmatprep.subr.bf16.mxu0 0
    %244 = vmatpush1.bf16.xpose.msra.mxu0 0
    %245 = vmatprep.subr.bf16.mxu0 0
    %246 = vmatpush1.bf16.xpose.msra.mxu0 0
    %247 = vmatprep.subr.bf16.mxu0 0
    %248 = vmatpush1.bf16.xpose.msra.mxu0 0
    %249 = vmatprep.subr.bf16.mxu0 0
    %250 = vmatpush1.bf16.xpose.msra.mxu0 0
    %251 = vmatprep.subr.bf16.mxu0 0
    %252 = vmatpush1.bf16.xpose.msra.mxu0 0
    %253 = vmatprep.subr.bf16.mxu0 0
    %254 = vmatpush1.bf16.xpose.msra.mxu0 0
    %255 = vmatprep.subr.bf16.mxu0 0
    %256 = vmatpush1.bf16.xpose.msra.mxu0 0
    %257 = vmatprep.subr.bf16.mxu0 0
    %258 = vmatpush1.bf16.xpose.msra.mxu0 0
    %259 = vmatprep.mubr.bf16.mxu0 0
    %260 = vmatmul.mubr.bf16.gmra.mrb[0].mxu0 %v222
    %v261 = vpop.f32.mrb[0].mxu0
    %v262 = vadd.f32 0.0, %v261
    %v263 = vpop.f32.mrb[0].mxu0
    %v264 = vpop.f32.mrb[0].mxu0
    %v265 = vpop.f32.mrb[0].mxu0
    %266 = vdwg.mxu0
    %268 = vrot.lane.b32.xlu0 %v215, 64
    %v269 = vpop.permute.xlu0 %268
    %v271 = vsel %vm220, %v215, 0
    %v274 = vsel %vm220, %v269, 0
    %276 = vmatprep.subr.bf16.mxu0 0
    %277 = vmatpush1.bf16.xpose.msra.mxu0 %v274
    %278 = vmatprep.subr.bf16.mxu0 0
    %279 = vmatpush1.bf16.xpose.msra.mxu0 0
    %280 = vmatprep.subr.bf16.mxu0 0
    %281 = vmatpush1.bf16.xpose.msra.mxu0 0
    %282 = vmatprep.subr.bf16.mxu0 0
    %283 = vmatpush1.bf16.xpose.msra.mxu0 0
    %284 = vmatprep.subr.bf16.mxu0 0
    %285 = vmatpush1.bf16.xpose.msra.mxu0 0
    %286 = vmatprep.subr.bf16.mxu0 0
    %287 = vmatpush1.bf16.xpose.msra.mxu0 0
    %288 = vmatprep.subr.bf16.mxu0 0
    %289 = vmatpush1.bf16.xpose.msra.mxu0 0
    %290 = vmatprep.subr.bf16.mxu0 0
    %291 = vmatpush1.bf16.xpose.msra.mxu0 0
    %292 = vmatprep.subr.bf16.mxu0 0
    %293 = vmatpush1.bf16.xpose.msra.mxu0 0
    %294 = vmatprep.subr.bf16.mxu0 0
    %295 = vmatpush1.bf16.xpose.msra.mxu0 0
    %296 = vmatprep.subr.bf16.mxu0 0
    %297 = vmatpush1.bf16.xpose.msra.mxu0 0
    %298 = vmatprep.subr.bf16.mxu0 0
    %299 = vmatpush1.bf16.xpose.msra.mxu0 0
    %300 = vmatprep.subr.bf16.mxu0 0
    %301 = vmatpush1.bf16.xpose.msra.mxu0 0
    %302 = vmatprep.subr.bf16.mxu0 0
    %303 = vmatpush1.bf16.xpose.msra.mxu0 0
    %304 = vmatprep.subr.bf16.mxu0 0
    %305 = vmatpush1.bf16.xpose.msra.mxu0 0
    %306 = vmatprep.subr.bf16.mxu0 0
    %307 = vmatpush1.bf16.xpose.msra.mxu0 0
    %308 = vmatprep.mubr.bf16.mxu0 0
    %309 = vmatmul.mubr.bf16.gmra.mrb[0].mxu0 %v271
    %v310 = vpop.f32.mrb[0].mxu0
    %v311 = vadd.f32 0.0, %v310
    %v312 = vpop.f32.mrb[0].mxu0
    %v313 = vpop.f32.mrb[0].mxu0
    %v314 = vpop.f32.mrb[0].mxu0
    %315 = vdwg.mxu0
    %v316 = vmul.f32 %v262, 0.17677669
    %v317 = vmul.f32 %v311, 0.17677669
    %v318 = vlaneseq
    %v319 = vshrl.u32 %v318, 7
    %v320 = vsub.s32 0, %v319
    %v321 = vrot.slane %v82, %v320
    %v322 = vlaneseq
    %v323 = vshrl.u32 %v322, 7
    %v324 = vsub.s32 0, %v323
    %v325 = vrot.slane %v89, %v324
    %v328 = vadd.f32 %v316, %v321
    %v329 = vadd.f32 %v317, %v325
    %vm330 = vcmask 64512
    %v331 = vsel %vm330, %v328, -inf
    %332 = vmax.xlane.f32.xlu0 %v331
    %v333 = vpop.xlane.xlu0 %332
    %v334 = vsel %vm330, %v329, -inf
    %335 = vmax.xlane.f32.xlu0 %v334
    %v336 = vpop.xlane.xlu0 %335
    %v337 = vsub.f32 %v328, %v333
    %v338 = vsub.f32 %v329, %v336
    %v339 = vmul.f32 %v337, 1.442695
    %v340 = vpow.pop %v339
    %v341 = vmul.f32 %v338, 1.442695
    %v342 = vpow.pop %v341
    %v343 = vsel %vm330, %v340, 0.0
    %344 = vadd.xlane.f32.xlu0 %v343
    %v345 = vpop.xlane.xlu0 %344
    %v346 = vsel %vm330, %v342, 0.0
    %347 = vadd.xlane.f32.xlu0 %v346
    %v348 = vpop.xlane.xlu0 %347
    %v349 = vrcp.pop %v345
    %v350 = vrcp.pop %v348
    %v351 = vmul.f32 %v340, %v349
    %v352 = vmul.f32 %v342, %v350
    %v353 = vpack.c.bf16 %v351, %v351
    %v354 = vpack.c.bf16 %v352, %v352
    %v356 = vsel %vm330, %v353, 0
    %vm358 = vcmask 1043456
    %v360 = vsel %vm358, %v214, 0
    %362 = vmatprep.subr.bf16.mxu0 0
    %363 = vmatpush1.bf16.msra.mxu0 %v360
    %364 = vmatprep.subr.bf16.mxu0 0
    %365 = vmatpush1.bf16.msra.mxu0 0
    %366 = vmatprep.subr.bf16.mxu0 0
    %367 = vmatpush1.bf16.msra.mxu0 0
    %368 = vmatprep.subr.bf16.mxu0 0
    %369 = vmatpush1.bf16.msra.mxu0 0
    %370 = vmatprep.subr.bf16.mxu0 0
    %371 = vmatpush1.bf16.msra.mxu0 0
    %372 = vmatprep.subr.bf16.mxu0 0
    %373 = vmatpush1.bf16.msra.mxu0 0
    %374 = vmatprep.subr.bf16.mxu0 0
    %375 = vmatpush1.bf16.msra.mxu0 0
    %376 = vmatprep.subr.bf16.mxu0 0
    %377 = vmatpush1.bf16.msra.mxu0 0
    %378 = vmatprep.subr.bf16.mxu0 0
    %379 = vmatpush1.bf16.msra.mxu0 0
    %380 = vmatprep.subr.bf16.mxu0 0
    %381 = vmatpush1.bf16.msra.mxu0 0
    %382 = vmatprep.subr.bf16.mxu0 0
    %383 = vmatpush1.bf16.msra.mxu0 0
    %384 = vmatprep.subr.bf16.mxu0 0
    %385 = vmatpush1.bf16.msra.mxu0 0
    %386 = vmatprep.subr.bf16.mxu0 0
    %387 = vmatpush1.bf16.msra.mxu0 0
    %388 = vmatprep.subr.bf16.mxu0 0
    %389 = vmatpush1.bf16.msra.mxu0 0
    %390 = vmatprep.subr.bf16.mxu0 0
    %391 = vmatpush1.bf16.msra.mxu0 0
    %392 = vmatprep.subr.bf16.mxu0 0
    %393 = vmatpush1.bf16.msra.mxu0 0
    %394 = vmatprep.mubr.bf16.mxu0 0
    %395 = vmatmul.mubr.bf16.gmra.mrb[0].mxu0 %v356
    %v396 = vpop.f32.mrb[0].mxu0
    %v397 = vadd.f32 0.0, %v396
    %v398 = vpop.f32.mrb[0].mxu0
    %v399 = vpop.f32.mrb[0].mxu0
    %v400 = vpop.f32.mrb[0].mxu0
    %401 = vdwg.mxu0
    %v403 = vsel %vm330, %v354, 0
    %v406 = vsel %vm358, %v216, 0
    %408 = vmatprep.subr.bf16.mxu0 0
    %409 = vmatpush1.bf16.msra.mxu0 %v406
    %410 = vmatprep.subr.bf16.mxu0 0
    %411 = vmatpush1.bf16.msra.mxu0 0
    %412 = vmatprep.subr.bf16.mxu0 0
    %413 = vmatpush1.bf16.msra.mxu0 0
    %414 = vmatprep.subr.bf16.mxu0 0
    %415 = vmatpush1.bf16.msra.mxu0 0
    %416 = vmatprep.subr.bf16.mxu0 0
    %417 = vmatpush1.bf16.msra.mxu0 0
    %418 = vmatprep.subr.bf16.mxu0 0
    %419 = vmatpush1.bf16.msra.mxu0 0
    %420 = vmatprep.subr.bf16.mxu0 0
    %421 = vmatpush1.bf16.msra.mxu0 0
    %422 = vmatprep.subr.bf16.mxu0 0
    %423 = vmatpush1.bf16.msra.mxu0 0
    %424 = vmatprep.subr.bf16.mxu0 0
    %425 = vmatpush1.bf16.msra.mxu0 0
    %426 = vmatprep.subr.bf16.mxu0 0
    %427 = vmatpush1.bf16.msra.mxu0 0
    %428 = vmatprep.subr.bf16.mxu0 0
    %429 = vmatpush1.bf16.msra.mxu0 0
    %430 = vmatprep.subr.bf16.mxu0 0
    %431 = vmatpush1.bf16.msra.mxu0 0
    %432 = vmatprep.subr.bf16.mxu0 0
    %433 = vmatpush1.bf16.msra.mxu0 0
    %434 = vmatprep.subr.bf16.mxu0 0
    %435 = vmatpush1.bf16.msra.mxu0 0
    %436 = vmatprep.subr.bf16.mxu0 0
    %437 = vmatpush1.bf16.msra.mxu0 0
    %438 = vmatprep.subr.bf16.mxu0 0
    %439 = vmatpush1.bf16.msra.mxu0 0
    %440 = vmatprep.mubr.bf16.mxu0 0
    %441 = vmatmul.mubr.bf16.gmra.mrb[0].mxu0 %v403
    %v442 = vpop.f32.mrb[0].mxu0
    %v443 = vadd.f32 0.0, %v442
    %v444 = vpop.f32.mrb[0].mxu0
    %v445 = vpop.f32.mrb[0].mxu0
    %v446 = vpop.f32.mrb[0].mxu0
    %447 = vdwg.mxu0
    %v448 = vpack.c.bf16 %v397, %v397
    %v449 = vpack.c.bf16 %v443, %v443
    %v452 = vunpack.c.l.b16 %v448
    %v453 = vunpack.c.l.b16 %v449
    %v454 = vpack.c.b16 %v453, %v452
    %v459 = vunpack.c.l.b16 %v204
    %v460 = vunpack.c.l.b16 %v205
    %v461 = vunpack.c.l.b16 %v206
    %v462 = vunpack.c.l.b16 %v207
    %v463 = vpack.c.b16 %v460, %v459
    %v464 = vpack.c.b16 %v462, %v461
    %v468 = vsel %vm220, %v454, 0
    %470 = vmatprep.subr.bf16.mxu0 0
    %471 = vmatpush1.bf16.msra.mxu0 %v463
    %472 = vmatprep.subr.bf16.mxu0 0
    %473 = vmatpush1.bf16.msra.mxu0 %v464
    %474 = vmatprep.subr.bf16.mxu0 0
    %475 = vmatpush1.bf16.msra.mxu0 0
    %476 = vmatprep.subr.bf16.mxu0 0
    %477 = vmatpush1.bf16.msra.mxu0 0
    %478 = vmatprep.subr.bf16.mxu0 0
    %479 = vmatpush1.bf16.msra.mxu0 0
    %480 = vmatprep.subr.bf16.mxu0 0
    %481 = vmatpush1.bf16.msra.mxu0 0
    %482 = vmatprep.subr.bf16.mxu0 0
    %483 = vmatpush1.bf16.msra.mxu0 0
    %484 = vmatprep.subr.bf16.mxu0 0
    %485 = vmatpush1.bf16.msra.mxu0 0
    %486 = vmatprep.subr.bf16.mxu0 0
    %487 = vmatpush1.bf16.msra.mxu0 0
    %488 = vmatprep.subr.bf16.mxu0 0
    %489 = vmatpush1.bf16.msra.mxu0 0
    %490 = vmatprep.subr.bf16.mxu0 0
    %491 = vmatpush1.bf16.msra.mxu0 0
    %492 = vmatprep.subr.bf16.mxu0 0
    %493 = vmatpush1.bf16.msra.mxu0 0
    %494 = vmatprep.subr.bf16.mxu0 0
    %495 = vmatpush1.bf16.msra.mxu0 0
    %496 = vmatprep.subr.bf16.mxu0 0
    %497 = vmatpush1.bf16.msra.mxu0 0
    %498 = vmatprep.subr.bf16.mxu0 0
    %499 = vmatpush1.bf16.msra.mxu0 0
    %500 = vmatprep.subr.bf16.mxu0 0
    %501 = vmatpush1.bf16.msra.mxu0 0
    %502 = vmatprep.mubr.bf16.mxu0 0
    %503 = vmatmul.mubr.bf16.gmra.mrb[0].mxu0 %v468
    %v504 = vpop.f32.mrb[0].mxu0
    %v505 = vadd.f32 0.0, %v504
    %v506 = vpop.f32.mrb[0].mxu0
    %v507 = vpop.f32.mrb[0].mxu0
    %v508 = vadd.f32 0.0, %v507
    %v509 = vpop.f32.mrb[0].mxu0
    %510 = vdwg.mxu0
    %v512 = vlaneseq
    %v513 = vshrl.u32 %v512, 7
    %v514 = vsub.s32 0, %v513
    %v515 = vrot.slane %v212, %v514
    %v517 = vadd.f32 %v515, %v505
    %v518 = vadd.f32 %v515, %v508
    %519 = vrot.lane.b32.xlu0 %v213, 96
    %v520 = vpop.permute.xlu0 %519
    %521 = vrot.lane.b32.xlu0 %v213, 32
    %v522 = vpop.permute.xlu0 %521
    %v524 = vsel %vm220, %v520, 0
    %v527 = vsel %vm220, %v522, 0
    %529 = vmatprep.subr.bf16.mxu0 0
    %530 = vmatpush1.bf16.xpose.msra.mxu0 %v527
    %531 = vmatprep.subr.bf16.mxu0 0
    %532 = vmatpush1.bf16.xpose.msra.mxu0 0
    %533 = vmatprep.subr.bf16.mxu0 0
    %534 = vmatpush1.bf16.xpose.msra.mxu0 0
    %535 = vmatprep.subr.bf16.mxu0 0
    %536 = vmatpush1.bf16.xpose.msra.mxu0 0
    %537 = vmatprep.subr.bf16.mxu0 0
    %538 = vmatpush1.bf16.xpose.msra.mxu0 0
    %539 = vmatprep.subr.bf16.mxu0 0
    %540 = vmatpush1.bf16.xpose.msra.mxu0 0
    %541 = vmatprep.subr.bf16.mxu0 0
    %542 = vmatpush1.bf16.xpose.msra.mxu0 0
    %543 = vmatprep.subr.bf16.mxu0 0
    %544 = vmatpush1.bf16.xpose.msra.mxu0 0
    %545 = vmatprep.subr.bf16.mxu0 0
    %546 = vmatpush1.bf16.xpose.msra.mxu0 0
    %547 = vmatprep.subr.bf16.mxu0 0
    %548 = vmatpush1.bf16.xpose.msra.mxu0 0
    %549 = vmatprep.subr.bf16.mxu0 0
    %550 = vmatpush1.bf16.xpose.msra.mxu0 0
    %551 = vmatprep.subr.bf16.mxu0 0
    %552 = vmatpush1.bf16.xpose.msra.mxu0 0
    %553 = vmatprep.subr.bf16.mxu0 0
    %554 = vmatpush1.bf16.xpose.msra.mxu0 0
    %555 = vmatprep.subr.bf16.mxu0 0
    %556 = vmatpush1.bf16.xpose.msra.mxu0 0
    %557 = vmatprep.subr.bf16.mxu0 0
    %558 = vmatpush1.bf16.xpose.msra.mxu0 0
    %559 = vmatprep.subr.bf16.mxu0 0
    %560 = vmatpush1.bf16.xpose.msra.mxu0 0
    %561 = vmatprep.mubr.bf16.mxu0 0
    %562 = vmatmul.mubr.bf16.gmra.mrb[0].mxu0 %v524
    %v563 = vpop.f32.mrb[0].mxu0
    %v564 = vadd.f32 0.0, %v563
    %v565 = vpop.f32.mrb[0].mxu0
    %v566 = vpop.f32.mrb[0].mxu0
    %v567 = vpop.f32.mrb[0].mxu0
    %568 = vdwg.mxu0
    %569 = vrot.lane.b32.xlu0 %v215, 96
    %v570 = vpop.permute.xlu0 %569
    %571 = vrot.lane.b32.xlu0 %v215, 32
    %v572 = vpop.permute.xlu0 %571
    %v574 = vsel %vm220, %v570, 0
    %v577 = vsel %vm220, %v572, 0
    %579 = vmatprep.subr.bf16.mxu0 0
    %580 = vmatpush1.bf16.xpose.msra.mxu0 %v577
    %581 = vmatprep.subr.bf16.mxu0 0
    %582 = vmatpush1.bf16.xpose.msra.mxu0 0
    %583 = vmatprep.subr.bf16.mxu0 0
    %584 = vmatpush1.bf16.xpose.msra.mxu0 0
    %585 = vmatprep.subr.bf16.mxu0 0
    %586 = vmatpush1.bf16.xpose.msra.mxu0 0
    %587 = vmatprep.subr.bf16.mxu0 0
    %588 = vmatpush1.bf16.xpose.msra.mxu0 0
    %589 = vmatprep.subr.bf16.mxu0 0
    %590 = vmatpush1.bf16.xpose.msra.mxu0 0
    %591 = vmatprep.subr.bf16.mxu0 0
    %592 = vmatpush1.bf16.xpose.msra.mxu0 0
    %593 = vmatprep.subr.bf16.mxu0 0
    %594 = vmatpush1.bf16.xpose.msra.mxu0 0
    %595 = vmatprep.subr.bf16.mxu0 0
    %596 = vmatpush1.bf16.xpose.msra.mxu0 0
    %597 = vmatprep.subr.bf16.mxu0 0
    %598 = vmatpush1.bf16.xpose.msra.mxu0 0
    %599 = vmatprep.subr.bf16.mxu0 0
    %600 = vmatpush1.bf16.xpose.msra.mxu0 0
    %601 = vmatprep.subr.bf16.mxu0 0
    %602 = vmatpush1.bf16.xpose.msra.mxu0 0
    %603 = vmatprep.subr.bf16.mxu0 0
    %604 = vmatpush1.bf16.xpose.msra.mxu0 0
    %605 = vmatprep.subr.bf16.mxu0 0
    %606 = vmatpush1.bf16.xpose.msra.mxu0 0
    %607 = vmatprep.subr.bf16.mxu0 0
    %608 = vmatpush1.bf16.xpose.msra.mxu0 0
    %609 = vmatprep.subr.bf16.mxu0 0
    %610 = vmatpush1.bf16.xpose.msra.mxu0 0
    %611 = vmatprep.mubr.bf16.mxu0 0
    %612 = vmatmul.mubr.bf16.gmra.mrb[0].mxu0 %v574
    %v613 = vpop.f32.mrb[0].mxu0
    %v614 = vadd.f32 0.0, %v613
    %v615 = vpop.f32.mrb[0].mxu0
    %v616 = vpop.f32.mrb[0].mxu0
    %v617 = vpop.f32.mrb[0].mxu0
    %618 = vdwg.mxu0
    %v619 = vmul.f32 %v564, 0.17677669
    %v620 = vmul.f32 %v614, 0.17677669
    %v621 = vadd.f32 %v619, %v321
    %v622 = vadd.f32 %v620, %v325
    %v623 = vsel %vm330, %v621, -inf
    %624 = vmax.xlane.f32.xlu0 %v623
    %v625 = vpop.xlane.xlu0 %624
    %v626 = vsel %vm330, %v622, -inf
    %627 = vmax.xlane.f32.xlu0 %v626
    %v628 = vpop.xlane.xlu0 %627
    %v629 = vsub.f32 %v621, %v625
    %v630 = vsub.f32 %v622, %v628
    %v631 = vmul.f32 %v629, 1.442695
    %v632 = vpow.pop %v631
    %v633 = vmul.f32 %v630, 1.442695
    %v634 = vpow.pop %v633
    %v635 = vsel %vm330, %v632, 0.0
    %636 = vadd.xlane.f32.xlu0 %v635
    %v637 = vpop.xlane.xlu0 %636
    %v638 = vsel %vm330, %v634, 0.0
    %639 = vadd.xlane.f32.xlu0 %v638
    %v640 = vpop.xlane.xlu0 %639
    %v641 = vrcp.pop %v637
    %v642 = vrcp.pop %v640
    %v643 = vmul.f32 %v632, %v641
    %v644 = vmul.f32 %v634, %v642
    %v645 = vpack.c.bf16 %v643, %v643
    %v646 = vpack.c.bf16 %v644, %v644
    %648 = vrot.lane.b32.xlu0 %v214, 96
    %v649 = vpop.permute.xlu0 %648
    %v651 = vsel %vm330, %v645, 0
    %v654 = vsel %vm358, %v649, 0
    %656 = vmatprep.subr.bf16.mxu0 0
    %657 = vmatpush1.bf16.msra.mxu0 %v654
    %658 = vmatprep.subr.bf16.mxu0 0
    %659 = vmatpush1.bf16.msra.mxu0 0
    %660 = vmatprep.subr.bf16.mxu0 0
    %661 = vmatpush1.bf16.msra.mxu0 0
    %662 = vmatprep.subr.bf16.mxu0 0
    %663 = vmatpush1.bf16.msra.mxu0 0
    %664 = vmatprep.subr.bf16.mxu0 0
    %665 = vmatpush1.bf16.msra.mxu0 0
    %666 = vmatprep.subr.bf16.mxu0 0
    %667 = vmatpush1.bf16.msra.mxu0 0
    %668 = vmatprep.subr.bf16.mxu0 0
    %669 = vmatpush1.bf16.msra.mxu0 0
    %670 = vmatprep.subr.bf16.mxu0 0
    %671 = vmatpush1.bf16.msra.mxu0 0
    %672 = vmatprep.subr.bf16.mxu0 0
    %673 = vmatpush1.bf16.msra.mxu0 0
    %674 = vmatprep.subr.bf16.mxu0 0
    %675 = vmatpush1.bf16.msra.mxu0 0
    %676 = vmatprep.subr.bf16.mxu0 0
    %677 = vmatpush1.bf16.msra.mxu0 0
    %678 = vmatprep.subr.bf16.mxu0 0
    %679 = vmatpush1.bf16.msra.mxu0 0
    %680 = vmatprep.subr.bf16.mxu0 0
    %681 = vmatpush1.bf16.msra.mxu0 0
    %682 = vmatprep.subr.bf16.mxu0 0
    %683 = vmatpush1.bf16.msra.mxu0 0
    %684 = vmatprep.subr.bf16.mxu0 0
    %685 = vmatpush1.bf16.msra.mxu0 0
    %686 = vmatprep.subr.bf16.mxu0 0
    %687 = vmatpush1.bf16.msra.mxu0 0
    %688 = vmatprep.mubr.bf16.mxu0 0
    %689 = vmatmul.mubr.bf16.gmra.mrb[0].mxu0 %v651
    %v690 = vpop.f32.mrb[0].mxu0
    %v691 = vadd.f32 0.0, %v690
    %v692 = vpop.f32.mrb[0].mxu0
    %v693 = vpop.f32.mrb[0].mxu0
    %v694 = vpop.f32.mrb[0].mxu0
    %695 = vdwg.mxu0
    %697 = vrot.lane.b32.xlu0 %v216, 96
    %v698 = vpop.permute.xlu0 %697
    %v700 = vsel %vm330, %v646, 0
    %v703 = vsel %vm358, %v698, 0
    %705 = vmatprep.subr.bf16.mxu0 0
    %706 = vmatpush1.bf16.msra.mxu0 %v703
    %707 = vmatprep.subr.bf16.mxu0 0
    %708 = vmatpush1.bf16.msra.mxu0 0
    %709 = vmatprep.subr.bf16.mxu0 0
    %710 = vmatpush1.bf16.msra.mxu0 0
    %711 = vmatprep.subr.bf16.mxu0 0
    %712 = vmatpush1.bf16.msra.mxu0 0
    %713 = vmatprep.subr.bf16.mxu0 0
    %714 = vmatpush1.bf16.msra.mxu0 0
    %715 = vmatprep.subr.bf16.mxu0 0
    %716 = vmatpush1.bf16.msra.mxu0 0
    %717 = vmatprep.subr.bf16.mxu0 0
    %718 = vmatpush1.bf16.msra.mxu0 0
    %719 = vmatprep.subr.bf16.mxu0 0
    %720 = vmatpush1.bf16.msra.mxu0 0
    %721 = vmatprep.subr.bf16.mxu0 0
    %722 = vmatpush1.bf16.msra.mxu0 0
    %723 = vmatprep.subr.bf16.mxu0 0
    %724 = vmatpush1.bf16.msra.mxu0 0
    %725 = vmatprep.subr.bf16.mxu0 0
    %726 = vmatpush1.bf16.msra.mxu0 0
    %727 = vmatprep.subr.bf16.mxu0 0
    %728 = vmatpush1.bf16.msra.mxu0 0
    %729 = vmatprep.subr.bf16.mxu0 0
    %730 = vmatpush1.bf16.msra.mxu0 0
    %731 = vmatprep.subr.bf16.mxu0 0
    %732 = vmatpush1.bf16.msra.mxu0 0
    %733 = vmatprep.subr.bf16.mxu0 0
    %734 = vmatpush1.bf16.msra.mxu0 0
    %735 = vmatprep.subr.bf16.mxu0 0
    %736 = vmatpush1.bf16.msra.mxu0 0
    %737 = vmatprep.mubr.bf16.mxu0 0
    %738 = vmatmul.mubr.bf16.gmra.mrb[0].mxu0 %v700
    %v739 = vpop.f32.mrb[0].mxu0
    %v740 = vadd.f32 0.0, %v739
    %v741 = vpop.f32.mrb[0].mxu0
    %v742 = vpop.f32.mrb[0].mxu0
    %v743 = vpop.f32.mrb[0].mxu0
    %744 = vdwg.mxu0
    %v745 = vpack.c.bf16 %v691, %v691
    %v746 = vpack.c.bf16 %v740, %v740
    %v749 = vunpack.c.l.b16 %v745
    %v750 = vunpack.c.l.b16 %v746
    %v751 = vpack.c.b16 %v750, %v749
    %v756 = vunpack.c.l.b16 %v208
    %v757 = vunpack.c.l.b16 %v209
    %v758 = vunpack.c.l.b16 %v210
    %v759 = vunpack.c.l.b16 %v211
    %v760 = vpack.c.b16 %v757, %v756
    %v761 = vpack.c.b16 %v759, %v758
    %v765 = vsel %vm220, %v751, 0
    %767 = vmatprep.subr.bf16.mxu0 0
    %768 = vmatpush1.bf16.msra.mxu0 %v760
    %769 = vmatprep.subr.bf16.mxu0 0
    %770 = vmatpush1.bf16.msra.mxu0 %v761
    %771 = vmatprep.subr.bf16.mxu0 0
    %772 = vmatpush1.bf16.msra.mxu0 0
    %773 = vmatprep.subr.bf16.mxu0 0
    %774 = vmatpush1.bf16.msra.mxu0 0
    %775 = vmatprep.subr.bf16.mxu0 0
    %776 = vmatpush1.bf16.msra.mxu0 0
    %777 = vmatprep.subr.bf16.mxu0 0
    %778 = vmatpush1.bf16.msra.mxu0 0
    %779 = vmatprep.subr.bf16.mxu0 0
    %780 = vmatpush1.bf16.msra.mxu0 0
    %781 = vmatprep.subr.bf16.mxu0 0
    %782 = vmatpush1.bf16.msra.mxu0 0
    %783 = vmatprep.subr.bf16.mxu0 0
    %784 = vmatpush1.bf16.msra.mxu0 0
    %785 = vmatprep.subr.bf16.mxu0 0
    %786 = vmatpush1.bf16.msra.mxu0 0
    %787 = vmatprep.subr.bf16.mxu0 0
    %788 = vmatpush1.bf16.msra.mxu0 0
    %789 = vmatprep.subr.bf16.mxu0 0
    %790 = vmatpush1.bf16.msra.mxu0 0
    %791 = vmatprep.subr.bf16.mxu0 0
    %792 = vmatpush1.bf16.msra.mxu0 0
    %793 = vmatprep.subr.bf16.mxu0 0
    %794 = vmatpush1.bf16.msra.mxu0 0
    %795 = vmatprep.subr.bf16.mxu0 0
    %796 = vmatpush1.bf16.msra.mxu0 0
    %797 = vmatprep.subr.bf16.mxu0 0
    %798 = vmatpush1.bf16.msra.mxu0 0
    %799 = vmatprep.mubr.bf16.mxu0 0
    %800 = vmatmul.mubr.bf16.gmra.mrb[0].mxu0 %v765
    %v801 = vpop.f32.mrb[0].mxu0
    %v802 = vadd.f32 0.0, %v801
    %v803 = vpop.f32.mrb[0].mxu0
    %v804 = vpop.f32.mrb[0].mxu0
    %v805 = vadd.f32 0.0, %v804
    %v806 = vpop.f32.mrb[0].mxu0
    %807 = vdwg.mxu0
    %v808 = vadd.f32 %v517, %v802
    %v809 = vadd.f32 %v518, %v805
    %v810 = vadd.f32 %v64, %v808
    %v811 = vadd.f32 %v65, %v809
    %v812 = vld [vmem:[%s7] sm:$0x1]
    %v813 = vld [vmem:[%s8] sm:$0x1]
    %v814 = vsel %vm157, %v810, 0.0
    %815 = vadd.xlane.f32.xlu0 %v814
    %v816 = vpop.xlane.xlu0 %815
    %v817 = vsel %vm157, %v811, 0.0
    %818 = vadd.xlane.f32.xlu0 %v817
    %v819 = vpop.xlane.xlu0 %818
    %v820 = vrcp.pop 64.0
    %v821 = vmul.f32 %v816, %v820
    %v822 = vmul.f32 %v819, %v820
    %v823 = vsub.f32 %v810, %v821
    %v824 = vsub.f32 %v811, %v822
    %v825 = vmul.f32 %v823, %v823
    %v826 = vmul.f32 %v824, %v824
    %v827 = vsel %vm157, %v825, 0.0
    %828 = vadd.xlane.f32.xlu0 %v827
    %v829 = vpop.xlane.xlu0 %828
    %v830 = vsel %vm157, %v826, 0.0
    %831 = vadd.xlane.f32.xlu0 %v830
    %v832 = vpop.xlane.xlu0 %831
    %v833 = vmul.f32 %v829, %v820
    %v834 = vmul.f32 %v832, %v820
    %v835 = vadd.f32 %v833, 1e-05
    %v836 = vadd.f32 %v834, 1e-05
    %v837 = vrsqrt.pop %v835
    %v838 = vrsqrt.pop %v836
    %v839 = vmul.f32 %v823, %v837
    %v840 = vmul.f32 %v824, %v838
    %v842 = vlaneseq
    %v843 = vshrl.u32 %v842, 7
    %v844 = vsub.s32 0, %v843
    %v845 = vrot.slane %v812, %v844
    %v847 = vmul.f32 %v839, %v845
    %v848 = vmul.f32 %v840, %v845
    %v850 = vlaneseq
    %v851 = vshrl.u32 %v850, 7
    %v852 = vsub.s32 0, %v851
    %v853 = vrot.slane %v813, %v852
    %v855 = vadd.f32 %v847, %v853
    %v856 = vadd.f32 %v848, %v853
    %v857 = vpack.c.bf16 %v855, %v855
    %v858 = vpack.c.bf16 %v856, %v856
    %v859 = vld [vmem:[%s9] sm:$0xff]
    %v860 = vld [vmem:[%s9 + $0x8] sm:$0xff]
    %v861 = vld [vmem:[%s9 + $0x10] sm:$0xff]
    %v862 = vld [vmem:[%s9 + $0x18] sm:$0xff]
    %v863 = vld [vmem:[%s9 + $0x20] sm:$0xff]
    %v864 = vld [vmem:[%s9 + $0x28] sm:$0xff]
    %v865 = vld [vmem:[%s9 + $0x30] sm:$0xff]
    %v866 = vld [vmem:[%s9 + $0x38] sm:$0xff]
    %v867 = vld [vmem:[%s10] sm:$0x3]
    %v869 = vlaneseq
    %v870 = vshrl.u32 %v869, 7
    %v871 = vsub.s32 0, %v870
    %v872 = vrot.slane %v867, %v871
    %v873 = vlaneseq
    %v874 = vshrl.u32 %v873, 7
    %v875 = vsub.s32 1, %v874
    %v876 = vrot.slane %v867, %v875
    %v881 = vunpack.c.l.b16 %v857
    %v882 = vunpack.c.l.b16 %v858
    %v883 = vpack.c.b16 %v882, %v881
    %v892 = vunpack.c.l.b16 %v859
    %v893 = vunpack.c.h.b16 %v859
    %v894 = vunpack.c.l.b16 %v860
    %v895 = vunpack.c.h.b16 %v860
    %v896 = vunpack.c.l.b16 %v861
    %v897 = vunpack.c.h.b16 %v861
    %v898 = vunpack.c.l.b16 %v862
    %v899 = vunpack.c.h.b16 %v862
    %v900 = vunpack.c.l.b16 %v863
    %v901 = vunpack.c.h.b16 %v863
    %v902 = vunpack.c.l.b16 %v864
    %v903 = vunpack.c.h.b16 %v864
    %v904 = vunpack.c.l.b16 %v865
    %v905 = vunpack.c.h.b16 %v865
    %v906 = vunpack.c.l.b16 %v866
    %v907 = vunpack.c.h.b16 %v866
    %v908 = vpack.c.b16 %v894, %v892
    %v909 = vpack.c.b16 %v895, %v893
    %v910 = vpack.c.b16 %v898, %v896
    %v911 = vpack.c.b16 %v899, %v897
    %v912 = vpack.c.b16 %v902, %v900
    %v913 = vpack.c.b16 %v903, %v901
    %v914 = vpack.c.b16 %v906, %v904
    %v915 = vpack.c.b16 %v907, %v905
    %v925 = vsel %vm157, %v883, 0
    %927 = vmatprep.subr.bf16.mxu0 %v909
    %928 = vmatpush1.bf16.msra.mxu0 %v908
    %929 = vmatprep.subr.bf16.mxu0 %v911
    %930 = vmatpush1.bf16.msra.mxu0 %v910
    %931 = vmatprep.subr.bf16.mxu0 %v913
    %932 = vmatpush1.bf16.msra.mxu0 %v912
    %933 = vmatprep.subr.bf16.mxu0 %v915
    %934 = vmatpush1.bf16.msra.mxu0 %v914
    %935 = vmatprep.subr.bf16.mxu0 0
    %936 = vmatpush1.bf16.msra.mxu0 0
    %937 = vmatprep.subr.bf16.mxu0 0
    %938 = vmatpush1.bf16.msra.mxu0 0
    %939 = vmatprep.subr.bf16.mxu0 0
    %940 = vmatpush1.bf16.msra.mxu0 0
    %941 = vmatprep.subr.bf16.mxu0 0
    %942 = vmatpush1.bf16.msra.mxu0 0
    %943 = vmatprep.subr.bf16.mxu0 0
    %944 = vmatpush1.bf16.msra.mxu0 0
    %945 = vmatprep.subr.bf16.mxu0 0
    %946 = vmatpush1.bf16.msra.mxu0 0
    %947 = vmatprep.subr.bf16.mxu0 0
    %948 = vmatpush1.bf16.msra.mxu0 0
    %949 = vmatprep.subr.bf16.mxu0 0
    %950 = vmatpush1.bf16.msra.mxu0 0
    %951 = vmatprep.subr.bf16.mxu0 0
    %952 = vmatpush1.bf16.msra.mxu0 0
    %953 = vmatprep.subr.bf16.mxu0 0
    %954 = vmatpush1.bf16.msra.mxu0 0
    %955 = vmatprep.subr.bf16.mxu0 0
    %956 = vmatpush1.bf16.msra.mxu0 0
    %957 = vmatprep.subr.bf16.mxu0 0
    %958 = vmatpush1.bf16.msra.mxu0 0
    %959 = vmatprep.mubr.bf16.mxu0 0
    %960 = vmatmul.mubr.bf16.gmra.mrb[0].mxu0 %v925
    %v961 = vpop.f32.mrb[0].mxu0
    %v962 = vadd.f32 %v872, %v961
    %v963 = vpop.f32.mrb[0].mxu0
    %v964 = vadd.f32 %v876, %v963
    %v965 = vpop.f32.mrb[0].mxu0
    %v966 = vadd.f32 %v872, %v965
    %v967 = vpop.f32.mrb[0].mxu0
    %v968 = vadd.f32 %v876, %v967
    %969 = vdwg.mxu0
    %v970 = vmax.f32 %v962, 0.0
    %v971 = vmax.f32 %v964, 0.0
    %v972 = vmax.f32 %v966, 0.0
    %v973 = vmax.f32 %v968, 0.0
    %v974 = vpack.c.bf16 %v970, %v970
    %v975 = vpack.c.bf16 %v971, %v971
    %v976 = vpack.c.bf16 %v972, %v972
    %v977 = vpack.c.bf16 %v973, %v973
    %v978 = vld [vmem:[%s11] sm:$0xf]
    %v979 = vld [vmem:[%s11 + $0x4] sm:$0xf]
    %v980 = vld [vmem:[%s11 + $0x8] sm:$0xf]
    %v981 = vld [vmem:[%s11 + $0xc] sm:$0xf]
    %v982 = vld [vmem:[%s11 + $0x10] sm:$0xf]
    %v983 = vld [vmem:[%s11 + $0x14] sm:$0xf]
    %v984 = vld [vmem:[%s11 + $0x18] sm:$0xf]
    %v985 = vld [vmem:[%s11 + $0x1c] sm:$0xf]
    %v986 = vld [vmem:[%s11 + $0x20] sm:$0xf]
    %v987 = vld [vmem:[%s11 + $0x24] sm:$0xf]
    %v988 = vld [vmem:[%s11 + $0x28] sm:$0xf]
    %v989 = vld [vmem:[%s11 + $0x2c] sm:$0xf]
    %v990 = vld [vmem:[%s11 + $0x30] sm:$0xf]
    %v991 = vld [vmem:[%s11 + $0x34] sm:$0xf]
    %v992 = vld [vmem:[%s11 + $0x38] sm:$0xf]
    %v993 = vld [vmem:[%s11 + $0x3c] sm:$0xf]
    %v994 = vld [vmem:[%s11 + $0x40] sm:$0xf]
    %v995 = vld [vmem:[%s11 + $0x44] sm:$0xf]
    %v996 = vld [vmem:[%s11 + $0x48] sm:$0xf]
    %v997 = vld [vmem:[%s11 + $0x4c] sm:$0xf]
    %v998 = vld [vmem:[%s11 + $0x50] sm:$0xf]
    %v999 = vld [vmem:[%s11 + $0x54] sm:$0xf]
    %v1000 = vld [vmem:[%s11 + $0x58] sm:$0xf]
    %v1001 = vld [vmem:[%s11 + $0x5c] sm:$0xf]
    %v1002 = vld [vmem:[%s11 + $0x60] sm:$0xf]
    %v1003 = vld [vmem:[%s11 + $0x64] sm:$0xf]
    %v1004 = vld [vmem:[%s11 + $0x68] sm:$0xf]
    %v1005 = vld [vmem:[%s11 + $0x6c] sm:$0xf]
    %v1006 = vld [vmem:[%s11 + $0x70] sm:$0xf]
    %v1007 = vld [vmem:[%s11 + $0x74] sm:$0xf]
    %v1008 = vld [vmem:[%s11 + $0x78] sm:$0xf]
    %v1009 = vld [vmem:[%s11 + $0x7c] sm:$0xf]
    %v1010 = vld [vmem:[%s12] sm:$0x1]
    %v1012 = vlaneseq
    %v1013 = vshrl.u32 %v1012, 7
    %v1014 = vsub.s32 0, %v1013
    %v1015 = vrot.slane %v1010, %v1014
    %v1021 = vunpack.c.l.b16 %v974
    %v1022 = vunpack.c.l.b16 %v975
    %v1023 = vunpack.c.l.b16 %v976
    %v1024 = vunpack.c.l.b16 %v977
    %v1025 = vpack.c.b16 %v1023, %v1021
    %v1026 = vpack.c.b16 %v1024, %v1022
    %v1061 = vunpack.c.l.b16 %v978
    %v1062 = vunpack.c.l.b16 %v979
    %v1063 = vunpack.c.l.b16 %v980
    %v1064 = vunpack.c.l.b16 %v981
    %v1065 = vunpack.c.l.b16 %v982
    %v1066 = vunpack.c.l.b16 %v983
    %v1067 = vunpack.c.l.b16 %v984
    %v1068 = vunpack.c.l.b16 %v985
    %v1069 = vunpack.c.l.b16 %v986
    %v1070 = vunpack.c.l.b16 %v987
    %v1071 = vunpack.c.l.b16 %v988
    %v1072 = vunpack.c.l.b16 %v989
    %v1073 = vunpack.c.l.b16 %v990
    %v1074 = vunpack.c.l.b16 %v991
    %v1075 = vunpack.c.l.b16 %v992
    %v1076 = vunpack.c.l.b16 %v993
    %v1077 = vunpack.c.l.b16 %v994
    %v1078 = vunpack.c.l.b16 %v995
    %v1079 = vunpack.c.l.b16 %v996
    %v1080 = vunpack.c.l.b16 %v997
    %v1081 = vunpack.c.l.b16 %v998
    %v1082 = vunpack.c.l.b16 %v999
    %v1083 = vunpack.c.l.b16 %v1000
    %v1084 = vunpack.c.l.b16 %v1001
    %v1085 = vunpack.c.l.b16 %v1002
    %v1086 = vunpack.c.l.b16 %v1003
    %v1087 = vunpack.c.l.b16 %v1004
    %v1088 = vunpack.c.l.b16 %v1005
    %v1089 = vunpack.c.l.b16 %v1006
    %v1090 = vunpack.c.l.b16 %v1007
    %v1091 = vunpack.c.l.b16 %v1008
    %v1092 = vunpack.c.l.b16 %v1009
    %v1093 = vpack.c.b16 %v1062, %v1061
    %v1094 = vpack.c.b16 %v1064, %v1063
    %v1095 = vpack.c.b16 %v1066, %v1065
    %v1096 = vpack.c.b16 %v1068, %v1067
    %v1097 = vpack.c.b16 %v1070, %v1069
    %v1098 = vpack.c.b16 %v1072, %v1071
    %v1099 = vpack.c.b16 %v1074, %v1073
    %v1100 = vpack.c.b16 %v1076, %v1075
    %v1101 = vpack.c.b16 %v1078, %v1077
    %v1102 = vpack.c.b16 %v1080, %v1079
    %v1103 = vpack.c.b16 %v1082, %v1081
    %v1104 = vpack.c.b16 %v1084, %v1083
    %v1105 = vpack.c.b16 %v1086, %v1085
    %v1106 = vpack.c.b16 %v1088, %v1087
    %v1107 = vpack.c.b16 %v1090, %v1089
    %v1108 = vpack.c.b16 %v1092, %v1091
    %1125 = vmatprep.subr.bf16.mxu0 0
    %1126 = vmatpush1.bf16.msra.mxu0 %v1093
    %1127 = vmatprep.subr.bf16.mxu0 0
    %1128 = vmatpush1.bf16.msra.mxu0 %v1094
    %1129 = vmatprep.subr.bf16.mxu0 0
    %1130 = vmatpush1.bf16.msra.mxu0 %v1095
    %1131 = vmatprep.subr.bf16.mxu0 0
    %1132 = vmatpush1.bf16.msra.mxu0 %v1096
    %1133 = vmatprep.subr.bf16.mxu0 0
    %1134 = vmatpush1.bf16.msra.mxu0 %v1097
    %1135 = vmatprep.subr.bf16.mxu0 0
    %1136 = vmatpush1.bf16.msra.mxu0 %v1098
    %1137 = vmatprep.subr.bf16.mxu0 0
    %1138 = vmatpush1.bf16.msra.mxu0 %v1099
    %1139 = vmatprep.subr.bf16.mxu0 0
    %1140 = vmatpush1.bf16.msra.mxu0 %v1100
    %1141 = vmatprep.subr.bf16.mxu0 0
    %1142 = vmatpush1.bf16.msra.mxu0 %v1101
    %1143 = vmatprep.subr.bf16.mxu0 0
    %1144 = vmatpush1.bf16.msra.mxu0 %v1102
    %1145 = vmatprep.subr.bf16.mxu0 0
    %1146 = vmatpush1.bf16.msra.mxu0 %v1103
    %1147 = vmatprep.subr.bf16.mxu0 0
    %1148 = vmatpush1.bf16.msra.mxu0 %v1104
    %1149 = vmatprep.subr.bf16.mxu0 0
    %1150 = vmatpush1.bf16.msra.mxu0 %v1105
    %1151 = vmatprep.subr.bf16.mxu0 0
    %1152 = vmatpush1.bf16.msra.mxu0 %v1106
    %1153 = vmatprep.subr.bf16.mxu0 0
    %1154 = vmatpush1.bf16.msra.mxu0 %v1107
    %1155 = vmatprep.subr.bf16.mxu0 0
    %1156 = vmatpush1.bf16.msra.mxu0 %v1108
    %1157 = vmatprep.mubr.bf16.mxu0 %v1026
    %1158 = vmatmul.mubr.bf16.gmra.mrb[0].mxu0 %v1025
    %v1159 = vpop.f32.mrb[0].mxu0
    %v1160 = vadd.f32 %v1015, %v1159
    %v1161 = vpop.f32.mrb[0].mxu0
    %v1162 = vpop.f32.mrb[0].mxu0
    %v1163 = vadd.f32 %v1015, %v1162
    %v1164 = vpop.f32.mrb[0].mxu0
    %1165 = vdwg.mxu0
    %v1166 = vadd.f32 %v855, %v1160
    %v1167 = vadd.f32 %v856, %v1163
    %v1168 = vld [vmem:[%s13] sm:$0x1]
    %v1169 = vld [vmem:[%s14] sm:$0x1]
    %v1170 = vsel %vm157, %v1166, 0.0
    %1171 = vadd.xlane.f32.xlu0 %v1170
    %v1172 = vpop.xlane.xlu0 %1171
    %v1173 = vsel %vm157, %v1167, 0.0
    %1174 = vadd.xlane.f32.xlu0 %v1173
    %v1175 = vpop.xlane.xlu0 %1174
    %v1176 = vmul.f32 %v1172, %v820
    %v1177 = vmul.f32 %v1175, %v820
    %v1178 = vsub.f32 %v1166, %v1176
    %v1179 = vsub.f32 %v1167, %v1177
    %v1180 = vmul.f32 %v1178, %v1178
    %v1181 = vmul.f32 %v1179, %v1179
    %v1182 = vsel %vm157, %v1180, 0.0
    %1183 = vadd.xlane.f32.xlu0 %v1182
    %v1184 = vpop.xlane.xlu0 %1183
    %v1185 = vsel %vm157, %v1181, 0.0
    %1186 = vadd.xlane.f32.xlu0 %v1185
    %v1187 = vpop.xlane.xlu0 %1186
    %v1188 = vmul.f32 %v1184, %v820
    %v1189 = vmul.f32 %v1187, %v820
    %v1190 = vadd.f32 %v1188, 1e-05
    %v1191 = vadd.f32 %v1189, 1e-05
    %v1192 = vrsqrt.pop %v1190
    %v1193 = vrsqrt.pop %v1191
    %v1194 = vmul.f32 %v1178, %v1192
    %v1195 = vmul.f32 %v1179, %v1193
    %v1197 = vlaneseq
    %v1198 = vshrl.u32 %v1197, 7
    %v1199 = vsub.s32 0, %v1198
    %v1200 = vrot.slane %v1168, %v1199
    %v1202 = vmul.f32 %v1194, %v1200
    %v1203 = vmul.f32 %v1195, %v1200
    %v1205 = vlaneseq
    %v1206 = vshrl.u32 %v1205, 7
    %v1207 = vsub.s32 0, %v1206
    %v1208 = vrot.slane %v1169, %v1207
    %v1210 = vadd.f32 %v1202, %v1208
    %v1211 = vadd.f32 %v1203, %v1208
    %v1212 = vpack.c.bf16 %v1210, %v1210
    %v1213 = vpack.c.bf16 %v1211, %v1211
    %s1214 = scalar_lea.vmem %s3, 64
    %v1215 = vld [vmem:[%s1214] sm:$0xff]
    %v1216 = vld [vmem:[%s1214 + $0x8] sm:$0xff]
    %v1217 = vld [vmem:[%s1214 + $0x10] sm:$0xff]
    %v1218 = vld [vmem:[%s1214 + $0x18] sm:$0xff]
    %v1219 = vld [vmem:[%s1214 + $0x20] sm:$0xff]
    %v1220 = vld [vmem:[%s1214 + $0x28] sm:$0xff]
    %v1221 = vld [vmem:[%s1214 + $0x30] sm:$0xff]
    %v1222 = vld [vmem:[%s1214 + $0x38] sm:$0xff]
    %s1223 = scalar_lea.vmem %s4, 2
    %v1224 = vld [vmem:[%s1223] sm:$0x3]
    %v1226 = vlaneseq
    %v1227 = vshrl.u32 %v1226, 7
    %v1228 = vsub.s32 0, %v1227
    %v1229 = vrot.slane %v1224, %v1228
    %v1230 = vlaneseq
    %v1231 = vshrl.u32 %v1230, 7
    %v1232 = vsub.s32 1, %v1231
    %v1233 = vrot.slane %v1224, %v1232
    %v1238 = vunpack.c.l.b16 %v1212
    %v1239 = vunpack.c.l.b16 %v1213
    %v1240 = vpack.c.b16 %v1239, %v1238
    %v1249 = vunpack.c.l.b16 %v1215
    %v1250 = vunpack.c.h.b16 %v1215
    %v1251 = vunpack.c.l.b16 %v1216
    %v1252 = vunpack.c.h.b16 %v1216
    %v1253 = vunpack.c.l.b16 %v1217
    %v1254 = vunpack.c.h.b16 %v1217
    %v1255 = vunpack.c.l.b16 %v1218
    %v1256 = vunpack.c.h.b16 %v1218
    %v1257 = vunpack.c.l.b16 %v1219
    %v1258 = vunpack.c.h.b16 %v1219
    %v1259 = vunpack.c.l.b16 %v1220
    %v1260 = vunpack.c.h.b16 %v1220
    %v1261 = vunpack.c.l.b16 %v1221
    %v1262 = vunpack.c.h.b16 %v1221
    %v1263 = vunpack.c.l.b16 %v1222
    %v1264 = vunpack.c.h.b16 %v1222
    %v1265 = vpack.c.b16 %v1251, %v1249
    %v1266 = vpack.c.b16 %v1252, %v1250
    %v1267 = vpack.c.b16 %v1255, %v1253
    %v1268 = vpack.c.b16 %v1256, %v1254
    %v1269 = vpack.c.b16 %v1259, %v1257
    %v1270 = vpack.c.b16 %v1260, %v1258
    %v1271 = vpack.c.b16 %v1263, %v1261
    %v1272 = vpack.c.b16 %v1264, %v1262
    %v1282 = vsel %vm157, %v1240, 0
    %1284 = vmatprep.subr.bf16.mxu0 %v1266
    %1285 = vmatpush1.bf16.msra.mxu0 %v1265
    %1286 = vmatprep.subr.bf16.mxu0 %v1268
    %1287 = vmatpush1.bf16.msra.mxu0 %v1267
    %1288 = vmatprep.subr.bf16.mxu0 %v1270
    %1289 = vmatpush1.bf16.msra.mxu0 %v1269
    %1290 = vmatprep.subr.bf16.mxu0 %v1272
    %1291 = vmatpush1.bf16.msra.mxu0 %v1271
    %1292 = vmatprep.subr.bf16.mxu0 0
    %1293 = vmatpush1.bf16.msra.mxu0 0
    %1294 = vmatprep.subr.bf16.mxu0 0
    %1295 = vmatpush1.bf16.msra.mxu0 0
    %1296 = vmatprep.subr.bf16.mxu0 0
    %1297 = vmatpush1.bf16.msra.mxu0 0
    %1298 = vmatprep.subr.bf16.mxu0 0
    %1299 = vmatpush1.bf16.msra.mxu0 0
    %1300 = vmatprep.subr.bf16.mxu0 0
    %1301 = vmatpush1.bf16.msra.mxu0 0
    %1302 = vmatprep.subr.bf16.mxu0 0
    %1303 = vmatpush1.bf16.msra.mxu0 0
    %1304 = vmatprep.subr.bf16.mxu0 0
    %1305 = vmatpush1.bf16.msra.mxu0 0
    %1306 = vmatprep.subr.bf16.mxu0 0
    %1307 = vmatpush1.bf16.msra.mxu0 0
    %1308 = vmatprep.subr.bf16.mxu0 0
    %1309 = vmatpush1.bf16.msra.mxu0 0
    %1310 = vmatprep.subr.bf16.mxu0 0
    %1311 = vmatpush1.bf16.msra.mxu0 0
    %1312 = vmatprep.subr.bf16.mxu0 0
    %1313 = vmatpush1.bf16.msra.mxu0 0
    %1314 = vmatprep.subr.bf16.mxu0 0
    %1315 = vmatpush1.bf16.msra.mxu0 0
    %1316 = vmatprep.mubr.bf16.mxu0 0
    %1317 = vmatmul.mubr.bf16.gmra.mrb[0].mxu0 %v1282
    %v1318 = vpop.f32.mrb[0].mxu0
    %v1319 = vadd.f32 %v1229, %v1318
    %v1320 = vpop.f32.mrb[0].mxu0
    %v1321 = vadd.f32 %v1233, %v1320
    %v1322 = vpop.f32.mrb[0].mxu0
    %v1323 = vadd.f32 %v1229, %v1322
    %v1324 = vpop.f32.mrb[0].mxu0
    %v1325 = vadd.f32 %v1233, %v1324
    %1326 = vdwg.mxu0
    %s1327 = scalar_lea.vmem %s5, 32
    %v1328 = vld [vmem:[%s1327] sm:$0xf]
    %v1329 = vld [vmem:[%s1327 + $0x4] sm:$0xf]
    %v1330 = vld [vmem:[%s1327 + $0x8] sm:$0xf]
    %v1331 = vld [vmem:[%s1327 + $0xc] sm:$0xf]
    %v1332 = vld [vmem:[%s1327 + $0x10] sm:$0xf]
    %v1333 = vld [vmem:[%s1327 + $0x14] sm:$0xf]
    %v1334 = vld [vmem:[%s1327 + $0x18] sm:$0xf]
    %v1335 = vld [vmem:[%s1327 + $0x1c] sm:$0xf]
    %s1336 = scalar_lea.vmem %s6, 1
    %v1337 = vld [vmem:[%s1336] sm:$0x1]
    %v1338 = vpack.c.bf16 %v1319, %v1319
    %v1339 = vpack.c.bf16 %v1321, %v1321
    %v1340 = vpack.c.bf16 %v1323, %v1323
    %v1341 = vpack.c.bf16 %v1325, %v1325
    %1343 = vrot.lane.b32.xlu0 %v1338, 64
    %v1344 = vpop.permute.xlu0 %1343
    %v1346 = vsel %vm220, %v1338, 0
    %v1349 = vsel %vm220, %v1344, 0
    %1351 = vmatprep.subr.bf16.mxu0 0
    %1352 = vmatpush1.bf16.xpose.msra.mxu0 %v1349
    %1353 = vmatprep.subr.bf16.mxu0 0
    %1354 = vmatpush1.bf16.xpose.msra.mxu0 0
    %1355 = vmatprep.subr.bf16.mxu0 0
    %1356 = vmatpush1.bf16.xpose.msra.mxu0 0
    %1357 = vmatprep.subr.bf16.mxu0 0
    %1358 = vmatpush1.bf16.xpose.msra.mxu0 0
    %1359 = vmatprep.subr.bf16.mxu0 0
    %1360 = vmatpush1.bf16.xpose.msra.mxu0 0
    %1361 = vmatprep.subr.bf16.mxu0 0
    %1362 = vmatpush1.bf16.xpose.msra.mxu0 0
    %1363 = vmatprep.subr.bf16.mxu0 0
    %1364 = vmatpush1.bf16.xpose.msra.mxu0 0
    %1365 = vmatprep.subr.bf16.mxu0 0
    %1366 = vmatpush1.bf16.xpose.msra.mxu0 0
    %1367 = vmatprep.subr.bf16.mxu0 0
    %1368 = vmatpush1.bf16.xpose.msra.mxu0 0
    %1369 = vmatprep.subr.bf16.mxu0 0
    %1370 = vmatpush1.bf16.xpose.msra.mxu0 0
    %1371 = vmatprep.subr.bf16.mxu0 0
    %1372 = vmatpush1.bf16.xpose.msra.mxu0 0
    %1373 = vmatprep.subr.bf16.mxu0 0
    %1374 = vmatpush1.bf16.xpose.msra.mxu0 0
    %1375 = vmatprep.subr.bf16.mxu0 0
    %1376 = vmatpush1.bf16.xpose.msra.mxu0 0
    %1377 = vmatprep.subr.bf16.mxu0 0
    %1378 = vmatpush1.bf16.xpose.msra.mxu0 0
    %1379 = vmatprep.subr.bf16.mxu0 0
    %1380 = vmatpush1.bf16.xpose.msra.mxu0 0
    %1381 = vmatprep.subr.bf16.mxu0 0
    %1382 = vmatpush1.bf16.xpose.msra.mxu0 0
    %1383 = vmatprep.mubr.bf16.mxu0 0
    %1384 = vmatmul.mubr.bf16.gmra.mrb[0].mxu0 %v1346
    %v1385 = vpop.f32.mrb[0].mxu0
    %v1386 = vadd.f32 0.0, %v1385
    %v1387 = vpop.f32.mrb[0].mxu0
    %v1388 = vpop.f32.mrb[0].mxu0
    %v1389 = vpop.f32.mrb[0].mxu0
    %1390 = vdwg.mxu0
    %1392 = vrot.lane.b32.xlu0 %v1340, 64
    %v1393 = vpop.permute.xlu0 %1392
    %v1395 = vsel %vm220, %v1340, 0
    %v1398 = vsel %vm220, %v1393, 0
    %1400 = vmatprep.subr.bf16.mxu0 0
    %1401 = vmatpush1.bf16.xpose.msra.mxu0 %v1398
    %1402 = vmatprep.subr.bf16.mxu0 0
    %1403 = vmatpush1.bf16.xpose.msra.mxu0 0
    %1404 = vmatprep.subr.bf16.mxu0 0
    %1405 = vmatpush1.bf16.xpose.msra.mxu0 0
    %1406 = vmatprep.subr.bf16.mxu0 0
    %1407 = vmatpush1.bf16.xpose.msra.mxu0 0
    %1408 = vmatprep.subr.bf16.mxu0 0
    %1409 = vmatpush1.bf16.xpose.msra.mxu0 0
    %1410 = vmatprep.subr.bf16.mxu0 0
    %1411 = vmatpush1.bf16.xpose.msra.mxu0 0
    %1412 = vmatprep.subr.bf16.mxu0 0
    %1413 = vmatpush1.bf16.xpose.msra.mxu0 0
    %1414 = vmatprep.subr.bf16.mxu0 0
    %1415 = vmatpush1.bf16.xpose.msra.mxu0 0
    %1416 = vmatprep.subr.bf16.mxu0 0
    %1417 = vmatpush1.bf16.xpose.msra.mxu0 0
    %1418 = vmatprep.subr.bf16.mxu0 0
    %1419 = vmatpush1.bf16.xpose.msra.mxu0 0
    %1420 = vmatprep.subr.bf16.mxu0 0
    %1421 = vmatpush1.bf16.xpose.msra.mxu0 0
    %1422 = vmatprep.subr.bf16.mxu0 0
    %1423 = vmatpush1.bf16.xpose.msra.mxu0 0
    %1424 = vmatprep.subr.bf16.mxu0 0
    %1425 = vmatpush1.bf16.xpose.msra.mxu0 0
    %1426 = vmatprep.subr.bf16.mxu0 0
    %1427 = vmatpush1.bf16.xpose.msra.mxu0 0
    %1428 = vmatprep.subr.bf16.mxu0 0
    %1429 = vmatpush1.bf16.xpose.msra.mxu0 0
    %1430 = vmatprep.subr.bf16.mxu0 0
    %1431 = vmatpush1.bf16.xpose.msra.mxu0 0
    %1432 = vmatprep.mubr.bf16.mxu0 0
    %1433 = vmatmul.mubr.bf16.gmra.mrb[0].mxu0 %v1395
    %v1434 = vpop.f32.mrb[0].mxu0
    %v1435 = vadd.f32 0.0, %v1434
    %v1436 = vpop.f32.mrb[0].mxu0
    %v1437 = vpop.f32.mrb[0].mxu0
    %v1438 = vpop.f32.mrb[0].mxu0
    %1439 = vdwg.mxu0
    %v1440 = vmul.f32 %v1386, 0.17677669
    %v1441 = vmul.f32 %v1435, 0.17677669
    %v1442 = vadd.f32 %v1440, %v321
    %v1443 = vadd.f32 %v1441, %v325
    %v1444 = vsel %vm330, %v1442, -inf
    %1445 = vmax.xlane.f32.xlu0 %v1444
    %v1446 = vpop.xlane.xlu0 %1445
    %v1447 = vsel %vm330, %v1443, -inf
    %1448 = vmax.xlane.f32.xlu0 %v1447
    %v1449 = vpop.xlane.xlu0 %1448
    %v1450 = vsub.f32 %v1442, %v1446
    %v1451 = vsub.f32 %v1443, %v1449
    %v1452 = vmul.f32 %v1450, 1.442695
    %v1453 = vpow.pop %v1452
    %v1454 = vmul.f32 %v1451, 1.442695
    %v1455 = vpow.pop %v1454
    %v1456 = vsel %vm330, %v1453, 0.0
    %1457 = vadd.xlane.f32.xlu0 %v1456
    %v1458 = vpop.xlane.xlu0 %1457
    %v1459 = vsel %vm330, %v1455, 0.0
    %1460 = vadd.xlane.f32.xlu0 %v1459
    %v1461 = vpop.xlane.xlu0 %1460
    %v1462 = vrcp.pop %v1458
    %v1463 = vrcp.pop %v1461
    %v1464 = vmul.f32 %v1453, %v1462
    %v1465 = vmul.f32 %v1455, %v1463
    %v1466 = vpack.c.bf16 %v1464, %v1464
    %v1467 = vpack.c.bf16 %v1465, %v1465
    %v1469 = vsel %vm330, %v1466, 0
    %v1472 = vsel %vm358, %v1339, 0
    %1474 = vmatprep.subr.bf16.mxu0 0
    %1475 = vmatpush1.bf16.msra.mxu0 %v1472
    %1476 = vmatprep.subr.bf16.mxu0 0
    %1477 = vmatpush1.bf16.msra.mxu0 0
    %1478 = vmatprep.subr.bf16.mxu0 0
    %1479 = vmatpush1.bf16.msra.mxu0 0
    %1480 = vmatprep.subr.bf16.mxu0 0
    %1481 = vmatpush1.bf16.msra.mxu0 0
    %1482 = vmatprep.subr.bf16.mxu0 0
    %1483 = vmatpush1.bf16.msra.mxu0 0
    %1484 = vmatprep.subr.bf16.mxu0 0
    %1485 = vmatpush1.bf16.msra.mxu0 0
    %1486 = vmatprep.subr.bf16.mxu0 0
    %1487 = vmatpush1.bf16.msra.mxu0 0
    %1488 = vmatprep.subr.bf16.mxu0 0
    %1489 = vmatpush1.bf16.msra.mxu0 0
    %1490 = vmatprep.subr.bf16.mxu0 0
    %1491 = vmatpush1.bf16.msra.mxu0 0
    %1492 = vmatprep.subr.bf16.mxu0 0
    %1493 = vmatpush1.bf16.msra.mxu0 0
    %1494 = vmatprep.subr.bf16.mxu0 0
    %1495 = vmatpush1.bf16.msra.mxu0 0
    %1496 = vmatprep.subr.bf16.mxu0 0
    %1497 = vmatpush1.bf16.msra.mxu0 0
    %1498 = vmatprep.subr.bf16.mxu0 0
    %1499 = vmatpush1.bf16.msra.mxu0 0
    %1500 = vmatprep.subr.bf16.mxu0 0
    %1501 = vmatpush1.bf16.msra.mxu0 0
    %1502 = vmatprep.subr.bf16.mxu0 0
    %1503 = vmatpush1.bf16.msra.mxu0 0
    %1504 = vmatprep.subr.bf16.mxu0 0
    %1505 = vmatpush1.bf16.msra.mxu0 0
    %1506 = vmatprep.mubr.bf16.mxu0 0
    %1507 = vmatmul.mubr.bf16.gmra.mrb[0].mxu0 %v1469
    %v1508 = vpop.f32.mrb[0].mxu0
    %v1509 = vadd.f32 0.0, %v1508
    %v1510 = vpop.f32.mrb[0].mxu0
    %v1511 = vpop.f32.mrb[0].mxu0
    %v1512 = vpop.f32.mrb[0].mxu0
    %1513 = vdwg.mxu0
    %v1515 = vsel %vm330, %v1467, 0
    %v1518 = vsel %vm358, %v1341, 0
    %1520 = vmatprep.subr.bf16.mxu0 0
    %1521 = vmatpush1.bf16.msra.mxu0 %v1518
    %1522 = vmatprep.subr.bf16.mxu0 0
    %1523 = vmatpush1.bf16.msra.mxu0 0
    %1524 = vmatprep.subr.bf16.mxu0 0
    %1525 = vmatpush1.bf16.msra.mxu0 0
    %1526 = vmatprep.subr.bf16.mxu0 0
    %1527 = vmatpush1.bf16.msra.mxu0 0
    %1528 = vmatprep.subr.bf16.mxu0 0
    %1529 = vmatpush1.bf16.msra.mxu0 0
    %1530 = vmatprep.subr.bf16.mxu0 0
    %1531 = vmatpush1.bf16.msra.mxu0 0
    %1532 = vmatprep.subr.bf16.mxu0 0
    %1533 = vmatpush1.bf16.msra.mxu0 0
    %1534 = vmatprep.subr.bf16.mxu0 0
    %1535 = vmatpush1.bf16.msra.mxu0 0
    %1536 = vmatprep.subr.bf16.mxu0 0
    %1537 = vmatpush1.bf16.msra.mxu0 0
    %1538 = vmatprep.subr.bf16.mxu0 0
    %1539 = vmatpush1.bf16.msra.mxu0 0
    %1540 = vmatprep.subr.bf16.mxu0 0
    %1541 = vmatpush1.bf16.msra.mxu0 0
    %1542 = vmatprep.subr.bf16.mxu0 0
    %1543 = vmatpush1.bf16.msra.mxu0 0
    %1544 = vmatprep.subr.bf16.mxu0 0
    %1545 = vmatpush1.bf16.msra.mxu0 0
    %1546 = vmatprep.subr.bf16.mxu0 0
    %1547 = vmatpush1.bf16.msra.mxu0 0
    %1548 = vmatprep.subr.bf16.mxu0 0
    %1549 = vmatpush1.bf16.msra.mxu0 0
    %1550 = vmatprep.subr.bf16.mxu0 0
    %1551 = vmatpush1.bf16.msra.mxu0 0
    %1552 = vmatprep.mubr.bf16.mxu0 0
    %1553 = vmatmul.mubr.bf16.gmra.mrb[0].mxu0 %v1515
    %v1554 = vpop.f32.mrb[0].mxu0
    %v1555 = vadd.f32 0.0, %v1554
    %v1556 = vpop.f32.mrb[0].mxu0
    %v1557 = vpop.f32.mrb[0].mxu0
    %v1558 = vpop.f32.mrb[0].mxu0
    %1559 = vdwg.mxu0
    %v1560 = vpack.c.bf16 %v1509, %v1509
    %v1561 = vpack.c.bf16 %v1555, %v1555
    %v1564 = vunpack.c.l.b16 %v1560
    %v1565 = vunpack.c.l.b16 %v1561
    %v1566 = vpack.c.b16 %v1565, %v1564
    %v1571 = vunpack.c.l.b16 %v1328
    %v1572 = vunpack.c.l.b16 %v1329
    %v1573 = vunpack.c.l.b16 %v1330
    %v1574 = vunpack.c.l.b16 %v1331
    %v1575 = vpack.c.b16 %v1572, %v1571
    %v1576 = vpack.c.b16 %v1574, %v1573
    %v1580 = vsel %vm220, %v1566, 0
    %1582 = vmatprep.subr.bf16.mxu0 0
    %1583 = vmatpush1.bf16.msra.mxu0 %v1575
    %1584 = vmatprep.subr.bf16.mxu0 0
    %1585 = vmatpush1.bf16.msra.mxu0 %v1576
    %1586 = vmatprep.subr.bf16.mxu0 0
    %1587 = vmatpush1.bf16.msra.mxu0 0
    %1588 = vmatprep.subr.bf16.mxu0 0
    %1589 = vmatpush1.bf16.msra.mxu0 0
    %1590 = vmatprep.subr.bf16.mxu0 0
    %1591 = vmatpush1.bf16.msra.mxu0 0
    %1592 = vmatprep.subr.bf16.mxu0 0
    %1593 = vmatpush1.bf16.msra.mxu0 0
    %1594 = vmatprep.subr.bf16.mxu0 0
    %1595 = vmatpush1.bf16.msra.mxu0 0
    %1596 = vmatprep.subr.bf16.mxu0 0
    %1597 = vmatpush1.bf16.msra.mxu0 0
    %1598 = vmatprep.subr.bf16.mxu0 0
    %1599 = vmatpush1.bf16.msra.mxu0 0
    %1600 = vmatprep.subr.bf16.mxu0 0
    %1601 = vmatpush1.bf16.msra.mxu0 0
    %1602 = vmatprep.subr.bf16.mxu0 0
    %1603 = vmatpush1.bf16.msra.mxu0 0
    %1604 = vmatprep.subr.bf16.mxu0 0
    %1605 = vmatpush1.bf16.msra.mxu0 0
    %1606 = vmatprep.subr.bf16.mxu0 0
    %1607 = vmatpush1.bf16.msra.mxu0 0
    %1608 = vmatprep.subr.bf16.mxu0 0
    %1609 = vmatpush1.bf16.msra.mxu0 0
    %1610 = vmatprep.subr.bf16.mxu0 0
    %1611 = vmatpush1.bf16.msra.mxu0 0
    %1612 = vmatprep.subr.bf16.mxu0 0
    %1613 = vmatpush1.bf16.msra.mxu0 0
    %1614 = vmatprep.mubr.bf16.mxu0 0
    %1615 = vmatmul.mubr.bf16.gmra.mrb[0].mxu0 %v1580
    %v1616 = vpop.f32.mrb[0].mxu0
    %v1617 = vadd.f32 0.0, %v1616
    %v1618 = vpop.f32.mrb[0].mxu0
    %v1619 = vpop.f32.mrb[0].mxu0
    %v1620 = vadd.f32 0.0, %v1619
    %v1621 = vpop.f32.mrb[0].mxu0
    %1622 = vdwg.mxu0
    %v1624 = vlaneseq
    %v1625 = vshrl.u32 %v1624, 7
    %v1626 = vsub.s32 0, %v1625
    %v1627 = vrot.slane %v1337, %v1626
    %v1629 = vadd.f32 %v1627, %v1617
    %v1630 = vadd.f32 %v1627, %v1620
    %1631 = vrot.lane.b32.xlu0 %v1338, 96
    %v1632 = vpop.permute.xlu0 %1631
    %1633 = vrot.lane.b32.xlu0 %v1338, 32
    %v1634 = vpop.permute.xlu0 %1633
    %v1636 = vsel %vm220, %v1632, 0
    %v1639 = vsel %vm220, %v1634, 0
    %1641 = vmatprep.subr.bf16.mxu0 0
    %1642 = vmatpush1.bf16.xpose.msra.mxu0 %v1639
    %1643 = vmatprep.subr.bf16.mxu0 0
    %1644 = vmatpush1.bf16.xpose.msra.mxu0 0
    %1645 = vmatprep.subr.bf16.mxu0 0
    %1646 = vmatpush1.bf16.xpose.msra.mxu0 0
    %1647 = vmatprep.subr.bf16.mxu0 0
    %1648 = vmatpush1.bf16.xpose.msra.mxu0 0
    %1649 = vmatprep.subr.bf16.mxu0 0
    %1650 = vmatpush1.bf16.xpose.msra.mxu0 0
    %1651 = vmatprep.subr.bf16.mxu0 0
    %1652 = vmatpush1.bf16.xpose.msra.mxu0 0
    %1653 = vmatprep.subr.bf16.mxu0 0
    %1654 = vmatpush1.bf16.xpose.msra.mxu0 0
    %1655 = vmatprep.subr.bf16.mxu0 0
    %1656 = vmatpush1.bf16.xpose.msra.mxu0 0
    %1657 = vmatprep.subr.bf16.mxu0 0
    %1658 = vmatpush1.bf16.xpose.msra.mxu0 0
    %1659 = vmatprep.subr.bf16.mxu0 0
    %1660 = vmatpush1.bf16.xpose.msra.mxu0 0
    %1661 = vmatprep.subr.bf16.mxu0 0
    %1662 = vmatpush1.bf16.xpose.msra.mxu0 0
    %1663 = vmatprep.subr.bf16.mxu0 0
    %1664 = vmatpush1.bf16.xpose.msra.mxu0 0
    %1665 = vmatprep.subr.bf16.mxu0 0
    %1666 = vmatpush1.bf16.xpose.msra.mxu0 0
    %1667 = vmatprep.subr.bf16.mxu0 0
    %1668 = vmatpush1.bf16.xpose.msra.mxu0 0
    %1669 = vmatprep.subr.bf16.mxu0 0
    %1670 = vmatpush1.bf16.xpose.msra.mxu0 0
    %1671 = vmatprep.subr.bf16.mxu0 0
    %1672 = vmatpush1.bf16.xpose.msra.mxu0 0
    %1673 = vmatprep.mubr.bf16.mxu0 0
    %1674 = vmatmul.mubr.bf16.gmra.mrb[0].mxu0 %v1636
    %v1675 = vpop.f32.mrb[0].mxu0
    %v1676 = vadd.f32 0.0, %v1675
    %v1677 = vpop.f32.mrb[0].mxu0
    %v1678 = vpop.f32.mrb[0].mxu0
    %v1679 = vpop.f32.mrb[0].mxu0
    %1680 = vdwg.mxu0
    %1681 = vrot.lane.b32.xlu0 %v1340, 96
    %v1682 = vpop.permute.xlu0 %1681
    %1683 = vrot.lane.b32.xlu0 %v1340, 32
    %v1684 = vpop.permute.xlu0 %1683
    %v1686 = vsel %vm220, %v1682, 0
    %v1689 = vsel %vm220, %v1684, 0
    %1691 = vmatprep.subr.bf16.mxu0 0
    %1692 = vmatpush1.bf16.xpose.msra.mxu0 %v1689
    %1693 = vmatprep.subr.bf16.mxu0 0
    %1694 = vmatpush1.bf16.xpose.msra.mxu0 0
    %1695 = vmatprep.subr.bf16.mxu0 0
    %1696 = vmatpush1.bf16.xpose.msra.mxu0 0
    %1697 = vmatprep.subr.bf16.mxu0 0
    %1698 = vmatpush1.bf16.xpose.msra.mxu0 0
    %1699 = vmatprep.subr.bf16.mxu0 0
    %1700 = vmatpush1.bf16.xpose.msra.mxu0 0
    %1701 = vmatprep.subr.bf16.mxu0 0
    %1702 = vmatpush1.bf16.xpose.msra.mxu0 0
    %1703 = vmatprep.subr.bf16.mxu0 0
    %1704 = vmatpush1.bf16.xpose.msra.mxu0 0
    %1705 = vmatprep.subr.bf16.mxu0 0
    %1706 = vmatpush1.bf16.xpose.msra.mxu0 0
    %1707 = vmatprep.subr.bf16.mxu0 0
    %1708 = vmatpush1.bf16.xpose.msra.mxu0 0
    %1709 = vmatprep.subr.bf16.mxu0 0
    %1710 = vmatpush1.bf16.xpose.msra.mxu0 0
    %1711 = vmatprep.subr.bf16.mxu0 0
    %1712 = vmatpush1.bf16.xpose.msra.mxu0 0
    %1713 = vmatprep.subr.bf16.mxu0 0
    %1714 = vmatpush1.bf16.xpose.msra.mxu0 0
    %1715 = vmatprep.subr.bf16.mxu0 0
    %1716 = vmatpush1.bf16.xpose.msra.mxu0 0
    %1717 = vmatprep.subr.bf16.mxu0 0
    %1718 = vmatpush1.bf16.xpose.msra.mxu0 0
    %1719 = vmatprep.subr.bf16.mxu0 0
    %1720 = vmatpush1.bf16.xpose.msra.mxu0 0
    %1721 = vmatprep.subr.bf16.mxu0 0
    %1722 = vmatpush1.bf16.xpose.msra.mxu0 0
    %1723 = vmatprep.mubr.bf16.mxu0 0
    %1724 = vmatmul.mubr.bf16.gmra.mrb[0].mxu0 %v1686
    %v1725 = vpop.f32.mrb[0].mxu0
    %v1726 = vadd.f32 0.0, %v1725
    %v1727 = vpop.f32.mrb[0].mxu0
    %v1728 = vpop.f32.mrb[0].mxu0
    %v1729 = vpop.f32.mrb[0].mxu0
    %1730 = vdwg.mxu0
    %v1731 = vmul.f32 %v1676, 0.17677669
    %v1732 = vmul.f32 %v1726, 0.17677669
    %v1733 = vadd.f32 %v1731, %v321
    %v1734 = vadd.f32 %v1732, %v325
    %v1735 = vsel %vm330, %v1733, -inf
    %1736 = vmax.xlane.f32.xlu0 %v1735
    %v1737 = vpop.xlane.xlu0 %1736
    %v1738 = vsel %vm330, %v1734, -inf
    %1739 = vmax.xlane.f32.xlu0 %v1738
    %v1740 = vpop.xlane.xlu0 %1739
    %v1741 = vsub.f32 %v1733, %v1737
    %v1742 = vsub.f32 %v1734, %v1740
    %v1743 = vmul.f32 %v1741, 1.442695
    %v1744 = vpow.pop %v1743
    %v1745 = vmul.f32 %v1742, 1.442695
    %v1746 = vpow.pop %v1745
    %v1747 = vsel %vm330, %v1744, 0.0
    %1748 = vadd.xlane.f32.xlu0 %v1747
    %v1749 = vpop.xlane.xlu0 %1748
    %v1750 = vsel %vm330, %v1746, 0.0
    %1751 = vadd.xlane.f32.xlu0 %v1750
    %v1752 = vpop.xlane.xlu0 %1751
    %v1753 = vrcp.pop %v1749
    %v1754 = vrcp.pop %v1752
    %v1755 = vmul.f32 %v1744, %v1753
    %v1756 = vmul.f32 %v1746, %v1754
    %v1757 = vpack.c.bf16 %v1755, %v1755
    %v1758 = vpack.c.bf16 %v1756, %v1756
    %1760 = vrot.lane.b32.xlu0 %v1339, 96
    %v1761 = vpop.permute.xlu0 %1760
    %v1763 = vsel %vm330, %v1757, 0
    %v1766 = vsel %vm358, %v1761, 0
    %1768 = vmatprep.subr.bf16.mxu0 0
    %1769 = vmatpush1.bf16.msra.mxu0 %v1766
    %1770 = vmatprep.subr.bf16.mxu0 0
    %1771 = vmatpush1.bf16.msra.mxu0 0
    %1772 = vmatprep.subr.bf16.mxu0 0
    %1773 = vmatpush1.bf16.msra.mxu0 0
    %1774 = vmatprep.subr.bf16.mxu0 0
    %1775 = vmatpush1.bf16.msra.mxu0 0
    %1776 = vmatprep.subr.bf16.mxu0 0
    %1777 = vmatpush1.bf16.msra.mxu0 0
    %1778 = vmatprep.subr.bf16.mxu0 0
    %1779 = vmatpush1.bf16.msra.mxu0 0
    %1780 = vmatprep.subr.bf16.mxu0 0
    %1781 = vmatpush1.bf16.msra.mxu0 0
    %1782 = vmatprep.subr.bf16.mxu0 0
    %1783 = vmatpush1.bf16.msra.mxu0 0
    %1784 = vmatprep.subr.bf16.mxu0 0
    %1785 = vmatpush1.bf16.msra.mxu0 0
    %1786 = vmatprep.subr.bf16.mxu0 0
    %1787 = vmatpush1.bf16.msra.mxu0 0
    %1788 = vmatprep.subr.bf16.mxu0 0
    %1789 = vmatpush1.bf16.msra.mxu0 0
    %1790 = vmatprep.subr.bf16.mxu0 0
    %1791 = vmatpush1.bf16.msra.mxu0 0
    %1792 = vmatprep.subr.bf16.mxu0 0
    %1793 = vmatpush1.bf16.msra.mxu0 0
    %1794 = vmatprep.subr.bf16.mxu0 0
    %1795 = vmatpush1.bf16.msra.mxu0 0
    %1796 = vmatprep.subr.bf16.mxu0 0
    %1797 = vmatpush1.bf16.msra.mxu0 0
    %1798 = vmatprep.subr.bf16.mxu0 0
    %1799 = vmatpush1.bf16.msra.mxu0 0
    %1800 = vmatprep.mubr.bf16.mxu0 0
    %1801 = vmatmul.mubr.bf16.gmra.mrb[0].mxu0 %v1763
    %v1802 = vpop.f32.mrb[0].mxu0
    %v1803 = vadd.f32 0.0, %v1802
    %v1804 = vpop.f32.mrb[0].mxu0
    %v1805 = vpop.f32.mrb[0].mxu0
    %v1806 = vpop.f32.mrb[0].mxu0
    %1807 = vdwg.mxu0
    %1809 = vrot.lane.b32.xlu0 %v1341, 96
    %v1810 = vpop.permute.xlu0 %1809
    %v1812 = vsel %vm330, %v1758, 0
    %v1815 = vsel %vm358, %v1810, 0
    %1817 = vmatprep.subr.bf16.mxu0 0
    %1818 = vmatpush1.bf16.msra.mxu0 %v1815
    %1819 = vmatprep.subr.bf16.mxu0 0
    %1820 = vmatpush1.bf16.msra.mxu0 0
    %1821 = vmatprep.subr.bf16.mxu0 0
    %1822 = vmatpush1.bf16.msra.mxu0 0
    %1823 = vmatprep.subr.bf16.mxu0 0
    %1824 = vmatpush1.bf16.msra.mxu0 0
    %1825 = vmatprep.subr.bf16.mxu0 0
    %1826 = vmatpush1.bf16.msra.mxu0 0
    %1827 = vmatprep.subr.bf16.mxu0 0
    %1828 = vmatpush1.bf16.msra.mxu0 0
    %1829 = vmatprep.subr.bf16.mxu0 0
    %1830 = vmatpush1.bf16.msra.mxu0 0
    %1831 = vmatprep.subr.bf16.mxu0 0
    %1832 = vmatpush1.bf16.msra.mxu0 0
    %1833 = vmatprep.subr.bf16.mxu0 0
    %1834 = vmatpush1.bf16.msra.mxu0 0
    %1835 = vmatprep.subr.bf16.mxu0 0
    %1836 = vmatpush1.bf16.msra.mxu0 0
    %1837 = vmatprep.subr.bf16.mxu0 0
    %1838 = vmatpush1.bf16.msra.mxu0 0
    %1839 = vmatprep.subr.bf16.mxu0 0
    %1840 = vmatpush1.bf16.msra.mxu0 0
    %1841 = vmatprep.subr.bf16.mxu0 0
    %1842 = vmatpush1.bf16.msra.mxu0 0
    %1843 = vmatprep.subr.bf16.mxu0 0
    %1844 = vmatpush1.bf16.msra.mxu0 0
    %1845 = vmatprep.subr.bf16.mxu0 0
    %1846 = vmatpush1.bf16.msra.mxu0 0
    %1847 = vmatprep.subr.bf16.mxu0 0
    %1848 = vmatpush1.bf16.msra.mxu0 0
    %1849 = vmatprep.mubr.bf16.mxu0 0
    %1850 = vmatmul.mubr.bf16.gmra.mrb[0].mxu0 %v1812
    %v1851 = vpop.f32.mrb[0].mxu0
    %v1852 = vadd.f32 0.0, %v1851
    %v1853 = vpop.f32.mrb[0].mxu0
    %v1854 = vpop.f32.mrb[0].mxu0
    %v1855 = vpop.f32.mrb[0].mxu0
    %1856 = vdwg.mxu0
    %v1857 = vpack.c.bf16 %v1803, %v1803
    %v1858 = vpack.c.bf16 %v1852, %v1852
    %v1861 = vunpack.c.l.b16 %v1857
    %v1862 = vunpack.c.l.b16 %v1858
    %v1863 = vpack.c.b16 %v1862, %v1861
    %v1868 = vunpack.c.l.b16 %v1332
    %v1869 = vunpack.c.l.b16 %v1333
    %v1870 = vunpack.c.l.b16 %v1334
    %v1871 = vunpack.c.l.b16 %v1335
    %v1872 = vpack.c.b16 %v1869, %v1868
    %v1873 = vpack.c.b16 %v1871, %v1870
    %v1877 = vsel %vm220, %v1863, 0
    %1879 = vmatprep.subr.bf16.mxu0 0
    %1880 = vmatpush1.bf16.msra.mxu0 %v1872
    %1881 = vmatprep.subr.bf16.mxu0 0
    %1882 = vmatpush1.bf16.msra.mxu0 %v1873
    %1883 = vmatprep.subr.bf16.mxu0 0
    %1884 = vmatpush1.bf16.msra.mxu0 0
    %1885 = vmatprep.subr.bf16.mxu0 0
    %1886 = vmatpush1.bf16.msra.mxu0 0
    %1887 = vmatprep.subr.bf16.mxu0 0
    %1888 = vmatpush1.bf16.msra.mxu0 0
    %1889 = vmatprep.subr.bf16.mxu0 0
    %1890 = vmatpush1.bf16.msra.mxu0 0
    %1891 = vmatprep.subr.bf16.mxu0 0
    %1892 = vmatpush1.bf16.msra.mxu0 0
    %1893 = vmatprep.subr.bf16.mxu0 0
    %1894 = vmatpush1.bf16.msra.mxu0 0
    %1895 = vmatprep.subr.bf16.mxu0 0
    %1896 = vmatpush1.bf16.msra.mxu0 0
    %1897 = vmatprep.subr.bf16.mxu0 0
    %1898 = vmatpush1.bf16.msra.mxu0 0
    %1899 = vmatprep.subr.bf16.mxu0 0
    %1900 = vmatpush1.bf16.msra.mxu0 0
    %1901 = vmatprep.subr.bf16.mxu0 0
    %1902 = vmatpush1.bf16.msra.mxu0 0
    %1903 = vmatprep.subr.bf16.mxu0 0
    %1904 = vmatpush1.bf16.msra.mxu0 0
    %1905 = vmatprep.subr.bf16.mxu0 0
    %1906 = vmatpush1.bf16.msra.mxu0 0
    %1907 = vmatprep.subr.bf16.mxu0 0
    %1908 = vmatpush1.bf16.msra.mxu0 0
    %1909 = vmatprep.subr.bf16.mxu0 0
    %1910 = vmatpush1.bf16.msra.mxu0 0
    %1911 = vmatprep.mubr.bf16.mxu0 0
    %1912 = vmatmul.mubr.bf16.gmra.mrb[0].mxu0 %v1877
    %v1913 = vpop.f32.mrb[0].mxu0
    %v1914 = vadd.f32 0.0, %v1913
    %v1915 = vpop.f32.mrb[0].mxu0
    %v1916 = vpop.f32.mrb[0].mxu0
    %v1917 = vadd.f32 0.0, %v1916
    %v1918 = vpop.f32.mrb[0].mxu0
    %1919 = vdwg.mxu0
    %v1920 = vadd.f32 %v1629, %v1914
    %v1921 = vadd.f32 %v1630, %v1917
    %v1922 = vadd.f32 %v1210, %v1920
    %v1923 = vadd.f32 %v1211, %v1921
    %s1924 = scalar_lea.vmem %s7, 1
    %v1925 = vld [vmem:[%s1924] sm:$0x1]
    %s1926 = scalar_lea.vmem %s8, 1
    %v1927 = vld [vmem:[%s1926] sm:$0x1]
    %v1928 = vsel %vm157, %v1922, 0.0
    %1929 = vadd.xlane.f32.xlu0 %v1928
    %v1930 = vpop.xlane.xlu0 %1929
    %v1931 = vsel %vm157, %v1923, 0.0
    %1932 = vadd.xlane.f32.xlu0 %v1931
    %v1933 = vpop.xlane.xlu0 %1932
    %v1934 = vmul.f32 %v1930, %v820
    %v1935 = vmul.f32 %v1933, %v820
    %v1936 = vsub.f32 %v1922, %v1934
    %v1937 = vsub.f32 %v1923, %v1935
    %v1938 = vmul.f32 %v1936, %v1936
    %v1939 = vmul.f32 %v1937, %v1937
    %v1940 = vsel %vm157, %v1938, 0.0
    %1941 = vadd.xlane.f32.xlu0 %v1940
    %v1942 = vpop.xlane.xlu0 %1941
    %v1943 = vsel %vm157, %v1939, 0.0
    %1944 = vadd.xlane.f32.xlu0 %v1943
    %v1945 = vpop.xlane.xlu0 %1944
    %v1946 = vmul.f32 %v1942, %v820
    %v1947 = vmul.f32 %v1945, %v820
    %v1948 = vadd.f32 %v1946, 1e-05
    %v1949 = vadd.f32 %v1947, 1e-05
    %v1950 = vrsqrt.pop %v1948
    %v1951 = vrsqrt.pop %v1949
    %v1952 = vmul.f32 %v1936, %v1950
    %v1953 = vmul.f32 %v1937, %v1951
    %v1955 = vlaneseq
    %v1956 = vshrl.u32 %v1955, 7
    %v1957 = vsub.s32 0, %v1956
    %v1958 = vrot.slane %v1925, %v1957
    %v1960 = vmul.f32 %v1952, %v1958
    %v1961 = vmul.f32 %v1953, %v1958
    %v1963 = vlaneseq
    %v1964 = vshrl.u32 %v1963, 7
    %v1965 = vsub.s32 0, %v1964
    %v1966 = vrot.slane %v1927, %v1965
    %v1968 = vadd.f32 %v1960, %v1966
    %v1969 = vadd.f32 %v1961, %v1966
    %v1970 = vpack.c.bf16 %v1968, %v1968
    %v1971 = vpack.c.bf16 %v1969, %v1969
    %s1972 = scalar_lea.vmem %s9, 64
    %v1973 = vld [vmem:[%s1972] sm:$0xff]
    %v1974 = vld [vmem:[%s1972 + $0x8] sm:$0xff]
    %v1975 = vld [vmem:[%s1972 + $0x10] sm:$0xff]
    %v1976 = vld [vmem:[%s1972 + $0x18] sm:$0xff]
    %v1977 = vld [vmem:[%s1972 + $0x20] sm:$0xff]
    %v1978 = vld [vmem:[%s1972 + $0x28] sm:$0xff]
    %v1979 = vld [vmem:[%s1972 + $0x30] sm:$0xff]
    %v1980 = vld [vmem:[%s1972 + $0x38] sm:$0xff]
    %s1981 = scalar_lea.vmem %s10, 2
    %v1982 = vld [vmem:[%s1981] sm:$0x3]
    %v1984 = vlaneseq
    %v1985 = vshrl.u32 %v1984, 7
    %v1986 = vsub.s32 0, %v1985
    %v1987 = vrot.slane %v1982, %v1986
    %v1988 = vlaneseq
    %v1989 = vshrl.u32 %v1988, 7
    %v1990 = vsub.s32 1, %v1989
    %v1991 = vrot.slane %v1982, %v1990
    %v1996 = vunpack.c.l.b16 %v1970
    %v1997 = vunpack.c.l.b16 %v1971
    %v1998 = vpack.c.b16 %v1997, %v1996
    %v2007 = vunpack.c.l.b16 %v1973
    %v2008 = vunpack.c.h.b16 %v1973
    %v2009 = vunpack.c.l.b16 %v1974
    %v2010 = vunpack.c.h.b16 %v1974
    %v2011 = vunpack.c.l.b16 %v1975
    %v2012 = vunpack.c.h.b16 %v1975
    %v2013 = vunpack.c.l.b16 %v1976
    %v2014 = vunpack.c.h.b16 %v1976
    %v2015 = vunpack.c.l.b16 %v1977
    %v2016 = vunpack.c.h.b16 %v1977
    %v2017 = vunpack.c.l.b16 %v1978
    %v2018 = vunpack.c.h.b16 %v1978
    %v2019 = vunpack.c.l.b16 %v1979
    %v2020 = vunpack.c.h.b16 %v1979
    %v2021 = vunpack.c.l.b16 %v1980
    %v2022 = vunpack.c.h.b16 %v1980
    %v2023 = vpack.c.b16 %v2009, %v2007
    %v2024 = vpack.c.b16 %v2010, %v2008
    %v2025 = vpack.c.b16 %v2013, %v2011
    %v2026 = vpack.c.b16 %v2014, %v2012
    %v2027 = vpack.c.b16 %v2017, %v2015
    %v2028 = vpack.c.b16 %v2018, %v2016
    %v2029 = vpack.c.b16 %v2021, %v2019
    %v2030 = vpack.c.b16 %v2022, %v2020
    %v2040 = vsel %vm157, %v1998, 0
    %2042 = vmatprep.subr.bf16.mxu0 %v2024
    %2043 = vmatpush1.bf16.msra.mxu0 %v2023
    %2044 = vmatprep.subr.bf16.mxu0 %v2026
    %2045 = vmatpush1.bf16.msra.mxu0 %v2025
    %2046 = vmatprep.subr.bf16.mxu0 %v2028
    %2047 = vmatpush1.bf16.msra.mxu0 %v2027
    %2048 = vmatprep.subr.bf16.mxu0 %v2030
    %2049 = vmatpush1.bf16.msra.mxu0 %v2029
    %2050 = vmatprep.subr.bf16.mxu0 0
    %2051 = vmatpush1.bf16.msra.mxu0 0
    %2052 = vmatprep.subr.bf16.mxu0 0
    %2053 = vmatpush1.bf16.msra.mxu0 0
    %2054 = vmatprep.subr.bf16.mxu0 0
    %2055 = vmatpush1.bf16.msra.mxu0 0
    %2056 = vmatprep.subr.bf16.mxu0 0
    %2057 = vmatpush1.bf16.msra.mxu0 0
    %2058 = vmatprep.subr.bf16.mxu0 0
    %2059 = vmatpush1.bf16.msra.mxu0 0
    %2060 = vmatprep.subr.bf16.mxu0 0
    %2061 = vmatpush1.bf16.msra.mxu0 0
    %2062 = vmatprep.subr.bf16.mxu0 0
    %2063 = vmatpush1.bf16.msra.mxu0 0
    %2064 = vmatprep.subr.bf16.mxu0 0
    %2065 = vmatpush1.bf16.msra.mxu0 0
    %2066 = vmatprep.subr.bf16.mxu0 0
    %2067 = vmatpush1.bf16.msra.mxu0 0
    %2068 = vmatprep.subr.bf16.mxu0 0
    %2069 = vmatpush1.bf16.msra.mxu0 0
    %2070 = vmatprep.subr.bf16.mxu0 0
    %2071 = vmatpush1.bf16.msra.mxu0 0
    %2072 = vmatprep.subr.bf16.mxu0 0
    %2073 = vmatpush1.bf16.msra.mxu0 0
    %2074 = vmatprep.mubr.bf16.mxu0 0
    %2075 = vmatmul.mubr.bf16.gmra.mrb[0].mxu0 %v2040
    %v2076 = vpop.f32.mrb[0].mxu0
    %v2077 = vadd.f32 %v1987, %v2076
    %v2078 = vpop.f32.mrb[0].mxu0
    %v2079 = vadd.f32 %v1991, %v2078
    %v2080 = vpop.f32.mrb[0].mxu0
    %v2081 = vadd.f32 %v1987, %v2080
    %v2082 = vpop.f32.mrb[0].mxu0
    %v2083 = vadd.f32 %v1991, %v2082
    %2084 = vdwg.mxu0
    %v2085 = vmax.f32 %v2077, 0.0
    %v2086 = vmax.f32 %v2079, 0.0
    %v2087 = vmax.f32 %v2081, 0.0
    %v2088 = vmax.f32 %v2083, 0.0
    %v2089 = vpack.c.bf16 %v2085, %v2085
    %v2090 = vpack.c.bf16 %v2086, %v2086
    %v2091 = vpack.c.bf16 %v2087, %v2087
    %v2092 = vpack.c.bf16 %v2088, %v2088
    %s2093 = scalar_lea.vmem %s11, 128
    %v2094 = vld [vmem:[%s2093] sm:$0xf]
    %v2095 = vld [vmem:[%s2093 + $0x4] sm:$0xf]
    %v2096 = vld [vmem:[%s2093 + $0x8] sm:$0xf]
    %v2097 = vld [vmem:[%s2093 + $0xc] sm:$0xf]
    %v2098 = vld [vmem:[%s2093 + $0x10] sm:$0xf]
    %v2099 = vld [vmem:[%s2093 + $0x14] sm:$0xf]
    %v2100 = vld [vmem:[%s2093 + $0x18] sm:$0xf]
    %v2101 = vld [vmem:[%s2093 + $0x1c] sm:$0xf]
    %v2102 = vld [vmem:[%s2093 + $0x20] sm:$0xf]
    %v2103 = vld [vmem:[%s2093 + $0x24] sm:$0xf]
    %v2104 = vld [vmem:[%s2093 + $0x28] sm:$0xf]
    %v2105 = vld [vmem:[%s2093 + $0x2c] sm:$0xf]
    %v2106 = vld [vmem:[%s2093 + $0x30] sm:$0xf]
    %v2107 = vld [vmem:[%s2093 + $0x34] sm:$0xf]
    %v2108 = vld [vmem:[%s2093 + $0x38] sm:$0xf]
    %v2109 = vld [vmem:[%s2093 + $0x3c] sm:$0xf]
    %v2110 = vld [vmem:[%s2093 + $0x40] sm:$0xf]
    %v2111 = vld [vmem:[%s2093 + $0x44] sm:$0xf]
    %v2112 = vld [vmem:[%s2093 + $0x48] sm:$0xf]
    %v2113 = vld [vmem:[%s2093 + $0x4c] sm:$0xf]
    %v2114 = vld [vmem:[%s2093 + $0x50] sm:$0xf]
    %v2115 = vld [vmem:[%s2093 + $0x54] sm:$0xf]
    %v2116 = vld [vmem:[%s2093 + $0x58] sm:$0xf]
    %v2117 = vld [vmem:[%s2093 + $0x5c] sm:$0xf]
    %v2118 = vld [vmem:[%s2093 + $0x60] sm:$0xf]
    %v2119 = vld [vmem:[%s2093 + $0x64] sm:$0xf]
    %v2120 = vld [vmem:[%s2093 + $0x68] sm:$0xf]
    %v2121 = vld [vmem:[%s2093 + $0x6c] sm:$0xf]
    %v2122 = vld [vmem:[%s2093 + $0x70] sm:$0xf]
    %v2123 = vld [vmem:[%s2093 + $0x74] sm:$0xf]
    %v2124 = vld [vmem:[%s2093 + $0x78] sm:$0xf]
    %v2125 = vld [vmem:[%s2093 + $0x7c] sm:$0xf]
    %s2126 = scalar_lea.vmem %s12, 1
    %v2127 = vld [vmem:[%s2126] sm:$0x1]
    %v2129 = vlaneseq
    %v2130 = vshrl.u32 %v2129, 7
    %v2131 = vsub.s32 0, %v2130
    %v2132 = vrot.slane %v2127, %v2131
    %v2138 = vunpack.c.l.b16 %v2089
    %v2139 = vunpack.c.l.b16 %v2090
    %v2140 = vunpack.c.l.b16 %v2091
    %v2141 = vunpack.c.l.b16 %v2092
    %v2142 = vpack.c.b16 %v2140, %v2138
    %v2143 = vpack.c.b16 %v2141, %v2139
    %v2178 = vunpack.c.l.b16 %v2094
    %v2179 = vunpack.c.l.b16 %v2095
    %v2180 = vunpack.c.l.b16 %v2096
    %v2181 = vunpack.c.l.b16 %v2097
    %v2182 = vunpack.c.l.b16 %v2098
    %v2183 = vunpack.c.l.b16 %v2099
    %v2184 = vunpack.c.l.b16 %v2100
    %v2185 = vunpack.c.l.b16 %v2101
    %v2186 = vunpack.c.l.b16 %v2102
    %v2187 = vunpack.c.l.b16 %v2103
    %v2188 = vunpack.c.l.b16 %v2104
    %v2189 = vunpack.c.l.b16 %v2105
    %v2190 = vunpack.c.l.b16 %v2106
    %v2191 = vunpack.c.l.b16 %v2107
    %v2192 = vunpack.c.l.b16 %v2108
    %v2193 = vunpack.c.l.b16 %v2109
    %v2194 = vunpack.c.l.b16 %v2110
    %v2195 = vunpack.c.l.b16 %v2111
    %v2196 = vunpack.c.l.b16 %v2112
    %v2197 = vunpack.c.l.b16 %v2113
    %v2198 = vunpack.c.l.b16 %v2114
    %v2199 = vunpack.c.l.b16 %v2115
    %v2200 = vunpack.c.l.b16 %v2116
    %v2201 = vunpack.c.l.b16 %v2117
    %v2202 = vunpack.c.l.b16 %v2118
    %v2203 = vunpack.c.l.b16 %v2119
    %v2204 = vunpack.c.l.b16 %v2120
    %v2205 = vunpack.c.l.b16 %v2121
    %v2206 = vunpack.c.l.b16 %v2122
    %v2207 = vunpack.c.l.b16 %v2123
    %v2208 = vunpack.c.l.b16 %v2124
    %v2209 = vunpack.c.l.b16 %v2125
    %v2210 = vpack.c.b16 %v2179, %v2178
    %v2211 = vpack.c.b16 %v2181, %v2180
    %v2212 = vpack.c.b16 %v2183, %v2182
    %v2213 = vpack.c.b16 %v2185, %v2184
    %v2214 = vpack.c.b16 %v2187, %v2186
    %v2215 = vpack.c.b16 %v2189, %v2188
    %v2216 = vpack.c.b16 %v2191, %v2190
    %v2217 = vpack.c.b16 %v2193, %v2192
    %v2218 = vpack.c.b16 %v2195, %v2194
    %v2219 = vpack.c.b16 %v2197, %v2196
    %v2220 = vpack.c.b16 %v2199, %v2198
    %v2221 = vpack.c.b16 %v2201, %v2200
    %v2222 = vpack.c.b16 %v2203, %v2202
    %v2223 = vpack.c.b16 %v2205, %v2204
    %v2224 = vpack.c.b16 %v2207, %v2206
    %v2225 = vpack.c.b16 %v2209, %v2208
    %2242 = vmatprep.subr.bf16.mxu0 0
    %2243 = vmatpush1.bf16.msra.mxu0 %v2210
    %2244 = vmatprep.subr.bf16.mxu0 0
    %2245 = vmatpush1.bf16.msra.mxu0 %v2211
    %2246 = vmatprep.subr.bf16.mxu0 0
    %2247 = vmatpush1.bf16.msra.mxu0 %v2212
    %2248 = vmatprep.subr.bf16.mxu0 0
    %2249 = vmatpush1.bf16.msra.mxu0 %v2213
    %2250 = vmatprep.subr.bf16.mxu0 0
    %2251 = vmatpush1.bf16.msra.mxu0 %v2214
    %2252 = vmatprep.subr.bf16.mxu0 0
    %2253 = vmatpush1.bf16.msra.mxu0 %v2215
    %2254 = vmatprep.subr.bf16.mxu0 0
    %2255 = vmatpush1.bf16.msra.mxu0 %v2216
    %2256 = vmatprep.subr.bf16.mxu0 0
    %2257 = vmatpush1.bf16.msra.mxu0 %v2217
    %2258 = vmatprep.subr.bf16.mxu0 0
    %2259 = vmatpush1.bf16.msra.mxu0 %v2218
    %2260 = vmatprep.subr.bf16.mxu0 0
    %2261 = vmatpush1.bf16.msra.mxu0 %v2219
    %2262 = vmatprep.subr.bf16.mxu0 0
    %2263 = vmatpush1.bf16.msra.mxu0 %v2220
    %2264 = vmatprep.subr.bf16.mxu0 0
    %2265 = vmatpush1.bf16.msra.mxu0 %v2221
    %2266 = vmatprep.subr.bf16.mxu0 0
    %2267 = vmatpush1.bf16.msra.mxu0 %v2222
    %2268 = vmatprep.subr.bf16.mxu0 0
    %2269 = vmatpush1.bf16.msra.mxu0 %v2223
    %2270 = vmatprep.subr.bf16.mxu0 0
    %2271 = vmatpush1.bf16.msra.mxu0 %v2224
    %2272 = vmatprep.subr.bf16.mxu0 0
    %2273 = vmatpush1.bf16.msra.mxu0 %v2225
    %2274 = vmatprep.mubr.bf16.mxu0 %v2143
    %2275 = vmatmul.mubr.bf16.gmra.mrb[0].mxu0 %v2142
    %v2276 = vpop.f32.mrb[0].mxu0
    %v2277 = vadd.f32 %v2132, %v2276
    %v2278 = vpop.f32.mrb[0].mxu0
    %v2279 = vpop.f32.mrb[0].mxu0
    %v2280 = vadd.f32 %v2132, %v2279
    %v2281 = vpop.f32.mrb[0].mxu0
    %2282 = vdwg.mxu0
    %v2283 = vadd.f32 %v1968, %v2277
    %v2284 = vadd.f32 %v1969, %v2280
    %s2285 = scalar_lea.vmem %s13, 1
    %v2286 = vld [vmem:[%s2285] sm:$0x1]
    %s2287 = scalar_lea.vmem %s14, 1
    %v2288 = vld [vmem:[%s2287] sm:$0x1]
    %v2289 = vsel %vm157, %v2283, 0.0
    %2290 = vadd.xlane.f32.xlu0 %v2289
    %v2291 = vpop.xlane.xlu0 %2290
    %v2292 = vsel %vm157, %v2284, 0.0
    %2293 = vadd.xlane.f32.xlu0 %v2292
    %v2294 = vpop.xlane.xlu0 %2293
    %v2295 = vmul.f32 %v2291, %v820
    %v2296 = vmul.f32 %v2294, %v820
    %v2297 = vsub.f32 %v2283, %v2295
    %v2298 = vsub.f32 %v2284, %v2296
    %v2299 = vmul.f32 %v2297, %v2297
    %v2300 = vmul.f32 %v2298, %v2298
    %v2301 = vsel %vm157, %v2299, 0.0
    %2302 = vadd.xlane.f32.xlu0 %v2301
    %v2303 = vpop.xlane.xlu0 %2302
    %v2304 = vsel %vm157, %v2300, 0.0
    %2305 = vadd.xlane.f32.xlu0 %v2304
    %v2306 = vpop.xlane.xlu0 %2305
    %v2307 = vmul.f32 %v2303, %v820
    %v2308 = vmul.f32 %v2306, %v820
    %v2309 = vadd.f32 %v2307, 1e-05
    %v2310 = vadd.f32 %v2308, 1e-05
    %v2311 = vrsqrt.pop %v2309
    %v2312 = vrsqrt.pop %v2310
    %v2313 = vmul.f32 %v2297, %v2311
    %v2314 = vmul.f32 %v2298, %v2312
    %v2316 = vlaneseq
    %v2317 = vshrl.u32 %v2316, 7
    %v2318 = vsub.s32 0, %v2317
    %v2319 = vrot.slane %v2286, %v2318
    %v2321 = vmul.f32 %v2313, %v2319
    %v2322 = vmul.f32 %v2314, %v2319
    %v2324 = vlaneseq
    %v2325 = vshrl.u32 %v2324, 7
    %v2326 = vsub.s32 0, %v2325
    %v2327 = vrot.slane %v2288, %v2326
    %v2329 = vadd.f32 %v2321, %v2327
    %v2330 = vadd.f32 %v2322, %v2327
    %v2331 = vpack.c.bf16 %v2329, %v2329
    %v2332 = vpack.c.bf16 %v2330, %v2330
    %s2333 = scalar_lea.vmem %s3, 128
    %v2334 = vld [vmem:[%s2333] sm:$0xff]
    %v2335 = vld [vmem:[%s2333 + $0x8] sm:$0xff]
    %v2336 = vld [vmem:[%s2333 + $0x10] sm:$0xff]
    %v2337 = vld [vmem:[%s2333 + $0x18] sm:$0xff]
    %v2338 = vld [vmem:[%s2333 + $0x20] sm:$0xff]
    %v2339 = vld [vmem:[%s2333 + $0x28] sm:$0xff]
    %v2340 = vld [vmem:[%s2333 + $0x30] sm:$0xff]
    %v2341 = vld [vmem:[%s2333 + $0x38] sm:$0xff]
    %s2342 = scalar_lea.vmem %s4, 4
    %v2343 = vld [vmem:[%s2342] sm:$0x3]
    %v2345 = vlaneseq
    %v2346 = vshrl.u32 %v2345, 7
    %v2347 = vsub.s32 0, %v2346
    %v2348 = vrot.slane %v2343, %v2347
    %v2349 = vlaneseq
    %v2350 = vshrl.u32 %v2349, 7
    %v2351 = vsub.s32 1, %v2350
    %v2352 = vrot.slane %v2343, %v2351
    %v2357 = vunpack.c.l.b16 %v2331
    %v2358 = vunpack.c.l.b16 %v2332
    %v2359 = vpack.c.b16 %v2358, %v2357
    %v2368 = vunpack.c.l.b16 %v2334
    %v2369 = vunpack.c.h.b16 %v2334
    %v2370 = vunpack.c.l.b16 %v2335
    %v2371 = vunpack.c.h.b16 %v2335
    %v2372 = vunpack.c.l.b16 %v2336
    %v2373 = vunpack.c.h.b16 %v2336
    %v2374 = vunpack.c.l.b16 %v2337
    %v2375 = vunpack.c.h.b16 %v2337
    %v2376 = vunpack.c.l.b16 %v2338
    %v2377 = vunpack.c.h.b16 %v2338
    %v2378 = vunpack.c.l.b16 %v2339
    %v2379 = vunpack.c.h.b16 %v2339
    %v2380 = vunpack.c.l.b16 %v2340
    %v2381 = vunpack.c.h.b16 %v2340
    %v2382 = vunpack.c.l.b16 %v2341
    %v2383 = vunpack.c.h.b16 %v2341
    %v2384 = vpack.c.b16 %v2370, %v2368
    %v2385 = vpack.c.b16 %v2371, %v2369
    %v2386 = vpack.c.b16 %v2374, %v2372
    %v2387 = vpack.c.b16 %v2375, %v2373
    %v2388 = vpack.c.b16 %v2378, %v2376
    %v2389 = vpack.c.b16 %v2379, %v2377
    %v2390 = vpack.c.b16 %v2382, %v2380
    %v2391 = vpack.c.b16 %v2383, %v2381
    %v2401 = vsel %vm157, %v2359, 0
    %2403 = vmatprep.subr.bf16.mxu0 %v2385
    %2404 = vmatpush1.bf16.msra.mxu0 %v2384
    %2405 = vmatprep.subr.bf16.mxu0 %v2387
    %2406 = vmatpush1.bf16.msra.mxu0 %v2386
    %2407 = vmatprep.subr.bf16.mxu0 %v2389
    %2408 = vmatpush1.bf16.msra.mxu0 %v2388
    %2409 = vmatprep.subr.bf16.mxu0 %v2391
    %2410 = vmatpush1.bf16.msra.mxu0 %v2390
    %2411 = vmatprep.subr.bf16.mxu0 0
    %2412 = vmatpush1.bf16.msra.mxu0 0
    %2413 = vmatprep.subr.bf16.mxu0 0
    %2414 = vmatpush1.bf16.msra.mxu0 0
    %2415 = vmatprep.subr.bf16.mxu0 0
    %2416 = vmatpush1.bf16.msra.mxu0 0
    %2417 = vmatprep.subr.bf16.mxu0 0
    %2418 = vmatpush1.bf16.msra.mxu0 0
    %2419 = vmatprep.subr.bf16.mxu0 0
    %2420 = vmatpush1.bf16.msra.mxu0 0
    %2421 = vmatprep.subr.bf16.mxu0 0
    %2422 = vmatpush1.bf16.msra.mxu0 0
    %2423 = vmatprep.subr.bf16.mxu0 0
    %2424 = vmatpush1.bf16.msra.mxu0 0
    %2425 = vmatprep.subr.bf16.mxu0 0
    %2426 = vmatpush1.bf16.msra.mxu0 0
    %2427 = vmatprep.subr.bf16.mxu0 0
    %2428 = vmatpush1.bf16.msra.mxu0 0
    %2429 = vmatprep.subr.bf16.mxu0 0
    %2430 = vmatpush1.bf16.msra.mxu0 0
    %2431 = vmatprep.subr.bf16.mxu0 0
    %2432 = vmatpush1.bf16.msra.mxu0 0
    %2433 = vmatprep.subr.bf16.mxu0 0
    %2434 = vmatpush1.bf16.msra.mxu0 0
    %2435 = vmatprep.mubr.bf16.mxu0 0
    %2436 = vmatmul.mubr.bf16.gmra.mrb[0].mxu0 %v2401
    %v2437 = vpop.f32.mrb[0].mxu0
    %v2438 = vadd.f32 %v2348, %v2437
    %v2439 = vpop.f32.mrb[0].mxu0
    %v2440 = vadd.f32 %v2352, %v2439
    %v2441 = vpop.f32.mrb[0].mxu0
    %v2442 = vadd.f32 %v2348, %v2441
    %v2443 = vpop.f32.mrb[0].mxu0
    %v2444 = vadd.f32 %v2352, %v2443
    %2445 = vdwg.mxu0
    %s2446 = scalar_lea.vmem %s5, 64
    %v2447 = vld [vmem:[%s2446] sm:$0xf]
    %v2448 = vld [vmem:[%s2446 + $0x4] sm:$0xf]
    %v2449 = vld [vmem:[%s2446 + $0x8] sm:$0xf]
    %v2450 = vld [vmem:[%s2446 + $0xc] sm:$0xf]
    %v2451 = vld [vmem:[%s2446 + $0x10] sm:$0xf]
    %v2452 = vld [vmem:[%s2446 + $0x14] sm:$0xf]
    %v2453 = vld [vmem:[%s2446 + $0x18] sm:$0xf]
    %v2454 = vld [vmem:[%s2446 + $0x1c] sm:$0xf]
    %s2455 = scalar_lea.vmem %s6, 2
    %v2456 = vld [vmem:[%s2455] sm:$0x1]
    %v2457 = vpack.c.bf16 %v2438, %v2438
    %v2458 = vpack.c.bf16 %v2440, %v2440
    %v2459 = vpack.c.bf16 %v2442, %v2442
    %v2460 = vpack.c.bf16 %v2444, %v2444
    %2462 = vrot.lane.b32.xlu0 %v2457, 64
    %v2463 = vpop.permute.xlu0 %2462
    %v2465 = vsel %vm220, %v2457, 0
    %v2468 = vsel %vm220, %v2463, 0
    %2470 = vmatprep.subr.bf16.mxu0 0
    %2471 = vmatpush1.bf16.xpose.msra.mxu0 %v2468
    %2472 = vmatprep.subr.bf16.mxu0 0
    %2473 = vmatpush1.bf16.xpose.msra.mxu0 0
    %2474 = vmatprep.subr.bf16.mxu0 0
    %2475 = vmatpush1.bf16.xpose.msra.mxu0 0
    %2476 = vmatprep.subr.bf16.mxu0 0
    %2477 = vmatpush1.bf16.xpose.msra.mxu0 0
    %2478 = vmatprep.subr.bf16.mxu0 0
    %2479 = vmatpush1.bf16.xpose.msra.mxu0 0
    %2480 = vmatprep.subr.bf16.mxu0 0
    %2481 = vmatpush1.bf16.xpose.msra.mxu0 0
    %2482 = vmatprep.subr.bf16.mxu0 0
    %2483 = vmatpush1.bf16.xpose.msra.mxu0 0
    %2484 = vmatprep.subr.bf16.mxu0 0
    %2485 = vmatpush1.bf16.xpose.msra.mxu0 0
    %2486 = vmatprep.subr.bf16.mxu0 0
    %2487 = vmatpush1.bf16.xpose.msra.mxu0 0
    %2488 = vmatprep.subr.bf16.mxu0 0
    %2489 = vmatpush1.bf16.xpose.msra.mxu0 0
    %2490 = vmatprep.subr.bf16.mxu0 0
    %2491 = vmatpush1.bf16.xpose.msra.mxu0 0
    %2492 = vmatprep.subr.bf16.mxu0 0
    %2493 = vmatpush1.bf16.xpose.msra.mxu0 0
    %2494 = vmatprep.subr.bf16.mxu0 0
    %2495 = vmatpush1.bf16.xpose.msra.mxu0 0
    %2496 = vmatprep.subr.bf16.mxu0 0
    %2497 = vmatpush1.bf16.xpose.msra.mxu0 0
    %2498 = vmatprep.subr.bf16.mxu0 0
    %2499 = vmatpush1.bf16.xpose.msra.mxu0 0
    %2500 = vmatprep.subr.bf16.mxu0 0
    %2501 = vmatpush1.bf16.xpose.msra.mxu0 0
    %2502 = vmatprep.mubr.bf16.mxu0 0
    %2503 = vmatmul.mubr.bf16.gmra.mrb[0].mxu0 %v2465
    %v2504 = vpop.f32.mrb[0].mxu0
    %v2505 = vadd.f32 0.0, %v2504
    %v2506 = vpop.f32.mrb[0].mxu0
    %v2507 = vpop.f32.mrb[0].mxu0
    %v2508 = vpop.f32.mrb[0].mxu0
    %2509 = vdwg.mxu0
    %2511 = vrot.lane.b32.xlu0 %v2459, 64
    %v2512 = vpop.permute.xlu0 %2511
    %v2514 = vsel %vm220, %v2459, 0
    %v2517 = vsel %vm220, %v2512, 0
    %2519 = vmatprep.subr.bf16.mxu0 0
    %2520 = vmatpush1.bf16.xpose.msra.mxu0 %v2517
    %2521 = vmatprep.subr.bf16.mxu0 0
    %2522 = vmatpush1.bf16.xpose.msra.mxu0 0
    %2523 = vmatprep.subr.bf16.mxu0 0
    %2524 = vmatpush1.bf16.xpose.msra.mxu0 0
    %2525 = vmatprep.subr.bf16.mxu0 0
    %2526 = vmatpush1.bf16.xpose.msra.mxu0 0
    %2527 = vmatprep.subr.bf16.mxu0 0
    %2528 = vmatpush1.bf16.xpose.msra.mxu0 0
    %2529 = vmatprep.subr.bf16.mxu0 0
    %2530 = vmatpush1.bf16.xpose.msra.mxu0 0
    %2531 = vmatprep.subr.bf16.mxu0 0
    %2532 = vmatpush1.bf16.xpose.msra.mxu0 0
    %2533 = vmatprep.subr.bf16.mxu0 0
    %2534 = vmatpush1.bf16.xpose.msra.mxu0 0
    %2535 = vmatprep.subr.bf16.mxu0 0
    %2536 = vmatpush1.bf16.xpose.msra.mxu0 0
    %2537 = vmatprep.subr.bf16.mxu0 0
    %2538 = vmatpush1.bf16.xpose.msra.mxu0 0
    %2539 = vmatprep.subr.bf16.mxu0 0
    %2540 = vmatpush1.bf16.xpose.msra.mxu0 0
    %2541 = vmatprep.subr.bf16.mxu0 0
    %2542 = vmatpush1.bf16.xpose.msra.mxu0 0
    %2543 = vmatprep.subr.bf16.mxu0 0
    %2544 = vmatpush1.bf16.xpose.msra.mxu0 0
    %2545 = vmatprep.subr.bf16.mxu0 0
    %2546 = vmatpush1.bf16.xpose.msra.mxu0 0
    %2547 = vmatprep.subr.bf16.mxu0 0
    %2548 = vmatpush1.bf16.xpose.msra.mxu0 0
    %2549 = vmatprep.subr.bf16.mxu0 0
    %2550 = vmatpush1.bf16.xpose.msra.mxu0 0
    %2551 = vmatprep.mubr.bf16.mxu0 0
    %2552 = vmatmul.mubr.bf16.gmra.mrb[0].mxu0 %v2514
    %v2553 = vpop.f32.mrb[0].mxu0
    %v2554 = vadd.f32 0.0, %v2553
    %v2555 = vpop.f32.mrb[0].mxu0
    %v2556 = vpop.f32.mrb[0].mxu0
    %v2557 = vpop.f32.mrb[0].mxu0
    %2558 = vdwg.mxu0
    %v2559 = vmul.f32 %v2505, 0.17677669
    %v2560 = vmul.f32 %v2554, 0.17677669
    %v2561 = vadd.f32 %v2559, %v321
    %v2562 = vadd.f32 %v2560, %v325
    %v2563 = vsel %vm330, %v2561, -inf
    %2564 = vmax.xlane.f32.xlu0 %v2563
    %v2565 = vpop.xlane.xlu0 %2564
    %v2566 = vsel %vm330, %v2562, -inf
    %2567 = vmax.xlane.f32.xlu0 %v2566
    %v2568 = vpop.xlane.xlu0 %2567
    %v2569 = vsub.f32 %v2561, %v2565
    %v2570 = vsub.f32 %v2562, %v2568
    %v2571 = vmul.f32 %v2569, 1.442695
    %v2572 = vpow.pop %v2571
    %v2573 = vmul.f32 %v2570, 1.442695
    %v2574 = vpow.pop %v2573
    %v2575 = vsel %vm330, %v2572, 0.0
    %2576 = vadd.xlane.f32.xlu0 %v2575
    %v2577 = vpop.xlane.xlu0 %2576
    %v2578 = vsel %vm330, %v2574, 0.0
    %2579 = vadd.xlane.f32.xlu0 %v2578
    %v2580 = vpop.xlane.xlu0 %2579
    %v2581 = vrcp.pop %v2577
    %v2582 = vrcp.pop %v2580
    %v2583 = vmul.f32 %v2572, %v2581
    %v2584 = vmul.f32 %v2574, %v2582
    %v2585 = vpack.c.bf16 %v2583, %v2583
    %v2586 = vpack.c.bf16 %v2584, %v2584
    %v2588 = vsel %vm330, %v2585, 0
    %v2591 = vsel %vm358, %v2458, 0
    %2593 = vmatprep.subr.bf16.mxu0 0
    %2594 = vmatpush1.bf16.msra.mxu0 %v2591
    %2595 = vmatprep.subr.bf16.mxu0 0
    %2596 = vmatpush1.bf16.msra.mxu0 0
    %2597 = vmatprep.subr.bf16.mxu0 0
    %2598 = vmatpush1.bf16.msra.mxu0 0
    %2599 = vmatprep.subr.bf16.mxu0 0
    %2600 = vmatpush1.bf16.msra.mxu0 0
    %2601 = vmatprep.subr.bf16.mxu0 0
    %2602 = vmatpush1.bf16.msra.mxu0 0
    %2603 = vmatprep.subr.bf16.mxu0 0
    %2604 = vmatpush1.bf16.msra.mxu0 0
    %2605 = vmatprep.subr.bf16.mxu0 0
    %2606 = vmatpush1.bf16.msra.mxu0 0
    %2607 = vmatprep.subr.bf16.mxu0 0
    %2608 = vmatpush1.bf16.msra.mxu0 0
    %2609 = vmatprep.subr.bf16.mxu0 0
    %2610 = vmatpush1.bf16.msra.mxu0 0
    %2611 = vmatprep.subr.bf16.mxu0 0
    %2612 = vmatpush1.bf16.msra.mxu0 0
    %2613 = vmatprep.subr.bf16.mxu0 0
    %2614 = vmatpush1.bf16.msra.mxu0 0
    %2615 = vmatprep.subr.bf16.mxu0 0
    %2616 = vmatpush1.bf16.msra.mxu0 0
    %2617 = vmatprep.subr.bf16.mxu0 0
    %2618 = vmatpush1.bf16.msra.mxu0 0
    %2619 = vmatprep.subr.bf16.mxu0 0
    %2620 = vmatpush1.bf16.msra.mxu0 0
    %2621 = vmatprep.subr.bf16.mxu0 0
    %2622 = vmatpush1.bf16.msra.mxu0 0
    %2623 = vmatprep.subr.bf16.mxu0 0
    %2624 = vmatpush1.bf16.msra.mxu0 0
    %2625 = vmatprep.mubr.bf16.mxu0 0
    %2626 = vmatmul.mubr.bf16.gmra.mrb[0].mxu0 %v2588
    %v2627 = vpop.f32.mrb[0].mxu0
    %v2628 = vadd.f32 0.0, %v2627
    %v2629 = vpop.f32.mrb[0].mxu0
    %v2630 = vpop.f32.mrb[0].mxu0
    %v2631 = vpop.f32.mrb[0].mxu0
    %2632 = vdwg.mxu0
    %v2634 = vsel %vm330, %v2586, 0
    %v2637 = vsel %vm358, %v2460, 0
    %2639 = vmatprep.subr.bf16.mxu0 0
    %2640 = vmatpush1.bf16.msra.mxu0 %v2637
    %2641 = vmatprep.subr.bf16.mxu0 0
    %2642 = vmatpush1.bf16.msra.mxu0 0
    %2643 = vmatprep.subr.bf16.mxu0 0
    %2644 = vmatpush1.bf16.msra.mxu0 0
    %2645 = vmatprep.subr.bf16.mxu0 0
    %2646 = vmatpush1.bf16.msra.mxu0 0
    %2647 = vmatprep.subr.bf16.mxu0 0
    %2648 = vmatpush1.bf16.msra.mxu0 0
    %2649 = vmatprep.subr.bf16.mxu0 0
    %2650 = vmatpush1.bf16.msra.mxu0 0
    %2651 = vmatprep.subr.bf16.mxu0 0
    %2652 = vmatpush1.bf16.msra.mxu0 0
    %2653 = vmatprep.subr.bf16.mxu0 0
    %2654 = vmatpush1.bf16.msra.mxu0 0
    %2655 = vmatprep.subr.bf16.mxu0 0
    %2656 = vmatpush1.bf16.msra.mxu0 0
    %2657 = vmatprep.subr.bf16.mxu0 0
    %2658 = vmatpush1.bf16.msra.mxu0 0
    %2659 = vmatprep.subr.bf16.mxu0 0
    %2660 = vmatpush1.bf16.msra.mxu0 0
    %2661 = vmatprep.subr.bf16.mxu0 0
    %2662 = vmatpush1.bf16.msra.mxu0 0
    %2663 = vmatprep.subr.bf16.mxu0 0
    %2664 = vmatpush1.bf16.msra.mxu0 0
    %2665 = vmatprep.subr.bf16.mxu0 0
    %2666 = vmatpush1.bf16.msra.mxu0 0
    %2667 = vmatprep.subr.bf16.mxu0 0
    %2668 = vmatpush1.bf16.msra.mxu0 0
    %2669 = vmatprep.subr.bf16.mxu0 0
    %2670 = vmatpush1.bf16.msra.mxu0 0
    %2671 = vmatprep.mubr.bf16.mxu0 0
    %2672 = vmatmul.mubr.bf16.gmra.mrb[0].mxu0 %v2634
    %v2673 = vpop.f32.mrb[0].mxu0
    %v2674 = vadd.f32 0.0, %v2673
    %v2675 = vpop.f32.mrb[0].mxu0
    %v2676 = vpop.f32.mrb[0].mxu0
    %v2677 = vpop.f32.mrb[0].mxu0
    %2678 = vdwg.mxu0
    %v2679 = vpack.c.bf16 %v2628, %v2628
    %v2680 = vpack.c.bf16 %v2674, %v2674
    %v2683 = vunpack.c.l.b16 %v2679
    %v2684 = vunpack.c.l.b16 %v2680
    %v2685 = vpack.c.b16 %v2684, %v2683
    %v2690 = vunpack.c.l.b16 %v2447
    %v2691 = vunpack.c.l.b16 %v2448
    %v2692 = vunpack.c.l.b16 %v2449
    %v2693 = vunpack.c.l.b16 %v2450
    %v2694 = vpack.c.b16 %v2691, %v2690
    %v2695 = vpack.c.b16 %v2693, %v2692
    %v2699 = vsel %vm220, %v2685, 0
    %2701 = vmatprep.subr.bf16.mxu0 0
    %2702 = vmatpush1.bf16.msra.mxu0 %v2694
    %2703 = vmatprep.subr.bf16.mxu0 0
    %2704 = vmatpush1.bf16.msra.mxu0 %v2695
    %2705 = vmatprep.subr.bf16.mxu0 0
    %2706 = vmatpush1.bf16.msra.mxu0 0
    %2707 = vmatprep.subr.bf16.mxu0 0
    %2708 = vmatpush1.bf16.msra.mxu0 0
    %2709 = vmatprep.subr.bf16.mxu0 0
    %2710 = vmatpush1.bf16.msra.mxu0 0
    %2711 = vmatprep.subr.bf16.mxu0 0
    %2712 = vmatpush1.bf16.msra.mxu0 0
    %2713 = vmatprep.subr.bf16.mxu0 0
    %2714 = vmatpush1.bf16.msra.mxu0 0
    %2715 = vmatprep.subr.bf16.mxu0 0
    %2716 = vmatpush1.bf16.msra.mxu0 0
    %2717 = vmatprep.subr.bf16.mxu0 0
    %2718 = vmatpush1.bf16.msra.mxu0 0
    %2719 = vmatprep.subr.bf16.mxu0 0
    %2720 = vmatpush1.bf16.msra.mxu0 0
    %2721 = vmatprep.subr.bf16.mxu0 0
    %2722 = vmatpush1.bf16.msra.mxu0 0
    %2723 = vmatprep.subr.bf16.mxu0 0
    %2724 = vmatpush1.bf16.msra.mxu0 0
    %2725 = vmatprep.subr.bf16.mxu0 0
    %2726 = vmatpush1.bf16.msra.mxu0 0
    %2727 = vmatprep.subr.bf16.mxu0 0
    %2728 = vmatpush1.bf16.msra.mxu0 0
    %2729 = vmatprep.subr.bf16.mxu0 0
    %2730 = vmatpush1.bf16.msra.mxu0 0
    %2731 = vmatprep.subr.bf16.mxu0 0
    %2732 = vmatpush1.bf16.msra.mxu0 0
    %2733 = vmatprep.mubr.bf16.mxu0 0
    %2734 = vmatmul.mubr.bf16.gmra.mrb[0].mxu0 %v2699
    %v2735 = vpop.f32.mrb[0].mxu0
    %v2736 = vadd.f32 0.0, %v2735
    %v2737 = vpop.f32.mrb[0].mxu0
    %v2738 = vpop.f32.mrb[0].mxu0
    %v2739 = vadd.f32 0.0, %v2738
    %v2740 = vpop.f32.mrb[0].mxu0
    %2741 = vdwg.mxu0
    %v2743 = vlaneseq
    %v2744 = vshrl.u32 %v2743, 7
    %v2745 = vsub.s32 0, %v2744
    %v2746 = vrot.slane %v2456, %v2745
    %v2748 = vadd.f32 %v2746, %v2736
    %v2749 = vadd.f32 %v2746, %v2739
    %2750 = vrot.lane.b32.xlu0 %v2457, 96
    %v2751 = vpop.permute.xlu0 %2750
    %2752 = vrot.lane.b32.xlu0 %v2457, 32
    %v2753 = vpop.permute.xlu0 %2752
    %v2755 = vsel %vm220, %v2751, 0
    %v2758 = vsel %vm220, %v2753, 0
    %2760 = vmatprep.subr.bf16.mxu0 0
    %2761 = vmatpush1.bf16.xpose.msra.mxu0 %v2758
    %2762 = vmatprep.subr.bf16.mxu0 0
    %2763 = vmatpush1.bf16.xpose.msra.mxu0 0
    %2764 = vmatprep.subr.bf16.mxu0 0
    %2765 = vmatpush1.bf16.xpose.msra.mxu0 0
    %2766 = vmatprep.subr.bf16.mxu0 0
    %2767 = vmatpush1.bf16.xpose.msra.mxu0 0
    %2768 = vmatprep.subr.bf16.mxu0 0
    %2769 = vmatpush1.bf16.xpose.msra.mxu0 0
    %2770 = vmatprep.subr.bf16.mxu0 0
    %2771 = vmatpush1.bf16.xpose.msra.mxu0 0
    %2772 = vmatprep.subr.bf16.mxu0 0
    %2773 = vmatpush1.bf16.xpose.msra.mxu0 0
    %2774 = vmatprep.subr.bf16.mxu0 0
    %2775 = vmatpush1.bf16.xpose.msra.mxu0 0
    %2776 = vmatprep.subr.bf16.mxu0 0
    %2777 = vmatpush1.bf16.xpose.msra.mxu0 0
    %2778 = vmatprep.subr.bf16.mxu0 0
    %2779 = vmatpush1.bf16.xpose.msra.mxu0 0
    %2780 = vmatprep.subr.bf16.mxu0 0
    %2781 = vmatpush1.bf16.xpose.msra.mxu0 0
    %2782 = vmatprep.subr.bf16.mxu0 0
    %2783 = vmatpush1.bf16.xpose.msra.mxu0 0
    %2784 = vmatprep.subr.bf16.mxu0 0
    %2785 = vmatpush1.bf16.xpose.msra.mxu0 0
    %2786 = vmatprep.subr.bf16.mxu0 0
    %2787 = vmatpush1.bf16.xpose.msra.mxu0 0
    %2788 = vmatprep.subr.bf16.mxu0 0
    %2789 = vmatpush1.bf16.xpose.msra.mxu0 0
    %2790 = vmatprep.subr.bf16.mxu0 0
    %2791 = vmatpush1.bf16.xpose.msra.mxu0 0
    %2792 = vmatprep.mubr.bf16.mxu0 0
    %2793 = vmatmul.mubr.bf16.gmra.mrb[0].mxu0 %v2755
    %v2794 = vpop.f32.mrb[0].mxu0
    %v2795 = vadd.f32 0.0, %v2794
    %v2796 = vpop.f32.mrb[0].mxu0
    %v2797 = vpop.f32.mrb[0].mxu0
    %v2798 = vpop.f32.mrb[0].mxu0
    %2799 = vdwg.mxu0
    %2800 = vrot.lane.b32.xlu0 %v2459, 96
    %v2801 = vpop.permute.xlu0 %2800
    %2802 = vrot.lane.b32.xlu0 %v2459, 32
    %v2803 = vpop.permute.xlu0 %2802
    %v2805 = vsel %vm220, %v2801, 0
    %v2808 = vsel %vm220, %v2803, 0
    %2810 = vmatprep.subr.bf16.mxu0 0
    %2811 = vmatpush1.bf16.xpose.msra.mxu0 %v2808
    %2812 = vmatprep.subr.bf16.mxu0 0
    %2813 = vmatpush1.bf16.xpose.msra.mxu0 0
    %2814 = vmatprep.subr.bf16.mxu0 0
    %2815 = vmatpush1.bf16.xpose.msra.mxu0 0
    %2816 = vmatprep.subr.bf16.mxu0 0
    %2817 = vmatpush1.bf16.xpose.msra.mxu0 0
    %2818 = vmatprep.subr.bf16.mxu0 0
    %2819 = vmatpush1.bf16.xpose.msra.mxu0 0
    %2820 = vmatprep.subr.bf16.mxu0 0
    %2821 = vmatpush1.bf16.xpose.msra.mxu0 0
    %2822 = vmatprep.subr.bf16.mxu0 0
    %2823 = vmatpush1.bf16.xpose.msra.mxu0 0
    %2824 = vmatprep.subr.bf16.mxu0 0
    %2825 = vmatpush1.bf16.xpose.msra.mxu0 0
    %2826 = vmatprep.subr.bf16.mxu0 0
    %2827 = vmatpush1.bf16.xpose.msra.mxu0 0
    %2828 = vmatprep.subr.bf16.mxu0 0
    %2829 = vmatpush1.bf16.xpose.msra.mxu0 0
    %2830 = vmatprep.subr.bf16.mxu0 0
    %2831 = vmatpush1.bf16.xpose.msra.mxu0 0
    %2832 = vmatprep.subr.bf16.mxu0 0
    %2833 = vmatpush1.bf16.xpose.msra.mxu0 0
    %2834 = vmatprep.subr.bf16.mxu0 0
    %2835 = vmatpush1.bf16.xpose.msra.mxu0 0
    %2836 = vmatprep.subr.bf16.mxu0 0
    %2837 = vmatpush1.bf16.xpose.msra.mxu0 0
    %2838 = vmatprep.subr.bf16.mxu0 0
    %2839 = vmatpush1.bf16.xpose.msra.mxu0 0
    %2840 = vmatprep.subr.bf16.mxu0 0
    %2841 = vmatpush1.bf16.xpose.msra.mxu0 0
    %2842 = vmatprep.mubr.bf16.mxu0 0
    %2843 = vmatmul.mubr.bf16.gmra.mrb[0].mxu0 %v2805
    %v2844 = vpop.f32.mrb[0].mxu0
    %v2845 = vadd.f32 0.0, %v2844
    %v2846 = vpop.f32.mrb[0].mxu0
    %v2847 = vpop.f32.mrb[0].mxu0
    %v2848 = vpop.f32.mrb[0].mxu0
    %2849 = vdwg.mxu0
    %v2850 = vmul.f32 %v2795, 0.17677669
    %v2851 = vmul.f32 %v2845, 0.17677669
    %v2852 = vadd.f32 %v2850, %v321
    %v2853 = vadd.f32 %v2851, %v325
    %v2854 = vsel %vm330, %v2852, -inf
    %2855 = vmax.xlane.f32.xlu0 %v2854
    %v2856 = vpop.xlane.xlu0 %2855
    %v2857 = vsel %vm330, %v2853, -inf
    %2858 = vmax.xlane.f32.xlu0 %v2857
    %v2859 = vpop.xlane.xlu0 %2858
    %v2860 = vsub.f32 %v2852, %v2856
    %v2861 = vsub.f32 %v2853, %v2859
    %v2862 = vmul.f32 %v2860, 1.442695
    %v2863 = vpow.pop %v2862
    %v2864 = vmul.f32 %v2861, 1.442695
    %v2865 = vpow.pop %v2864
    %v2866 = vsel %vm330, %v2863, 0.0
    %2867 = vadd.xlane.f32.xlu0 %v2866
    %v2868 = vpop.xlane.xlu0 %2867
    %v2869 = vsel %vm330, %v2865, 0.0
    %2870 = vadd.xlane.f32.xlu0 %v2869
    %v2871 = vpop.xlane.xlu0 %2870
    %v2872 = vrcp.pop %v2868
    %v2873 = vrcp.pop %v2871
    %v2874 = vmul.f32 %v2863, %v2872
    %v2875 = vmul.f32 %v2865, %v2873
    %v2876 = vpack.c.bf16 %v2874, %v2874
    %v2877 = vpack.c.bf16 %v2875, %v2875
    %2879 = vrot.lane.b32.xlu0 %v2458, 96
    %v2880 = vpop.permute.xlu0 %2879
    %v2882 = vsel %vm330, %v2876, 0
    %v2885 = vsel %vm358, %v2880, 0
    %2887 = vmatprep.subr.bf16.mxu0 0
    %2888 = vmatpush1.bf16.msra.mxu0 %v2885
    %2889 = vmatprep.subr.bf16.mxu0 0
    %2890 = vmatpush1.bf16.msra.mxu0 0
    %2891 = vmatprep.subr.bf16.mxu0 0
    %2892 = vmatpush1.bf16.msra.mxu0 0
    %2893 = vmatprep.subr.bf16.mxu0 0
    %2894 = vmatpush1.bf16.msra.mxu0 0
    %2895 = vmatprep.subr.bf16.mxu0 0
    %2896 = vmatpush1.bf16.msra.mxu0 0
    %2897 = vmatprep.subr.bf16.mxu0 0
    %2898 = vmatpush1.bf16.msra.mxu0 0
    %2899 = vmatprep.subr.bf16.mxu0 0
    %2900 = vmatpush1.bf16.msra.mxu0 0
    %2901 = vmatprep.subr.bf16.mxu0 0
    %2902 = vmatpush1.bf16.msra.mxu0 0
    %2903 = vmatprep.subr.bf16.mxu0 0
    %2904 = vmatpush1.bf16.msra.mxu0 0
    %2905 = vmatprep.subr.bf16.mxu0 0
    %2906 = vmatpush1.bf16.msra.mxu0 0
    %2907 = vmatprep.subr.bf16.mxu0 0
    %2908 = vmatpush1.bf16.msra.mxu0 0
    %2909 = vmatprep.subr.bf16.mxu0 0
    %2910 = vmatpush1.bf16.msra.mxu0 0
    %2911 = vmatprep.subr.bf16.mxu0 0
    %2912 = vmatpush1.bf16.msra.mxu0 0
    %2913 = vmatprep.subr.bf16.mxu0 0
    %2914 = vmatpush1.bf16.msra.mxu0 0
    %2915 = vmatprep.subr.bf16.mxu0 0
    %2916 = vmatpush1.bf16.msra.mxu0 0
    %2917 = vmatprep.subr.bf16.mxu0 0
    %2918 = vmatpush1.bf16.msra.mxu0 0
    %2919 = vmatprep.mubr.bf16.mxu0 0
    %2920 = vmatmul.mubr.bf16.gmra.mrb[0].mxu0 %v2882
    %v2921 = vpop.f32.mrb[0].mxu0
    %v2922 = vadd.f32 0.0, %v2921
    %v2923 = vpop.f32.mrb[0].mxu0
    %v2924 = vpop.f32.mrb[0].mxu0
    %v2925 = vpop.f32.mrb[0].mxu0
    %2926 = vdwg.mxu0
    %2928 = vrot.lane.b32.xlu0 %v2460, 96
    %v2929 = vpop.permute.xlu0 %2928
    %v2931 = vsel %vm330, %v2877, 0
    %v2934 = vsel %vm358, %v2929, 0
    %2936 = vmatprep.subr.bf16.mxu0 0
    %2937 = vmatpush1.bf16.msra.mxu0 %v2934
    %2938 = vmatprep.subr.bf16.mxu0 0
    %2939 = vmatpush1.bf16.msra.mxu0 0
    %2940 = vmatprep.subr.bf16.mxu0 0
    %2941 = vmatpush1.bf16.msra.mxu0 0
    %2942 = vmatprep.subr.bf16.mxu0 0
    %2943 = vmatpush1.bf16.msra.mxu0 0
    %2944 = vmatprep.subr.bf16.mxu0 0
    %2945 = vmatpush1.bf16.msra.mxu0 0
    %2946 = vmatprep.subr.bf16.mxu0 0
    %2947 = vmatpush1.bf16.msra.mxu0 0
    %2948 = vmatprep.subr.bf16.mxu0 0
    %2949 = vmatpush1.bf16.msra.mxu0 0
    %2950 = vmatprep.subr.bf16.mxu0 0
    %2951 = vmatpush1.bf16.msra.mxu0 0
    %2952 = vmatprep.subr.bf16.mxu0 0
    %2953 = vmatpush1.bf16.msra.mxu0 0
    %2954 = vmatprep.subr.bf16.mxu0 0
    %2955 = vmatpush1.bf16.msra.mxu0 0
    %2956 = vmatprep.subr.bf16.mxu0 0
    %2957 = vmatpush1.bf16.msra.mxu0 0
    %2958 = vmatprep.subr.bf16.mxu0 0
    %2959 = vmatpush1.bf16.msra.mxu0 0
    %2960 = vmatprep.subr.bf16.mxu0 0
    %2961 = vmatpush1.bf16.msra.mxu0 0
    %2962 = vmatprep.subr.bf16.mxu0 0
    %2963 = vmatpush1.bf16.msra.mxu0 0
    %2964 = vmatprep.subr.bf16.mxu0 0
    %2965 = vmatpush1.bf16.msra.mxu0 0
    %2966 = vmatprep.subr.bf16.mxu0 0
    %2967 = vmatpush1.bf16.msra.mxu0 0
    %2968 = vmatprep.mubr.bf16.mxu0 0
    %2969 = vmatmul.mubr.bf16.gmra.mrb[0].mxu0 %v2931
    %v2970 = vpop.f32.mrb[0].mxu0
    %v2971 = vadd.f32 0.0, %v2970
    %v2972 = vpop.f32.mrb[0].mxu0
    %v2973 = vpop.f32.mrb[0].mxu0
    %v2974 = vpop.f32.mrb[0].mxu0
    %2975 = vdwg.mxu0
    %v2976 = vpack.c.bf16 %v2922, %v2922
    %v2977 = vpack.c.bf16 %v2971, %v2971
    %v2980 = vunpack.c.l.b16 %v2976
    %v2981 = vunpack.c.l.b16 %v2977
    %v2982 = vpack.c.b16 %v2981, %v2980
    %v2987 = vunpack.c.l.b16 %v2451
    %v2988 = vunpack.c.l.b16 %v2452
    %v2989 = vunpack.c.l.b16 %v2453
    %v2990 = vunpack.c.l.b16 %v2454
    %v2991 = vpack.c.b16 %v2988, %v2987
    %v2992 = vpack.c.b16 %v2990, %v2989
    %v2996 = vsel %vm220, %v2982, 0
    %2998 = vmatprep.subr.bf16.mxu0 0
    %2999 = vmatpush1.bf16.msra.mxu0 %v2991
    %3000 = vmatprep.subr.bf16.mxu0 0
    %3001 = vmatpush1.bf16.msra.mxu0 %v2992
    %3002 = vmatprep.subr.bf16.mxu0 0
    %3003 = vmatpush1.bf16.msra.mxu0 0
    %3004 = vmatprep.subr.bf16.mxu0 0
    %3005 = vmatpush1.bf16.msra.mxu0 0
    %3006 = vmatprep.subr.bf16.mxu0 0
    %3007 = vmatpush1.bf16.msra.mxu0 0
    %3008 = vmatprep.subr.bf16.mxu0 0
    %3009 = vmatpush1.bf16.msra.mxu0 0
    %3010 = vmatprep.subr.bf16.mxu0 0
    %3011 = vmatpush1.bf16.msra.mxu0 0
    %3012 = vmatprep.subr.bf16.mxu0 0
    %3013 = vmatpush1.bf16.msra.mxu0 0
    %3014 = vmatprep.subr.bf16.mxu0 0
    %3015 = vmatpush1.bf16.msra.mxu0 0
    %3016 = vmatprep.subr.bf16.mxu0 0
    %3017 = vmatpush1.bf16.msra.mxu0 0
    %3018 = vmatprep.subr.bf16.mxu0 0
    %3019 = vmatpush1.bf16.msra.mxu0 0
    %3020 = vmatprep.subr.bf16.mxu0 0
    %3021 = vmatpush1.bf16.msra.mxu0 0
    %3022 = vmatprep.subr.bf16.mxu0 0
    %3023 = vmatpush1.bf16.msra.mxu0 0
    %3024 = vmatprep.subr.bf16.mxu0 0
    %3025 = vmatpush1.bf16.msra.mxu0 0
    %3026 = vmatprep.subr.bf16.mxu0 0
    %3027 = vmatpush1.bf16.msra.mxu0 0
    %3028 = vmatprep.subr.bf16.mxu0 0
    %3029 = vmatpush1.bf16.msra.mxu0 0
    %3030 = vmatprep.mubr.bf16.mxu0 0
    %3031 = vmatmul.mubr.bf16.gmra.mrb[0].mxu0 %v2996
    %v3032 = vpop.f32.mrb[0].mxu0
    %v3033 = vadd.f32 0.0, %v3032
    %v3034 = vpop.f32.mrb[0].mxu0
    %v3035 = vpop.f32.mrb[0].mxu0
    %v3036 = vadd.f32 0.0, %v3035
    %v3037 = vpop.f32.mrb[0].mxu0
    %3038 = vdwg.mxu0
    %v3039 = vadd.f32 %v2748, %v3033
    %v3040 = vadd.f32 %v2749, %v3036
    %v3041 = vadd.f32 %v2329, %v3039
    %v3042 = vadd.f32 %v2330, %v3040
    %s3043 = scalar_lea.vmem %s7, 2
    %v3044 = vld [vmem:[%s3043] sm:$0x1]
    %s3045 = scalar_lea.vmem %s8, 2
    %v3046 = vld [vmem:[%s3045] sm:$0x1]
    %v3047 = vsel %vm157, %v3041, 0.0
    %3048 = vadd.xlane.f32.xlu0 %v3047
    %v3049 = vpop.xlane.xlu0 %3048
    %v3050 = vsel %vm157, %v3042, 0.0
    %3051 = vadd.xlane.f32.xlu0 %v3050
    %v3052 = vpop.xlane.xlu0 %3051
    %v3053 = vmul.f32 %v3049, %v820
    %v3054 = vmul.f32 %v3052, %v820
    %v3055 = vsub.f32 %v3041, %v3053
    %v3056 = vsub.f32 %v3042, %v3054
    %v3057 = vmul.f32 %v3055, %v3055
    %v3058 = vmul.f32 %v3056, %v3056
    %v3059 = vsel %vm157, %v3057, 0.0
    %3060 = vadd.xlane.f32.xlu0 %v3059
    %v3061 = vpop.xlane.xlu0 %3060
    %v3062 = vsel %vm157, %v3058, 0.0
    %3063 = vadd.xlane.f32.xlu0 %v3062
    %v3064 = vpop.xlane.xlu0 %3063
    %v3065 = vmul.f32 %v3061, %v820
    %v3066 = vmul.f32 %v3064, %v820
    %v3067 = vadd.f32 %v3065, 1e-05
    %v3068 = vadd.f32 %v3066, 1e-05
    %v3069 = vrsqrt.pop %v3067
    %v3070 = vrsqrt.pop %v3068
    %v3071 = vmul.f32 %v3055, %v3069
    %v3072 = vmul.f32 %v3056, %v3070
    %v3074 = vlaneseq
    %v3075 = vshrl.u32 %v3074, 7
    %v3076 = vsub.s32 0, %v3075
    %v3077 = vrot.slane %v3044, %v3076
    %v3079 = vmul.f32 %v3071, %v3077
    %v3080 = vmul.f32 %v3072, %v3077
    %v3082 = vlaneseq
    %v3083 = vshrl.u32 %v3082, 7
    %v3084 = vsub.s32 0, %v3083
    %v3085 = vrot.slane %v3046, %v3084
    %v3087 = vadd.f32 %v3079, %v3085
    %v3088 = vadd.f32 %v3080, %v3085
    %v3089 = vpack.c.bf16 %v3087, %v3087
    %v3090 = vpack.c.bf16 %v3088, %v3088
    %s3091 = scalar_lea.vmem %s9, 128
    %v3092 = vld [vmem:[%s3091] sm:$0xff]
    %v3093 = vld [vmem:[%s3091 + $0x8] sm:$0xff]
    %v3094 = vld [vmem:[%s3091 + $0x10] sm:$0xff]
    %v3095 = vld [vmem:[%s3091 + $0x18] sm:$0xff]
    %v3096 = vld [vmem:[%s3091 + $0x20] sm:$0xff]
    %v3097 = vld [vmem:[%s3091 + $0x28] sm:$0xff]
    %v3098 = vld [vmem:[%s3091 + $0x30] sm:$0xff]
    %v3099 = vld [vmem:[%s3091 + $0x38] sm:$0xff]
    %s3100 = scalar_lea.vmem %s10, 4
    %v3101 = vld [vmem:[%s3100] sm:$0x3]
    %v3103 = vlaneseq
    %v3104 = vshrl.u32 %v3103, 7
    %v3105 = vsub.s32 0, %v3104
    %v3106 = vrot.slane %v3101, %v3105
    %v3107 = vlaneseq
    %v3108 = vshrl.u32 %v3107, 7
    %v3109 = vsub.s32 1, %v3108
    %v3110 = vrot.slane %v3101, %v3109
    %v3115 = vunpack.c.l.b16 %v3089
    %v3116 = vunpack.c.l.b16 %v3090
    %v3117 = vpack.c.b16 %v3116, %v3115
    %v3126 = vunpack.c.l.b16 %v3092
    %v3127 = vunpack.c.h.b16 %v3092
    %v3128 = vunpack.c.l.b16 %v3093
    %v3129 = vunpack.c.h.b16 %v3093
    %v3130 = vunpack.c.l.b16 %v3094
    %v3131 = vunpack.c.h.b16 %v3094
    %v3132 = vunpack.c.l.b16 %v3095
    %v3133 = vunpack.c.h.b16 %v3095
    %v3134 = vunpack.c.l.b16 %v3096
    %v3135 = vunpack.c.h.b16 %v3096
    %v3136 = vunpack.c.l.b16 %v3097
    %v3137 = vunpack.c.h.b16 %v3097
    %v3138 = vunpack.c.l.b16 %v3098
    %v3139 = vunpack.c.h.b16 %v3098
    %v3140 = vunpack.c.l.b16 %v3099
    %v3141 = vunpack.c.h.b16 %v3099
    %v3142 = vpack.c.b16 %v3128, %v3126
    %v3143 = vpack.c.b16 %v3129, %v3127
    %v3144 = vpack.c.b16 %v3132, %v3130
    %v3145 = vpack.c.b16 %v3133, %v3131
    %v3146 = vpack.c.b16 %v3136, %v3134
    %v3147 = vpack.c.b16 %v3137, %v3135
    %v3148 = vpack.c.b16 %v3140, %v3138
    %v3149 = vpack.c.b16 %v3141, %v3139
    %v3159 = vsel %vm157, %v3117, 0
    %3161 = vmatprep.subr.bf16.mxu0 %v3143
    %3162 = vmatpush1.bf16.msra.mxu0 %v3142
    %3163 = vmatprep.subr.bf16.mxu0 %v3145
    %3164 = vmatpush1.bf16.msra.mxu0 %v3144
    %3165 = vmatprep.subr.bf16.mxu0 %v3147
    %3166 = vmatpush1.bf16.msra.mxu0 %v3146
    %3167 = vmatprep.subr.bf16.mxu0 %v3149
    %3168 = vmatpush1.bf16.msra.mxu0 %v3148
    %3169 = vmatprep.subr.bf16.mxu0 0
    %3170 = vmatpush1.bf16.msra.mxu0 0
    %3171 = vmatprep.subr.bf16.mxu0 0
    %3172 = vmatpush1.bf16.msra.mxu0 0
    %3173 = vmatprep.subr.bf16.mxu0 0
    %3174 = vmatpush1.bf16.msra.mxu0 0
    %3175 = vmatprep.subr.bf16.mxu0 0
    %3176 = vmatpush1.bf16.msra.mxu0 0
    %3177 = vmatprep.subr.bf16.mxu0 0
    %3178 = vmatpush1.bf16.msra.mxu0 0
    %3179 = vmatprep.subr.bf16.mxu0 0
    %3180 = vmatpush1.bf16.msra.mxu0 0
    %3181 = vmatprep.subr.bf16.mxu0 0
    %3182 = vmatpush1.bf16.msra.mxu0 0
    %3183 = vmatprep.subr.bf16.mxu0 0
    %3184 = vmatpush1.bf16.msra.mxu0 0
    %3185 = vmatprep.subr.bf16.mxu0 0
    %3186 = vmatpush1.bf16.msra.mxu0 0
    %3187 = vmatprep.subr.bf16.mxu0 0
    %3188 = vmatpush1.bf16.msra.mxu0 0
    %3189 = vmatprep.subr.bf16.mxu0 0
    %3190 = vmatpush1.bf16.msra.mxu0 0
    %3191 = vmatprep.subr.bf16.mxu0 0
    %3192 = vmatpush1.bf16.msra.mxu0 0
    %3193 = vmatprep.mubr.bf16.mxu0 0
    %3194 = vmatmul.mubr.bf16.gmra.mrb[0].mxu0 %v3159
    %v3195 = vpop.f32.mrb[0].mxu0
    %v3196 = vadd.f32 %v3106, %v3195
    %v3197 = vpop.f32.mrb[0].mxu0
    %v3198 = vadd.f32 %v3110, %v3197
    %v3199 = vpop.f32.mrb[0].mxu0
    %v3200 = vadd.f32 %v3106, %v3199
    %v3201 = vpop.f32.mrb[0].mxu0
    %v3202 = vadd.f32 %v3110, %v3201
    %3203 = vdwg.mxu0
    %v3204 = vmax.f32 %v3196, 0.0
    %v3205 = vmax.f32 %v3198, 0.0
    %v3206 = vmax.f32 %v3200, 0.0
    %v3207 = vmax.f32 %v3202, 0.0
    %v3208 = vpack.c.bf16 %v3204, %v3204
    %v3209 = vpack.c.bf16 %v3205, %v3205
    %v3210 = vpack.c.bf16 %v3206, %v3206
    %v3211 = vpack.c.bf16 %v3207, %v3207
    %s3212 = scalar_lea.vmem %s11, 256
    %v3213 = vld [vmem:[%s3212] sm:$0xf]
    %v3214 = vld [vmem:[%s3212 + $0x4] sm:$0xf]
    %v3215 = vld [vmem:[%s3212 + $0x8] sm:$0xf]
    %v3216 = vld [vmem:[%s3212 + $0xc] sm:$0xf]
    %v3217 = vld [vmem:[%s3212 + $0x10] sm:$0xf]
    %v3218 = vld [vmem:[%s3212 + $0x14] sm:$0xf]
    %v3219 = vld [vmem:[%s3212 + $0x18] sm:$0xf]
    %v3220 = vld [vmem:[%s3212 + $0x1c] sm:$0xf]
    %v3221 = vld [vmem:[%s3212 + $0x20] sm:$0xf]
    %v3222 = vld [vmem:[%s3212 + $0x24] sm:$0xf]
    %v3223 = vld [vmem:[%s3212 + $0x28] sm:$0xf]
    %v3224 = vld [vmem:[%s3212 + $0x2c] sm:$0xf]
    %v3225 = vld [vmem:[%s3212 + $0x30] sm:$0xf]
    %v3226 = vld [vmem:[%s3212 + $0x34] sm:$0xf]
    %v3227 = vld [vmem:[%s3212 + $0x38] sm:$0xf]
    %v3228 = vld [vmem:[%s3212 + $0x3c] sm:$0xf]
    %v3229 = vld [vmem:[%s3212 + $0x40] sm:$0xf]
    %v3230 = vld [vmem:[%s3212 + $0x44] sm:$0xf]
    %v3231 = vld [vmem:[%s3212 + $0x48] sm:$0xf]
    %v3232 = vld [vmem:[%s3212 + $0x4c] sm:$0xf]
    %v3233 = vld [vmem:[%s3212 + $0x50] sm:$0xf]
    %v3234 = vld [vmem:[%s3212 + $0x54] sm:$0xf]
    %v3235 = vld [vmem:[%s3212 + $0x58] sm:$0xf]
    %v3236 = vld [vmem:[%s3212 + $0x5c] sm:$0xf]
    %v3237 = vld [vmem:[%s3212 + $0x60] sm:$0xf]
    %v3238 = vld [vmem:[%s3212 + $0x64] sm:$0xf]
    %v3239 = vld [vmem:[%s3212 + $0x68] sm:$0xf]
    %v3240 = vld [vmem:[%s3212 + $0x6c] sm:$0xf]
    %v3241 = vld [vmem:[%s3212 + $0x70] sm:$0xf]
    %v3242 = vld [vmem:[%s3212 + $0x74] sm:$0xf]
    %v3243 = vld [vmem:[%s3212 + $0x78] sm:$0xf]
    %v3244 = vld [vmem:[%s3212 + $0x7c] sm:$0xf]
    %s3245 = scalar_lea.vmem %s12, 2
    %v3246 = vld [vmem:[%s3245] sm:$0x1]
    %v3248 = vlaneseq
    %v3249 = vshrl.u32 %v3248, 7
    %v3250 = vsub.s32 0, %v3249
    %v3251 = vrot.slane %v3246, %v3250
    %v3257 = vunpack.c.l.b16 %v3208
    %v3258 = vunpack.c.l.b16 %v3209
    %v3259 = vunpack.c.l.b16 %v3210
    %v3260 = vunpack.c.l.b16 %v3211
    %v3261 = vpack.c.b16 %v3259, %v3257
    %v3262 = vpack.c.b16 %v3260, %v3258
    %v3297 = vunpack.c.l.b16 %v3213
    %v3298 = vunpack.c.l.b16 %v3214
    %v3299 = vunpack.c.l.b16 %v3215
    %v3300 = vunpack.c.l.b16 %v3216
    %v3301 = vunpack.c.l.b16 %v3217
    %v3302 = vunpack.c.l.b16 %v3218
    %v3303 = vunpack.c.l.b16 %v3219
    %v3304 = vunpack.c.l.b16 %v3220
    %v3305 = vunpack.c.l.b16 %v3221
    %v3306 = vunpack.c.l.b16 %v3222
    %v3307 = vunpack.c.l.b16 %v3223
    %v3308 = vunpack.c.l.b16 %v3224
    %v3309 = vunpack.c.l.b16 %v3225
    %v3310 = vunpack.c.l.b16 %v3226
    %v3311 = vunpack.c.l.b16 %v3227
    %v3312 = vunpack.c.l.b16 %v3228
    %v3313 = vunpack.c.l.b16 %v3229
    %v3314 = vunpack.c.l.b16 %v3230
    %v3315 = vunpack.c.l.b16 %v3231
    %v3316 = vunpack.c.l.b16 %v3232
    %v3317 = vunpack.c.l.b16 %v3233
    %v3318 = vunpack.c.l.b16 %v3234
    %v3319 = vunpack.c.l.b16 %v3235
    %v3320 = vunpack.c.l.b16 %v3236
    %v3321 = vunpack.c.l.b16 %v3237
    %v3322 = vunpack.c.l.b16 %v3238
    %v3323 = vunpack.c.l.b16 %v3239
    %v3324 = vunpack.c.l.b16 %v3240
    %v3325 = vunpack.c.l.b16 %v3241
    %v3326 = vunpack.c.l.b16 %v3242
    %v3327 = vunpack.c.l.b16 %v3243
    %v3328 = vunpack.c.l.b16 %v3244
    %v3329 = vpack.c.b16 %v3298, %v3297
    %v3330 = vpack.c.b16 %v3300, %v3299
    %v3331 = vpack.c.b16 %v3302, %v3301
    %v3332 = vpack.c.b16 %v3304, %v3303
    %v3333 = vpack.c.b16 %v3306, %v3305
    %v3334 = vpack.c.b16 %v3308, %v3307
    %v3335 = vpack.c.b16 %v3310, %v3309
    %v3336 = vpack.c.b16 %v3312, %v3311
    %v3337 = vpack.c.b16 %v3314, %v3313
    %v3338 = vpack.c.b16 %v3316, %v3315
    %v3339 = vpack.c.b16 %v3318, %v3317
    %v3340 = vpack.c.b16 %v3320, %v3319
    %v3341 = vpack.c.b16 %v3322, %v3321
    %v3342 = vpack.c.b16 %v3324, %v3323
    %v3343 = vpack.c.b16 %v3326, %v3325
    %v3344 = vpack.c.b16 %v3328, %v3327
    %3361 = vmatprep.subr.bf16.mxu0 0
    %3362 = vmatpush1.bf16.msra.mxu0 %v3329
    %3363 = vmatprep.subr.bf16.mxu0 0
    %3364 = vmatpush1.bf16.msra.mxu0 %v3330
    %3365 = vmatprep.subr.bf16.mxu0 0
    %3366 = vmatpush1.bf16.msra.mxu0 %v3331
    %3367 = vmatprep.subr.bf16.mxu0 0
    %3368 = vmatpush1.bf16.msra.mxu0 %v3332
    %3369 = vmatprep.subr.bf16.mxu0 0
    %3370 = vmatpush1.bf16.msra.mxu0 %v3333
    %3371 = vmatprep.subr.bf16.mxu0 0
    %3372 = vmatpush1.bf16.msra.mxu0 %v3334
    %3373 = vmatprep.subr.bf16.mxu0 0
    %3374 = vmatpush1.bf16.msra.mxu0 %v3335
    %3375 = vmatprep.subr.bf16.mxu0 0
    %3376 = vmatpush1.bf16.msra.mxu0 %v3336
    %3377 = vmatprep.subr.bf16.mxu0 0
    %3378 = vmatpush1.bf16.msra.mxu0 %v3337
    %3379 = vmatprep.subr.bf16.mxu0 0
    %3380 = vmatpush1.bf16.msra.mxu0 %v3338
    %3381 = vmatprep.subr.bf16.mxu0 0
    %3382 = vmatpush1.bf16.msra.mxu0 %v3339
    %3383 = vmatprep.subr.bf16.mxu0 0
    %3384 = vmatpush1.bf16.msra.mxu0 %v3340
    %3385 = vmatprep.subr.bf16.mxu0 0
    %3386 = vmatpush1.bf16.msra.mxu0 %v3341
    %3387 = vmatprep.subr.bf16.mxu0 0
    %3388 = vmatpush1.bf16.msra.mxu0 %v3342
    %3389 = vmatprep.subr.bf16.mxu0 0
    %3390 = vmatpush1.bf16.msra.mxu0 %v3343
    %3391 = vmatprep.subr.bf16.mxu0 0
    %3392 = vmatpush1.bf16.msra.mxu0 %v3344
    %3393 = vmatprep.mubr.bf16.mxu0 %v3262
    %3394 = vmatmul.mubr.bf16.gmra.mrb[0].mxu0 %v3261
    %v3395 = vpop.f32.mrb[0].mxu0
    %v3396 = vadd.f32 %v3251, %v3395
    %v3397 = vpop.f32.mrb[0].mxu0
    %v3398 = vpop.f32.mrb[0].mxu0
    %v3399 = vadd.f32 %v3251, %v3398
    %v3400 = vpop.f32.mrb[0].mxu0
    %3401 = vdwg.mxu0
    %v3402 = vadd.f32 %v3087, %v3396
    %v3403 = vadd.f32 %v3088, %v3399
    %s3404 = scalar_lea.vmem %s13, 2
    %v3405 = vld [vmem:[%s3404] sm:$0x1]
    %s3406 = scalar_lea.vmem %s14, 2
    %v3407 = vld [vmem:[%s3406] sm:$0x1]
    %v3408 = vsel %vm157, %v3402, 0.0
    %3409 = vadd.xlane.f32.xlu0 %v3408
    %v3410 = vpop.xlane.xlu0 %3409
    %v3411 = vsel %vm157, %v3403, 0.0
    %3412 = vadd.xlane.f32.xlu0 %v3411
    %v3413 = vpop.xlane.xlu0 %3412
    %v3414 = vmul.f32 %v3410, %v820
    %v3415 = vmul.f32 %v3413, %v820
    %v3416 = vsub.f32 %v3402, %v3414
    %v3417 = vsub.f32 %v3403, %v3415
    %v3418 = vmul.f32 %v3416, %v3416
    %v3419 = vmul.f32 %v3417, %v3417
    %v3420 = vsel %vm157, %v3418, 0.0
    %3421 = vadd.xlane.f32.xlu0 %v3420
    %v3422 = vpop.xlane.xlu0 %3421
    %v3423 = vsel %vm157, %v3419, 0.0
    %3424 = vadd.xlane.f32.xlu0 %v3423
    %v3425 = vpop.xlane.xlu0 %3424
    %v3426 = vmul.f32 %v3422, %v820
    %v3427 = vmul.f32 %v3425, %v820
    %v3428 = vadd.f32 %v3426, 1e-05
    %v3429 = vadd.f32 %v3427, 1e-05
    %v3430 = vrsqrt.pop %v3428
    %v3431 = vrsqrt.pop %v3429
    %v3432 = vmul.f32 %v3416, %v3430
    %v3433 = vmul.f32 %v3417, %v3431
    %v3435 = vlaneseq
    %v3436 = vshrl.u32 %v3435, 7
    %v3437 = vsub.s32 0, %v3436
    %v3438 = vrot.slane %v3405, %v3437
    %v3440 = vmul.f32 %v3432, %v3438
    %v3441 = vmul.f32 %v3433, %v3438
    %v3443 = vlaneseq
    %v3444 = vshrl.u32 %v3443, 7
    %v3445 = vsub.s32 0, %v3444
    %v3446 = vrot.slane %v3407, %v3445
    %v3448 = vadd.f32 %v3440, %v3446
    %v3449 = vadd.f32 %v3441, %v3446
    %v3450 = vpack.c.bf16 %v3448, %v3448
    %v3451 = vpack.c.bf16 %v3449, %v3449
    %s3452 = scalar_lea.vmem %s3, 192
    %v3453 = vld [vmem:[%s3452] sm:$0xff]
    %v3454 = vld [vmem:[%s3452 + $0x8] sm:$0xff]
    %v3455 = vld [vmem:[%s3452 + $0x10] sm:$0xff]
    %v3456 = vld [vmem:[%s3452 + $0x18] sm:$0xff]
    %v3457 = vld [vmem:[%s3452 + $0x20] sm:$0xff]
    %v3458 = vld [vmem:[%s3452 + $0x28] sm:$0xff]
    %v3459 = vld [vmem:[%s3452 + $0x30] sm:$0xff]
    %v3460 = vld [vmem:[%s3452 + $0x38] sm:$0xff]
    %s3461 = scalar_lea.vmem %s4, 6
    %v3462 = vld [vmem:[%s3461] sm:$0x3]
    %v3464 = vlaneseq
    %v3465 = vshrl.u32 %v3464, 7
    %v3466 = vsub.s32 0, %v3465
    %v3467 = vrot.slane %v3462, %v3466
    %v3468 = vlaneseq
    %v3469 = vshrl.u32 %v3468, 7
    %v3470 = vsub.s32 1, %v3469
    %v3471 = vrot.slane %v3462, %v3470
    %v3476 = vunpack.c.l.b16 %v3450
    %v3477 = vunpack.c.l.b16 %v3451
    %v3478 = vpack.c.b16 %v3477, %v3476
    %v3487 = vunpack.c.l.b16 %v3453
    %v3488 = vunpack.c.h.b16 %v3453
    %v3489 = vunpack.c.l.b16 %v3454
    %v3490 = vunpack.c.h.b16 %v3454
    %v3491 = vunpack.c.l.b16 %v3455
    %v3492 = vunpack.c.h.b16 %v3455
    %v3493 = vunpack.c.l.b16 %v3456
    %v3494 = vunpack.c.h.b16 %v3456
    %v3495 = vunpack.c.l.b16 %v3457
    %v3496 = vunpack.c.h.b16 %v3457
    %v3497 = vunpack.c.l.b16 %v3458
    %v3498 = vunpack.c.h.b16 %v3458
    %v3499 = vunpack.c.l.b16 %v3459
    %v3500 = vunpack.c.h.b16 %v3459
    %v3501 = vunpack.c.l.b16 %v3460
    %v3502 = vunpack.c.h.b16 %v3460
    %v3503 = vpack.c.b16 %v3489, %v3487
    %v3504 = vpack.c.b16 %v3490, %v3488
    %v3505 = vpack.c.b16 %v3493, %v3491
    %v3506 = vpack.c.b16 %v3494, %v3492
    %v3507 = vpack.c.b16 %v3497, %v3495
    %v3508 = vpack.c.b16 %v3498, %v3496
    %v3509 = vpack.c.b16 %v3501, %v3499
    %v3510 = vpack.c.b16 %v3502, %v3500
    %v3520 = vsel %vm157, %v3478, 0
    %3522 = vmatprep.subr.bf16.mxu0 %v3504
    %3523 = vmatpush1.bf16.msra.mxu0 %v3503
    %3524 = vmatprep.subr.bf16.mxu0 %v3506
    %3525 = vmatpush1.bf16.msra.mxu0 %v3505
    %3526 = vmatprep.subr.bf16.mxu0 %v3508
    %3527 = vmatpush1.bf16.msra.mxu0 %v3507
    %3528 = vmatprep.subr.bf16.mxu0 %v3510
    %3529 = vmatpush1.bf16.msra.mxu0 %v3509
    %3530 = vmatprep.subr.bf16.mxu0 0
    %3531 = vmatpush1.bf16.msra.mxu0 0
    %3532 = vmatprep.subr.bf16.mxu0 0
    %3533 = vmatpush1.bf16.msra.mxu0 0
    %3534 = vmatprep.subr.bf16.mxu0 0
    %3535 = vmatpush1.bf16.msra.mxu0 0
    %3536 = vmatprep.subr.bf16.mxu0 0
    %3537 = vmatpush1.bf16.msra.mxu0 0
    %3538 = vmatprep.subr.bf16.mxu0 0
    %3539 = vmatpush1.bf16.msra.mxu0 0
    %3540 = vmatprep.subr.bf16.mxu0 0
    %3541 = vmatpush1.bf16.msra.mxu0 0
    %3542 = vmatprep.subr.bf16.mxu0 0
    %3543 = vmatpush1.bf16.msra.mxu0 0
    %3544 = vmatprep.subr.bf16.mxu0 0
    %3545 = vmatpush1.bf16.msra.mxu0 0
    %3546 = vmatprep.subr.bf16.mxu0 0
    %3547 = vmatpush1.bf16.msra.mxu0 0
    %3548 = vmatprep.subr.bf16.mxu0 0
    %3549 = vmatpush1.bf16.msra.mxu0 0
    %3550 = vmatprep.subr.bf16.mxu0 0
    %3551 = vmatpush1.bf16.msra.mxu0 0
    %3552 = vmatprep.subr.bf16.mxu0 0
    %3553 = vmatpush1.bf16.msra.mxu0 0
    %3554 = vmatprep.mubr.bf16.mxu0 0
    %3555 = vmatmul.mubr.bf16.gmra.mrb[0].mxu0 %v3520
    %v3556 = vpop.f32.mrb[0].mxu0
    %v3557 = vadd.f32 %v3467, %v3556
    %v3558 = vpop.f32.mrb[0].mxu0
    %v3559 = vadd.f32 %v3471, %v3558
    %v3560 = vpop.f32.mrb[0].mxu0
    %v3561 = vadd.f32 %v3467, %v3560
    %v3562 = vpop.f32.mrb[0].mxu0
    %v3563 = vadd.f32 %v3471, %v3562
    %3564 = vdwg.mxu0
    %s3565 = scalar_lea.vmem %s5, 96
    %v3566 = vld [vmem:[%s3565] sm:$0xf]
    %v3567 = vld [vmem:[%s3565 + $0x4] sm:$0xf]
    %v3568 = vld [vmem:[%s3565 + $0x8] sm:$0xf]
    %v3569 = vld [vmem:[%s3565 + $0xc] sm:$0xf]
    %v3570 = vld [vmem:[%s3565 + $0x10] sm:$0xf]
    %v3571 = vld [vmem:[%s3565 + $0x14] sm:$0xf]
    %v3572 = vld [vmem:[%s3565 + $0x18] sm:$0xf]
    %v3573 = vld [vmem:[%s3565 + $0x1c] sm:$0xf]
    %s3574 = scalar_lea.vmem %s6, 3
    %v3575 = vld [vmem:[%s3574] sm:$0x1]
    %v3576 = vpack.c.bf16 %v3557, %v3557
    %v3577 = vpack.c.bf16 %v3559, %v3559
    %v3578 = vpack.c.bf16 %v3561, %v3561
    %v3579 = vpack.c.bf16 %v3563, %v3563
    %3581 = vrot.lane.b32.xlu0 %v3576, 64
    %v3582 = vpop.permute.xlu0 %3581
    %v3584 = vsel %vm220, %v3576, 0
    %v3587 = vsel %vm220, %v3582, 0
    %3589 = vmatprep.subr.bf16.mxu0 0
    %3590 = vmatpush1.bf16.xpose.msra.mxu0 %v3587
    %3591 = vmatprep.subr.bf16.mxu0 0
    %3592 = vmatpush1.bf16.xpose.msra.mxu0 0
    %3593 = vmatprep.subr.bf16.mxu0 0
    %3594 = vmatpush1.bf16.xpose.msra.mxu0 0
    %3595 = vmatprep.subr.bf16.mxu0 0
    %3596 = vmatpush1.bf16.xpose.msra.mxu0 0
    %3597 = vmatprep.subr.bf16.mxu0 0
    %3598 = vmatpush1.bf16.xpose.msra.mxu0 0
    %3599 = vmatprep.subr.bf16.mxu0 0
    %3600 = vmatpush1.bf16.xpose.msra.mxu0 0
    %3601 = vmatprep.subr.bf16.mxu0 0
    %3602 = vmatpush1.bf16.xpose.msra.mxu0 0
    %3603 = vmatprep.subr.bf16.mxu0 0
    %3604 = vmatpush1.bf16.xpose.msra.mxu0 0
    %3605 = vmatprep.subr.bf16.mxu0 0
    %3606 = vmatpush1.bf16.xpose.msra.mxu0 0
    %3607 = vmatprep.subr.bf16.mxu0 0
    %3608 = vmatpush1.bf16.xpose.msra.mxu0 0
    %3609 = vmatprep.subr.bf16.mxu0 0
    %3610 = vmatpush1.bf16.xpose.msra.mxu0 0
    %3611 = vmatprep.subr.bf16.mxu0 0
    %3612 = vmatpush1.bf16.xpose.msra.mxu0 0
    %3613 = vmatprep.subr.bf16.mxu0 0
    %3614 = vmatpush1.bf16.xpose.msra.mxu0 0
    %3615 = vmatprep.subr.bf16.mxu0 0
    %3616 = vmatpush1.bf16.xpose.msra.mxu0 0
    %3617 = vmatprep.subr.bf16.mxu0 0
    %3618 = vmatpush1.bf16.xpose.msra.mxu0 0
    %3619 = vmatprep.subr.bf16.mxu0 0
    %3620 = vmatpush1.bf16.xpose.msra.mxu0 0
    %3621 = vmatprep.mubr.bf16.mxu0 0
    %3622 = vmatmul.mubr.bf16.gmra.mrb[0].mxu0 %v3584
    %v3623 = vpop.f32.mrb[0].mxu0
    %v3624 = vadd.f32 0.0, %v3623
    %v3625 = vpop.f32.mrb[0].mxu0
    %v3626 = vpop.f32.mrb[0].mxu0
    %v3627 = vpop.f32.mrb[0].mxu0
    %3628 = vdwg.mxu0
    %3630 = vrot.lane.b32.xlu0 %v3578, 64
    %v3631 = vpop.permute.xlu0 %3630
    %v3633 = vsel %vm220, %v3578, 0
    %v3636 = vsel %vm220, %v3631, 0
    %3638 = vmatprep.subr.bf16.mxu0 0
    %3639 = vmatpush1.bf16.xpose.msra.mxu0 %v3636
    %3640 = vmatprep.subr.bf16.mxu0 0
    %3641 = vmatpush1.bf16.xpose.msra.mxu0 0
    %3642 = vmatprep.subr.bf16.mxu0 0
    %3643 = vmatpush1.bf16.xpose.msra.mxu0 0
    %3644 = vmatprep.subr.bf16.mxu0 0
    %3645 = vmatpush1.bf16.xpose.msra.mxu0 0
    %3646 = vmatprep.subr.bf16.mxu0 0
    %3647 = vmatpush1.bf16.xpose.msra.mxu0 0
    %3648 = vmatprep.subr.bf16.mxu0 0
    %3649 = vmatpush1.bf16.xpose.msra.mxu0 0
    %3650 = vmatprep.subr.bf16.mxu0 0
    %3651 = vmatpush1.bf16.xpose.msra.mxu0 0
    %3652 = vmatprep.subr.bf16.mxu0 0
    %3653 = vmatpush1.bf16.xpose.msra.mxu0 0
    %3654 = vmatprep.subr.bf16.mxu0 0
    %3655 = vmatpush1.bf16.xpose.msra.mxu0 0
    %3656 = vmatprep.subr.bf16.mxu0 0
    %3657 = vmatpush1.bf16.xpose.msra.mxu0 0
    %3658 = vmatprep.subr.bf16.mxu0 0
    %3659 = vmatpush1.bf16.xpose.msra.mxu0 0
    %3660 = vmatprep.subr.bf16.mxu0 0
    %3661 = vmatpush1.bf16.xpose.msra.mxu0 0
    %3662 = vmatprep.subr.bf16.mxu0 0
    %3663 = vmatpush1.bf16.xpose.msra.mxu0 0
    %3664 = vmatprep.subr.bf16.mxu0 0
    %3665 = vmatpush1.bf16.xpose.msra.mxu0 0
    %3666 = vmatprep.subr.bf16.mxu0 0
    %3667 = vmatpush1.bf16.xpose.msra.mxu0 0
    %3668 = vmatprep.subr.bf16.mxu0 0
    %3669 = vmatpush1.bf16.xpose.msra.mxu0 0
    %3670 = vmatprep.mubr.bf16.mxu0 0
    %3671 = vmatmul.mubr.bf16.gmra.mrb[0].mxu0 %v3633
    %v3672 = vpop.f32.mrb[0].mxu0
    %v3673 = vadd.f32 0.0, %v3672
    %v3674 = vpop.f32.mrb[0].mxu0
    %v3675 = vpop.f32.mrb[0].mxu0
    %v3676 = vpop.f32.mrb[0].mxu0
    %3677 = vdwg.mxu0
    %v3678 = vmul.f32 %v3624, 0.17677669
    %v3679 = vmul.f32 %v3673, 0.17677669
    %v3680 = vadd.f32 %v3678, %v321
    %v3681 = vadd.f32 %v3679, %v325
    %v3682 = vsel %vm330, %v3680, -inf
    %3683 = vmax.xlane.f32.xlu0 %v3682
    %v3684 = vpop.xlane.xlu0 %3683
    %v3685 = vsel %vm330, %v3681, -inf
    %3686 = vmax.xlane.f32.xlu0 %v3685
    %v3687 = vpop.xlane.xlu0 %3686
    %v3688 = vsub.f32 %v3680, %v3684
    %v3689 = vsub.f32 %v3681, %v3687
    %v3690 = vmul.f32 %v3688, 1.442695
    %v3691 = vpow.pop %v3690
    %v3692 = vmul.f32 %v3689, 1.442695
    %v3693 = vpow.pop %v3692
    %v3694 = vsel %vm330, %v3691, 0.0
    %3695 = vadd.xlane.f32.xlu0 %v3694
    %v3696 = vpop.xlane.xlu0 %3695
    %v3697 = vsel %vm330, %v3693, 0.0
    %3698 = vadd.xlane.f32.xlu0 %v3697
    %v3699 = vpop.xlane.xlu0 %3698
    %v3700 = vrcp.pop %v3696
    %v3701 = vrcp.pop %v3699
    %v3702 = vmul.f32 %v3691, %v3700
    %v3703 = vmul.f32 %v3693, %v3701
    %v3704 = vpack.c.bf16 %v3702, %v3702
    %v3705 = vpack.c.bf16 %v3703, %v3703
    %v3707 = vsel %vm330, %v3704, 0
    %v3710 = vsel %vm358, %v3577, 0
    %3712 = vmatprep.subr.bf16.mxu0 0
    %3713 = vmatpush1.bf16.msra.mxu0 %v3710
    %3714 = vmatprep.subr.bf16.mxu0 0
    %3715 = vmatpush1.bf16.msra.mxu0 0
    %3716 = vmatprep.subr.bf16.mxu0 0
    %3717 = vmatpush1.bf16.msra.mxu0 0
    %3718 = vmatprep.subr.bf16.mxu0 0
    %3719 = vmatpush1.bf16.msra.mxu0 0
    %3720 = vmatprep.subr.bf16.mxu0 0
    %3721 = vmatpush1.bf16.msra.mxu0 0
    %3722 = vmatprep.subr.bf16.mxu0 0
    %3723 = vmatpush1.bf16.msra.mxu0 0
    %3724 = vmatprep.subr.bf16.mxu0 0
    %3725 = vmatpush1.bf16.msra.mxu0 0
    %3726 = vmatprep.subr.bf16.mxu0 0
    %3727 = vmatpush1.bf16.msra.mxu0 0
    %3728 = vmatprep.subr.bf16.mxu0 0
    %3729 = vmatpush1.bf16.msra.mxu0 0
    %3730 = vmatprep.subr.bf16.mxu0 0
    %3731 = vmatpush1.bf16.msra.mxu0 0
    %3732 = vmatprep.subr.bf16.mxu0 0
    %3733 = vmatpush1.bf16.msra.mxu0 0
    %3734 = vmatprep.subr.bf16.mxu0 0
    %3735 = vmatpush1.bf16.msra.mxu0 0
    %3736 = vmatprep.subr.bf16.mxu0 0
    %3737 = vmatpush1.bf16.msra.mxu0 0
    %3738 = vmatprep.subr.bf16.mxu0 0
    %3739 = vmatpush1.bf16.msra.mxu0 0
    %3740 = vmatprep.subr.bf16.mxu0 0
    %3741 = vmatpush1.bf16.msra.mxu0 0
    %3742 = vmatprep.subr.bf16.mxu0 0
    %3743 = vmatpush1.bf16.msra.mxu0 0
    %3744 = vmatprep.mubr.bf16.mxu0 0
    %3745 = vmatmul.mubr.bf16.gmra.mrb[0].mxu0 %v3707
    %v3746 = vpop.f32.mrb[0].mxu0
    %v3747 = vadd.f32 0.0, %v3746
    %v3748 = vpop.f32.mrb[0].mxu0
    %v3749 = vpop.f32.mrb[0].mxu0
    %v3750 = vpop.f32.mrb[0].mxu0
    %3751 = vdwg.mxu0
    %v3753 = vsel %vm330, %v3705, 0
    %v3756 = vsel %vm358, %v3579, 0
    %3758 = vmatprep.subr.bf16.mxu0 0
    %3759 = vmatpush1.bf16.msra.mxu0 %v3756
    %3760 = vmatprep.subr.bf16.mxu0 0
    %3761 = vmatpush1.bf16.msra.mxu0 0
    %3762 = vmatprep.subr.bf16.mxu0 0
    %3763 = vmatpush1.bf16.msra.mxu0 0
    %3764 = vmatprep.subr.bf16.mxu0 0
    %3765 = vmatpush1.bf16.msra.mxu0 0
    %3766 = vmatprep.subr.bf16.mxu0 0
    %3767 = vmatpush1.bf16.msra.mxu0 0
    %3768 = vmatprep.subr.bf16.mxu0 0
    %3769 = vmatpush1.bf16.msra.mxu0 0
    %3770 = vmatprep.subr.bf16.mxu0 0
    %3771 = vmatpush1.bf16.msra.mxu0 0
    %3772 = vmatprep.subr.bf16.mxu0 0
    %3773 = vmatpush1.bf16.msra.mxu0 0
    %3774 = vmatprep.subr.bf16.mxu0 0
    %3775 = vmatpush1.bf16.msra.mxu0 0
    %3776 = vmatprep.subr.bf16.mxu0 0
    %3777 = vmatpush1.bf16.msra.mxu0 0
    %3778 = vmatprep.subr.bf16.mxu0 0
    %3779 = vmatpush1.bf16.msra.mxu0 0
    %3780 = vmatprep.subr.bf16.mxu0 0
    %3781 = vmatpush1.bf16.msra.mxu0 0
    %3782 = vmatprep.subr.bf16.mxu0 0
    %3783 = vmatpush1.bf16.msra.mxu0 0
    %3784 = vmatprep.subr.bf16.mxu0 0
    %3785 = vmatpush1.bf16.msra.mxu0 0
    %3786 = vmatprep.subr.bf16.mxu0 0
    %3787 = vmatpush1.bf16.msra.mxu0 0
    %3788 = vmatprep.subr.bf16.mxu0 0
    %3789 = vmatpush1.bf16.msra.mxu0 0
    %3790 = vmatprep.mubr.bf16.mxu0 0
    %3791 = vmatmul.mubr.bf16.gmra.mrb[0].mxu0 %v3753
    %v3792 = vpop.f32.mrb[0].mxu0
    %v3793 = vadd.f32 0.0, %v3792
    %v3794 = vpop.f32.mrb[0].mxu0
    %v3795 = vpop.f32.mrb[0].mxu0
    %v3796 = vpop.f32.mrb[0].mxu0
    %3797 = vdwg.mxu0
    %v3798 = vpack.c.bf16 %v3747, %v3747
    %v3799 = vpack.c.bf16 %v3793, %v3793
    %v3802 = vunpack.c.l.b16 %v3798
    %v3803 = vunpack.c.l.b16 %v3799
    %v3804 = vpack.c.b16 %v3803, %v3802
    %v3809 = vunpack.c.l.b16 %v3566
    %v3810 = vunpack.c.l.b16 %v3567
    %v3811 = vunpack.c.l.b16 %v3568
    %v3812 = vunpack.c.l.b16 %v3569
    %v3813 = vpack.c.b16 %v3810, %v3809
    %v3814 = vpack.c.b16 %v3812, %v3811
    %v3818 = vsel %vm220, %v3804, 0
    %3820 = vmatprep.subr.bf16.mxu0 0
    %3821 = vmatpush1.bf16.msra.mxu0 %v3813
    %3822 = vmatprep.subr.bf16.mxu0 0
    %3823 = vmatpush1.bf16.msra.mxu0 %v3814
    %3824 = vmatprep.subr.bf16.mxu0 0
    %3825 = vmatpush1.bf16.msra.mxu0 0
    %3826 = vmatprep.subr.bf16.mxu0 0
    %3827 = vmatpush1.bf16.msra.mxu0 0
    %3828 = vmatprep.subr.bf16.mxu0 0
    %3829 = vmatpush1.bf16.msra.mxu0 0
    %3830 = vmatprep.subr.bf16.mxu0 0
    %3831 = vmatpush1.bf16.msra.mxu0 0
    %3832 = vmatprep.subr.bf16.mxu0 0
    %3833 = vmatpush1.bf16.msra.mxu0 0
    %3834 = vmatprep.subr.bf16.mxu0 0
    %3835 = vmatpush1.bf16.msra.mxu0 0
    %3836 = vmatprep.subr.bf16.mxu0 0
    %3837 = vmatpush1.bf16.msra.mxu0 0
    %3838 = vmatprep.subr.bf16.mxu0 0
    %3839 = vmatpush1.bf16.msra.mxu0 0
    %3840 = vmatprep.subr.bf16.mxu0 0
    %3841 = vmatpush1.bf16.msra.mxu0 0
    %3842 = vmatprep.subr.bf16.mxu0 0
    %3843 = vmatpush1.bf16.msra.mxu0 0
    %3844 = vmatprep.subr.bf16.mxu0 0
    %3845 = vmatpush1.bf16.msra.mxu0 0
    %3846 = vmatprep.subr.bf16.mxu0 0
    %3847 = vmatpush1.bf16.msra.mxu0 0
    %3848 = vmatprep.subr.bf16.mxu0 0
    %3849 = vmatpush1.bf16.msra.mxu0 0
    %3850 = vmatprep.subr.bf16.mxu0 0
    %3851 = vmatpush1.bf16.msra.mxu0 0
    %3852 = vmatprep.mubr.bf16.mxu0 0
    %3853 = vmatmul.mubr.bf16.gmra.mrb[0].mxu0 %v3818
    %v3854 = vpop.f32.mrb[0].mxu0
    %v3855 = vadd.f32 0.0, %v3854
    %v3856 = vpop.f32.mrb[0].mxu0
    %v3857 = vpop.f32.mrb[0].mxu0
    %v3858 = vadd.f32 0.0, %v3857
    %v3859 = vpop.f32.mrb[0].mxu0
    %3860 = vdwg.mxu0
    %v3862 = vlaneseq
    %v3863 = vshrl.u32 %v3862, 7
    %v3864 = vsub.s32 0, %v3863
    %v3865 = vrot.slane %v3575, %v3864
    %v3867 = vadd.f32 %v3865, %v3855
    %v3868 = vadd.f32 %v3865, %v3858
    %3869 = vrot.lane.b32.xlu0 %v3576, 96
    %v3870 = vpop.permute.xlu0 %3869
    %3871 = vrot.lane.b32.xlu0 %v3576, 32
    %v3872 = vpop.permute.xlu0 %3871
    %v3874 = vsel %vm220, %v3870, 0
    %v3877 = vsel %vm220, %v3872, 0
    %3879 = vmatprep.subr.bf16.mxu0 0
    %3880 = vmatpush1.bf16.xpose.msra.mxu0 %v3877
    %3881 = vmatprep.subr.bf16.mxu0 0
    %3882 = vmatpush1.bf16.xpose.msra.mxu0 0
    %3883 = vmatprep.subr.bf16.mxu0 0
    %3884 = vmatpush1.bf16.xpose.msra.mxu0 0
    %3885 = vmatprep.subr.bf16.mxu0 0
    %3886 = vmatpush1.bf16.xpose.msra.mxu0 0
    %3887 = vmatprep.subr.bf16.mxu0 0
    %3888 = vmatpush1.bf16.xpose.msra.mxu0 0
    %3889 = vmatprep.subr.bf16.mxu0 0
    %3890 = vmatpush1.bf16.xpose.msra.mxu0 0
    %3891 = vmatprep.subr.bf16.mxu0 0
    %3892 = vmatpush1.bf16.xpose.msra.mxu0 0
    %3893 = vmatprep.subr.bf16.mxu0 0
    %3894 = vmatpush1.bf16.xpose.msra.mxu0 0
    %3895 = vmatprep.subr.bf16.mxu0 0
    %3896 = vmatpush1.bf16.xpose.msra.mxu0 0
    %3897 = vmatprep.subr.bf16.mxu0 0
    %3898 = vmatpush1.bf16.xpose.msra.mxu0 0
    %3899 = vmatprep.subr.bf16.mxu0 0
    %3900 = vmatpush1.bf16.xpose.msra.mxu0 0
    %3901 = vmatprep.subr.bf16.mxu0 0
    %3902 = vmatpush1.bf16.xpose.msra.mxu0 0
    %3903 = vmatprep.subr.bf16.mxu0 0
    %3904 = vmatpush1.bf16.xpose.msra.mxu0 0
    %3905 = vmatprep.subr.bf16.mxu0 0
    %3906 = vmatpush1.bf16.xpose.msra.mxu0 0
    %3907 = vmatprep.subr.bf16.mxu0 0
    %3908 = vmatpush1.bf16.xpose.msra.mxu0 0
    %3909 = vmatprep.subr.bf16.mxu0 0
    %3910 = vmatpush1.bf16.xpose.msra.mxu0 0
    %3911 = vmatprep.mubr.bf16.mxu0 0
    %3912 = vmatmul.mubr.bf16.gmra.mrb[0].mxu0 %v3874
    %v3913 = vpop.f32.mrb[0].mxu0
    %v3914 = vadd.f32 0.0, %v3913
    %v3915 = vpop.f32.mrb[0].mxu0
    %v3916 = vpop.f32.mrb[0].mxu0
    %v3917 = vpop.f32.mrb[0].mxu0
    %3918 = vdwg.mxu0
    %3919 = vrot.lane.b32.xlu0 %v3578, 96
    %v3920 = vpop.permute.xlu0 %3919
    %3921 = vrot.lane.b32.xlu0 %v3578, 32
    %v3922 = vpop.permute.xlu0 %3921
    %v3924 = vsel %vm220, %v3920, 0
    %v3927 = vsel %vm220, %v3922, 0
    %3929 = vmatprep.subr.bf16.mxu0 0
    %3930 = vmatpush1.bf16.xpose.msra.mxu0 %v3927
    %3931 = vmatprep.subr.bf16.mxu0 0
    %3932 = vmatpush1.bf16.xpose.msra.mxu0 0
    %3933 = vmatprep.subr.bf16.mxu0 0
    %3934 = vmatpush1.bf16.xpose.msra.mxu0 0
    %3935 = vmatprep.subr.bf16.mxu0 0
    %3936 = vmatpush1.bf16.xpose.msra.mxu0 0
    %3937 = vmatprep.subr.bf16.mxu0 0
    %3938 = vmatpush1.bf16.xpose.msra.mxu0 0
    %3939 = vmatprep.subr.bf16.mxu0 0
    %3940 = vmatpush1.bf16.xpose.msra.mxu0 0
    %3941 = vmatprep.subr.bf16.mxu0 0
    %3942 = vmatpush1.bf16.xpose.msra.mxu0 0
    %3943 = vmatprep.subr.bf16.mxu0 0
    %3944 = vmatpush1.bf16.xpose.msra.mxu0 0
    %3945 = vmatprep.subr.bf16.mxu0 0
    %3946 = vmatpush1.bf16.xpose.msra.mxu0 0
    %3947 = vmatprep.subr.bf16.mxu0 0
    %3948 = vmatpush1.bf16.xpose.msra.mxu0 0
    %3949 = vmatprep.subr.bf16.mxu0 0
    %3950 = vmatpush1.bf16.xpose.msra.mxu0 0
    %3951 = vmatprep.subr.bf16.mxu0 0
    %3952 = vmatpush1.bf16.xpose.msra.mxu0 0
    %3953 = vmatprep.subr.bf16.mxu0 0
    %3954 = vmatpush1.bf16.xpose.msra.mxu0 0
    %3955 = vmatprep.subr.bf16.mxu0 0
    %3956 = vmatpush1.bf16.xpose.msra.mxu0 0
    %3957 = vmatprep.subr.bf16.mxu0 0
    %3958 = vmatpush1.bf16.xpose.msra.mxu0 0
    %3959 = vmatprep.subr.bf16.mxu0 0
    %3960 = vmatpush1.bf16.xpose.msra.mxu0 0
    %3961 = vmatprep.mubr.bf16.mxu0 0
    %3962 = vmatmul.mubr.bf16.gmra.mrb[0].mxu0 %v3924
    %v3963 = vpop.f32.mrb[0].mxu0
    %v3964 = vadd.f32 0.0, %v3963
    %v3965 = vpop.f32.mrb[0].mxu0
    %v3966 = vpop.f32.mrb[0].mxu0
    %v3967 = vpop.f32.mrb[0].mxu0
    %3968 = vdwg.mxu0
    %v3969 = vmul.f32 %v3914, 0.17677669
    %v3970 = vmul.f32 %v3964, 0.17677669
    %v3971 = vadd.f32 %v3969, %v321
    %v3972 = vadd.f32 %v3970, %v325
    %v3973 = vsel %vm330, %v3971, -inf
    %3974 = vmax.xlane.f32.xlu0 %v3973
    %v3975 = vpop.xlane.xlu0 %3974
    %v3976 = vsel %vm330, %v3972, -inf
    %3977 = vmax.xlane.f32.xlu0 %v3976
    %v3978 = vpop.xlane.xlu0 %3977
    %v3979 = vsub.f32 %v3971, %v3975
    %v3980 = vsub.f32 %v3972, %v3978
    %v3981 = vmul.f32 %v3979, 1.442695
    %v3982 = vpow.pop %v3981
    %v3983 = vmul.f32 %v3980, 1.442695
    %v3984 = vpow.pop %v3983
    %v3985 = vsel %vm330, %v3982, 0.0
    %3986 = vadd.xlane.f32.xlu0 %v3985
    %v3987 = vpop.xlane.xlu0 %3986
    %v3988 = vsel %vm330, %v3984, 0.0
    %3989 = vadd.xlane.f32.xlu0 %v3988
    %v3990 = vpop.xlane.xlu0 %3989
    %v3991 = vrcp.pop %v3987
    %v3992 = vrcp.pop %v3990
    %v3993 = vmul.f32 %v3982, %v3991
    %v3994 = vmul.f32 %v3984, %v3992
    %v3995 = vpack.c.bf16 %v3993, %v3993
    %v3996 = vpack.c.bf16 %v3994, %v3994
    %3998 = vrot.lane.b32.xlu0 %v3577, 96
    %v3999 = vpop.permute.xlu0 %3998
    %v4001 = vsel %vm330, %v3995, 0
    %v4004 = vsel %vm358, %v3999, 0
    %4006 = vmatprep.subr.bf16.mxu0 0
    %4007 = vmatpush1.bf16.msra.mxu0 %v4004
    %4008 = vmatprep.subr.bf16.mxu0 0
    %4009 = vmatpush1.bf16.msra.mxu0 0
    %4010 = vmatprep.subr.bf16.mxu0 0
    %4011 = vmatpush1.bf16.msra.mxu0 0
    %4012 = vmatprep.subr.bf16.mxu0 0
    %4013 = vmatpush1.bf16.msra.mxu0 0
    %4014 = vmatprep.subr.bf16.mxu0 0
    %4015 = vmatpush1.bf16.msra.mxu0 0
    %4016 = vmatprep.subr.bf16.mxu0 0
    %4017 = vmatpush1.bf16.msra.mxu0 0
    %4018 = vmatprep.subr.bf16.mxu0 0
    %4019 = vmatpush1.bf16.msra.mxu0 0
    %4020 = vmatprep.subr.bf16.mxu0 0
    %4021 = vmatpush1.bf16.msra.mxu0 0
    %4022 = vmatprep.subr.bf16.mxu0 0
    %4023 = vmatpush1.bf16.msra.mxu0 0
    %4024 = vmatprep.subr.bf16.mxu0 0
    %4025 = vmatpush1.bf16.msra.mxu0 0
    %4026 = vmatprep.subr.bf16.mxu0 0
    %4027 = vmatpush1.bf16.msra.mxu0 0
    %4028 = vmatprep.subr.bf16.mxu0 0
    %4029 = vmatpush1.bf16.msra.mxu0 0
    %4030 = vmatprep.subr.bf16.mxu0 0
    %4031 = vmatpush1.bf16.msra.mxu0 0
    %4032 = vmatprep.subr.bf16.mxu0 0
    %4033 = vmatpush1.bf16.msra.mxu0 0
    %4034 = vmatprep.subr.bf16.mxu0 0
    %4035 = vmatpush1.bf16.msra.mxu0 0
    %4036 = vmatprep.subr.bf16.mxu0 0
    %4037 = vmatpush1.bf16.msra.mxu0 0
    %4038 = vmatprep.mubr.bf16.mxu0 0
    %4039 = vmatmul.mubr.bf16.gmra.mrb[0].mxu0 %v4001
    %v4040 = vpop.f32.mrb[0].mxu0
    %v4041 = vadd.f32 0.0, %v4040
    %v4042 = vpop.f32.mrb[0].mxu0
    %v4043 = vpop.f32.mrb[0].mxu0
    %v4044 = vpop.f32.mrb[0].mxu0
    %4045 = vdwg.mxu0
    %4047 = vrot.lane.b32.xlu0 %v3579, 96
    %v4048 = vpop.permute.xlu0 %4047
    %v4050 = vsel %vm330, %v3996, 0
    %v4053 = vsel %vm358, %v4048, 0
    %4055 = vmatprep.subr.bf16.mxu0 0
    %4056 = vmatpush1.bf16.msra.mxu0 %v4053
    %4057 = vmatprep.subr.bf16.mxu0 0
    %4058 = vmatpush1.bf16.msra.mxu0 0
    %4059 = vmatprep.subr.bf16.mxu0 0
    %4060 = vmatpush1.bf16.msra.mxu0 0
    %4061 = vmatprep.subr.bf16.mxu0 0
    %4062 = vmatpush1.bf16.msra.mxu0 0
    %4063 = vmatprep.subr.bf16.mxu0 0
    %4064 = vmatpush1.bf16.msra.mxu0 0
    %4065 = vmatprep.subr.bf16.mxu0 0
    %4066 = vmatpush1.bf16.msra.mxu0 0
    %4067 = vmatprep.subr.bf16.mxu0 0
    %4068 = vmatpush1.bf16.msra.mxu0 0
    %4069 = vmatprep.subr.bf16.mxu0 0
    %4070 = vmatpush1.bf16.msra.mxu0 0
    %4071 = vmatprep.subr.bf16.mxu0 0
    %4072 = vmatpush1.bf16.msra.mxu0 0
    %4073 = vmatprep.subr.bf16.mxu0 0
    %4074 = vmatpush1.bf16.msra.mxu0 0
    %4075 = vmatprep.subr.bf16.mxu0 0
    %4076 = vmatpush1.bf16.msra.mxu0 0
    %4077 = vmatprep.subr.bf16.mxu0 0
    %4078 = vmatpush1.bf16.msra.mxu0 0
    %4079 = vmatprep.subr.bf16.mxu0 0
    %4080 = vmatpush1.bf16.msra.mxu0 0
    %4081 = vmatprep.subr.bf16.mxu0 0
    %4082 = vmatpush1.bf16.msra.mxu0 0
    %4083 = vmatprep.subr.bf16.mxu0 0
    %4084 = vmatpush1.bf16.msra.mxu0 0
    %4085 = vmatprep.subr.bf16.mxu0 0
    %4086 = vmatpush1.bf16.msra.mxu0 0
    %4087 = vmatprep.mubr.bf16.mxu0 0
    %4088 = vmatmul.mubr.bf16.gmra.mrb[0].mxu0 %v4050
    %v4089 = vpop.f32.mrb[0].mxu0
    %v4090 = vadd.f32 0.0, %v4089
    %v4091 = vpop.f32.mrb[0].mxu0
    %v4092 = vpop.f32.mrb[0].mxu0
    %v4093 = vpop.f32.mrb[0].mxu0
    %4094 = vdwg.mxu0
    %v4095 = vpack.c.bf16 %v4041, %v4041
    %v4096 = vpack.c.bf16 %v4090, %v4090
    %v4099 = vunpack.c.l.b16 %v4095
    %v4100 = vunpack.c.l.b16 %v4096
    %v4101 = vpack.c.b16 %v4100, %v4099
    %v4106 = vunpack.c.l.b16 %v3570
    %v4107 = vunpack.c.l.b16 %v3571
    %v4108 = vunpack.c.l.b16 %v3572
    %v4109 = vunpack.c.l.b16 %v3573
    %v4110 = vpack.c.b16 %v4107, %v4106
    %v4111 = vpack.c.b16 %v4109, %v4108
    %v4115 = vsel %vm220, %v4101, 0
    %4117 = vmatprep.subr.bf16.mxu0 0
    %4118 = vmatpush1.bf16.msra.mxu0 %v4110
    %4119 = vmatprep.subr.bf16.mxu0 0
    %4120 = vmatpush1.bf16.msra.mxu0 %v4111
    %4121 = vmatprep.subr.bf16.mxu0 0
    %4122 = vmatpush1.bf16.msra.mxu0 0
    %4123 = vmatprep.subr.bf16.mxu0 0
    %4124 = vmatpush1.bf16.msra.mxu0 0
    %4125 = vmatprep.subr.bf16.mxu0 0
    %4126 = vmatpush1.bf16.msra.mxu0 0
    %4127 = vmatprep.subr.bf16.mxu0 0
    %4128 = vmatpush1.bf16.msra.mxu0 0
    %4129 = vmatprep.subr.bf16.mxu0 0
    %4130 = vmatpush1.bf16.msra.mxu0 0
    %4131 = vmatprep.subr.bf16.mxu0 0
    %4132 = vmatpush1.bf16.msra.mxu0 0
    %4133 = vmatprep.subr.bf16.mxu0 0
    %4134 = vmatpush1.bf16.msra.mxu0 0
    %4135 = vmatprep.subr.bf16.mxu0 0
    %4136 = vmatpush1.bf16.msra.mxu0 0
    %4137 = vmatprep.subr.bf16.mxu0 0
    %4138 = vmatpush1.bf16.msra.mxu0 0
    %4139 = vmatprep.subr.bf16.mxu0 0
    %4140 = vmatpush1.bf16.msra.mxu0 0
    %4141 = vmatprep.subr.bf16.mxu0 0
    %4142 = vmatpush1.bf16.msra.mxu0 0
    %4143 = vmatprep.subr.bf16.mxu0 0
    %4144 = vmatpush1.bf16.msra.mxu0 0
    %4145 = vmatprep.subr.bf16.mxu0 0
    %4146 = vmatpush1.bf16.msra.mxu0 0
    %4147 = vmatprep.subr.bf16.mxu0 0
    %4148 = vmatpush1.bf16.msra.mxu0 0
    %4149 = vmatprep.mubr.bf16.mxu0 0
    %4150 = vmatmul.mubr.bf16.gmra.mrb[0].mxu0 %v4115
    %v4151 = vpop.f32.mrb[0].mxu0
    %v4152 = vadd.f32 0.0, %v4151
    %v4153 = vpop.f32.mrb[0].mxu0
    %v4154 = vpop.f32.mrb[0].mxu0
    %v4155 = vadd.f32 0.0, %v4154
    %v4156 = vpop.f32.mrb[0].mxu0
    %4157 = vdwg.mxu0
    %v4158 = vadd.f32 %v3867, %v4152
    %v4159 = vadd.f32 %v3868, %v4155
    %v4160 = vadd.f32 %v3448, %v4158
    %v4161 = vadd.f32 %v3449, %v4159
    %s4162 = scalar_lea.vmem %s7, 3
    %v4163 = vld [vmem:[%s4162] sm:$0x1]
    %s4164 = scalar_lea.vmem %s8, 3
    %v4165 = vld [vmem:[%s4164] sm:$0x1]
    %v4166 = vsel %vm157, %v4160, 0.0
    %4167 = vadd.xlane.f32.xlu0 %v4166
    %v4168 = vpop.xlane.xlu0 %4167
    %v4169 = vsel %vm157, %v4161, 0.0
    %4170 = vadd.xlane.f32.xlu0 %v4169
    %v4171 = vpop.xlane.xlu0 %4170
    %v4172 = vmul.f32 %v4168, %v820
    %v4173 = vmul.f32 %v4171, %v820
    %v4174 = vsub.f32 %v4160, %v4172
    %v4175 = vsub.f32 %v4161, %v4173
    %v4176 = vmul.f32 %v4174, %v4174
    %v4177 = vmul.f32 %v4175, %v4175
    %v4178 = vsel %vm157, %v4176, 0.0
    %4179 = vadd.xlane.f32.xlu0 %v4178
    %v4180 = vpop.xlane.xlu0 %4179
    %v4181 = vsel %vm157, %v4177, 0.0
    %4182 = vadd.xlane.f32.xlu0 %v4181
    %v4183 = vpop.xlane.xlu0 %4182
    %v4184 = vmul.f32 %v4180, %v820
    %v4185 = vmul.f32 %v4183, %v820
    %v4186 = vadd.f32 %v4184, 1e-05
    %v4187 = vadd.f32 %v4185, 1e-05
    %v4188 = vrsqrt.pop %v4186
    %v4189 = vrsqrt.pop %v4187
    %v4190 = vmul.f32 %v4174, %v4188
    %v4191 = vmul.f32 %v4175, %v4189
    %v4193 = vlaneseq
    %v4194 = vshrl.u32 %v4193, 7
    %v4195 = vsub.s32 0, %v4194
    %v4196 = vrot.slane %v4163, %v4195
    %v4198 = vmul.f32 %v4190, %v4196
    %v4199 = vmul.f32 %v4191, %v4196
    %v4201 = vlaneseq
    %v4202 = vshrl.u32 %v4201, 7
    %v4203 = vsub.s32 0, %v4202
    %v4204 = vrot.slane %v4165, %v4203
    %v4206 = vadd.f32 %v4198, %v4204
    %v4207 = vadd.f32 %v4199, %v4204
    %v4208 = vpack.c.bf16 %v4206, %v4206
    %v4209 = vpack.c.bf16 %v4207, %v4207
    %s4210 = scalar_lea.vmem %s9, 192
    %v4211 = vld [vmem:[%s4210] sm:$0xff]
    %v4212 = vld [vmem:[%s4210 + $0x8] sm:$0xff]
    %v4213 = vld [vmem:[%s4210 + $0x10] sm:$0xff]
    %v4214 = vld [vmem:[%s4210 + $0x18] sm:$0xff]
    %v4215 = vld [vmem:[%s4210 + $0x20] sm:$0xff]
    %v4216 = vld [vmem:[%s4210 + $0x28] sm:$0xff]
    %v4217 = vld [vmem:[%s4210 + $0x30] sm:$0xff]
    %v4218 = vld [vmem:[%s4210 + $0x38] sm:$0xff]
    %s4219 = scalar_lea.vmem %s10, 6
    %v4220 = vld [vmem:[%s4219] sm:$0x3]
    %v4222 = vlaneseq
    %v4223 = vshrl.u32 %v4222, 7
    %v4224 = vsub.s32 0, %v4223
    %v4225 = vrot.slane %v4220, %v4224
    %v4226 = vlaneseq
    %v4227 = vshrl.u32 %v4226, 7
    %v4228 = vsub.s32 1, %v4227
    %v4229 = vrot.slane %v4220, %v4228
    %v4234 = vunpack.c.l.b16 %v4208
    %v4235 = vunpack.c.l.b16 %v4209
    %v4236 = vpack.c.b16 %v4235, %v4234
    %v4245 = vunpack.c.l.b16 %v4211
    %v4246 = vunpack.c.h.b16 %v4211
    %v4247 = vunpack.c.l.b16 %v4212
    %v4248 = vunpack.c.h.b16 %v4212
    %v4249 = vunpack.c.l.b16 %v4213
    %v4250 = vunpack.c.h.b16 %v4213
    %v4251 = vunpack.c.l.b16 %v4214
    %v4252 = vunpack.c.h.b16 %v4214
    %v4253 = vunpack.c.l.b16 %v4215
    %v4254 = vunpack.c.h.b16 %v4215
    %v4255 = vunpack.c.l.b16 %v4216
    %v4256 = vunpack.c.h.b16 %v4216
    %v4257 = vunpack.c.l.b16 %v4217
    %v4258 = vunpack.c.h.b16 %v4217
    %v4259 = vunpack.c.l.b16 %v4218
    %v4260 = vunpack.c.h.b16 %v4218
    %v4261 = vpack.c.b16 %v4247, %v4245
    %v4262 = vpack.c.b16 %v4248, %v4246
    %v4263 = vpack.c.b16 %v4251, %v4249
    %v4264 = vpack.c.b16 %v4252, %v4250
    %v4265 = vpack.c.b16 %v4255, %v4253
    %v4266 = vpack.c.b16 %v4256, %v4254
    %v4267 = vpack.c.b16 %v4259, %v4257
    %v4268 = vpack.c.b16 %v4260, %v4258
    %v4278 = vsel %vm157, %v4236, 0
    %4280 = vmatprep.subr.bf16.mxu0 %v4262
    %4281 = vmatpush1.bf16.msra.mxu0 %v4261
    %4282 = vmatprep.subr.bf16.mxu0 %v4264
    %4283 = vmatpush1.bf16.msra.mxu0 %v4263
    %4284 = vmatprep.subr.bf16.mxu0 %v4266
    %4285 = vmatpush1.bf16.msra.mxu0 %v4265
    %4286 = vmatprep.subr.bf16.mxu0 %v4268
    %4287 = vmatpush1.bf16.msra.mxu0 %v4267
    %4288 = vmatprep.subr.bf16.mxu0 0
    %4289 = vmatpush1.bf16.msra.mxu0 0
    %4290 = vmatprep.subr.bf16.mxu0 0
    %4291 = vmatpush1.bf16.msra.mxu0 0
    %4292 = vmatprep.subr.bf16.mxu0 0
    %4293 = vmatpush1.bf16.msra.mxu0 0
    %4294 = vmatprep.subr.bf16.mxu0 0
    %4295 = vmatpush1.bf16.msra.mxu0 0
    %4296 = vmatprep.subr.bf16.mxu0 0
    %4297 = vmatpush1.bf16.msra.mxu0 0
    %4298 = vmatprep.subr.bf16.mxu0 0
    %4299 = vmatpush1.bf16.msra.mxu0 0
    %4300 = vmatprep.subr.bf16.mxu0 0
    %4301 = vmatpush1.bf16.msra.mxu0 0
    %4302 = vmatprep.subr.bf16.mxu0 0
    %4303 = vmatpush1.bf16.msra.mxu0 0
    %4304 = vmatprep.subr.bf16.mxu0 0
    %4305 = vmatpush1.bf16.msra.mxu0 0
    %4306 = vmatprep.subr.bf16.mxu0 0
    %4307 = vmatpush1.bf16.msra.mxu0 0
    %4308 = vmatprep.subr.bf16.mxu0 0
    %4309 = vmatpush1.bf16.msra.mxu0 0
    %4310 = vmatprep.subr.bf16.mxu0 0
    %4311 = vmatpush1.bf16.msra.mxu0 0
    %4312 = vmatprep.mubr.bf16.mxu0 0
    %4313 = vmatmul.mubr.bf16.gmra.mrb[0].mxu0 %v4278
    %v4314 = vpop.f32.mrb[0].mxu0
    %v4315 = vadd.f32 %v4225, %v4314
    %v4316 = vpop.f32.mrb[0].mxu0
    %v4317 = vadd.f32 %v4229, %v4316
    %v4318 = vpop.f32.mrb[0].mxu0
    %v4319 = vadd.f32 %v4225, %v4318
    %v4320 = vpop.f32.mrb[0].mxu0
    %v4321 = vadd.f32 %v4229, %v4320
    %4322 = vdwg.mxu0
    %v4323 = vmax.f32 %v4315, 0.0
    %v4324 = vmax.f32 %v4317, 0.0
    %v4325 = vmax.f32 %v4319, 0.0
    %v4326 = vmax.f32 %v4321, 0.0
    %v4327 = vpack.c.bf16 %v4323, %v4323
    %v4328 = vpack.c.bf16 %v4324, %v4324
    %v4329 = vpack.c.bf16 %v4325, %v4325
    %v4330 = vpack.c.bf16 %v4326, %v4326
    %s4331 = scalar_lea.vmem %s11, 384
    %v4332 = vld [vmem:[%s4331] sm:$0xf]
    %v4333 = vld [vmem:[%s4331 + $0x4] sm:$0xf]
    %v4334 = vld [vmem:[%s4331 + $0x8] sm:$0xf]
    %v4335 = vld [vmem:[%s4331 + $0xc] sm:$0xf]
    %v4336 = vld [vmem:[%s4331 + $0x10] sm:$0xf]
    %v4337 = vld [vmem:[%s4331 + $0x14] sm:$0xf]
    %v4338 = vld [vmem:[%s4331 + $0x18] sm:$0xf]
    %v4339 = vld [vmem:[%s4331 + $0x1c] sm:$0xf]
    %v4340 = vld [vmem:[%s4331 + $0x20] sm:$0xf]
    %v4341 = vld [vmem:[%s4331 + $0x24] sm:$0xf]
    %v4342 = vld [vmem:[%s4331 + $0x28] sm:$0xf]
    %v4343 = vld [vmem:[%s4331 + $0x2c] sm:$0xf]
    %v4344 = vld [vmem:[%s4331 + $0x30] sm:$0xf]
    %v4345 = vld [vmem:[%s4331 + $0x34] sm:$0xf]
    %v4346 = vld [vmem:[%s4331 + $0x38] sm:$0xf]
    %v4347 = vld [vmem:[%s4331 + $0x3c] sm:$0xf]
    %v4348 = vld [vmem:[%s4331 + $0x40] sm:$0xf]
    %v4349 = vld [vmem:[%s4331 + $0x44] sm:$0xf]
    %v4350 = vld [vmem:[%s4331 + $0x48] sm:$0xf]
    %v4351 = vld [vmem:[%s4331 + $0x4c] sm:$0xf]
    %v4352 = vld [vmem:[%s4331 + $0x50] sm:$0xf]
    %v4353 = vld [vmem:[%s4331 + $0x54] sm:$0xf]
    %v4354 = vld [vmem:[%s4331 + $0x58] sm:$0xf]
    %v4355 = vld [vmem:[%s4331 + $0x5c] sm:$0xf]
    %v4356 = vld [vmem:[%s4331 + $0x60] sm:$0xf]
    %v4357 = vld [vmem:[%s4331 + $0x64] sm:$0xf]
    %v4358 = vld [vmem:[%s4331 + $0x68] sm:$0xf]
    %v4359 = vld [vmem:[%s4331 + $0x6c] sm:$0xf]
    %v4360 = vld [vmem:[%s4331 + $0x70] sm:$0xf]
    %v4361 = vld [vmem:[%s4331 + $0x74] sm:$0xf]
    %v4362 = vld [vmem:[%s4331 + $0x78] sm:$0xf]
    %v4363 = vld [vmem:[%s4331 + $0x7c] sm:$0xf]
    %s4364 = scalar_lea.vmem %s12, 3
    %v4365 = vld [vmem:[%s4364] sm:$0x1]
    %v4367 = vlaneseq
    %v4368 = vshrl.u32 %v4367, 7
    %v4369 = vsub.s32 0, %v4368
    %v4370 = vrot.slane %v4365, %v4369
    %v4376 = vunpack.c.l.b16 %v4327
    %v4377 = vunpack.c.l.b16 %v4328
    %v4378 = vunpack.c.l.b16 %v4329
    %v4379 = vunpack.c.l.b16 %v4330
    %v4380 = vpack.c.b16 %v4378, %v4376
    %v4381 = vpack.c.b16 %v4379, %v4377
    %v4416 = vunpack.c.l.b16 %v4332
    %v4417 = vunpack.c.l.b16 %v4333
    %v4418 = vunpack.c.l.b16 %v4334
    %v4419 = vunpack.c.l.b16 %v4335
    %v4420 = vunpack.c.l.b16 %v4336
    %v4421 = vunpack.c.l.b16 %v4337
    %v4422 = vunpack.c.l.b16 %v4338
    %v4423 = vunpack.c.l.b16 %v4339
    %v4424 = vunpack.c.l.b16 %v4340
    %v4425 = vunpack.c.l.b16 %v4341
    %v4426 = vunpack.c.l.b16 %v4342
    %v4427 = vunpack.c.l.b16 %v4343
    %v4428 = vunpack.c.l.b16 %v4344
    %v4429 = vunpack.c.l.b16 %v4345
    %v4430 = vunpack.c.l.b16 %v4346
    %v4431 = vunpack.c.l.b16 %v4347
    %v4432 = vunpack.c.l.b16 %v4348
    %v4433 = vunpack.c.l.b16 %v4349
    %v4434 = vunpack.c.l.b16 %v4350
    %v4435 = vunpack.c.l.b16 %v4351
    %v4436 = vunpack.c.l.b16 %v4352
    %v4437 = vunpack.c.l.b16 %v4353
    %v4438 = vunpack.c.l.b16 %v4354
    %v4439 = vunpack.c.l.b16 %v4355
    %v4440 = vunpack.c.l.b16 %v4356
    %v4441 = vunpack.c.l.b16 %v4357
    %v4442 = vunpack.c.l.b16 %v4358
    %v4443 = vunpack.c.l.b16 %v4359
    %v4444 = vunpack.c.l.b16 %v4360
    %v4445 = vunpack.c.l.b16 %v4361
    %v4446 = vunpack.c.l.b16 %v4362
    %v4447 = vunpack.c.l.b16 %v4363
    %v4448 = vpack.c.b16 %v4417, %v4416
    %v4449 = vpack.c.b16 %v4419, %v4418
    %v4450 = vpack.c.b16 %v4421, %v4420
    %v4451 = vpack.c.b16 %v4423, %v4422
    %v4452 = vpack.c.b16 %v4425, %v4424
    %v4453 = vpack.c.b16 %v4427, %v4426
    %v4454 = vpack.c.b16 %v4429, %v4428
    %v4455 = vpack.c.b16 %v4431, %v4430
    %v4456 = vpack.c.b16 %v4433, %v4432
    %v4457 = vpack.c.b16 %v4435, %v4434
    %v4458 = vpack.c.b16 %v4437, %v4436
    %v4459 = vpack.c.b16 %v4439, %v4438
    %v4460 = vpack.c.b16 %v4441, %v4440
    %v4461 = vpack.c.b16 %v4443, %v4442
    %v4462 = vpack.c.b16 %v4445, %v4444
    %v4463 = vpack.c.b16 %v4447, %v4446
    %4480 = vmatprep.subr.bf16.mxu0 0
    %4481 = vmatpush1.bf16.msra.mxu0 %v4448
    %4482 = vmatprep.subr.bf16.mxu0 0
    %4483 = vmatpush1.bf16.msra.mxu0 %v4449
    %4484 = vmatprep.subr.bf16.mxu0 0
    %4485 = vmatpush1.bf16.msra.mxu0 %v4450
    %4486 = vmatprep.subr.bf16.mxu0 0
    %4487 = vmatpush1.bf16.msra.mxu0 %v4451
    %4488 = vmatprep.subr.bf16.mxu0 0
    %4489 = vmatpush1.bf16.msra.mxu0 %v4452
    %4490 = vmatprep.subr.bf16.mxu0 0
    %4491 = vmatpush1.bf16.msra.mxu0 %v4453
    %4492 = vmatprep.subr.bf16.mxu0 0
    %4493 = vmatpush1.bf16.msra.mxu0 %v4454
    %4494 = vmatprep.subr.bf16.mxu0 0
    %4495 = vmatpush1.bf16.msra.mxu0 %v4455
    %4496 = vmatprep.subr.bf16.mxu0 0
    %4497 = vmatpush1.bf16.msra.mxu0 %v4456
    %4498 = vmatprep.subr.bf16.mxu0 0
    %4499 = vmatpush1.bf16.msra.mxu0 %v4457
    %4500 = vmatprep.subr.bf16.mxu0 0
    %4501 = vmatpush1.bf16.msra.mxu0 %v4458
    %4502 = vmatprep.subr.bf16.mxu0 0
    %4503 = vmatpush1.bf16.msra.mxu0 %v4459
    %4504 = vmatprep.subr.bf16.mxu0 0
    %4505 = vmatpush1.bf16.msra.mxu0 %v4460
    %4506 = vmatprep.subr.bf16.mxu0 0
    %4507 = vmatpush1.bf16.msra.mxu0 %v4461
    %4508 = vmatprep.subr.bf16.mxu0 0
    %4509 = vmatpush1.bf16.msra.mxu0 %v4462
    %4510 = vmatprep.subr.bf16.mxu0 0
    %4511 = vmatpush1.bf16.msra.mxu0 %v4463
    %4512 = vmatprep.mubr.bf16.mxu0 %v4381
    %4513 = vmatmul.mubr.bf16.gmra.mrb[0].mxu0 %v4380
    %v4514 = vpop.f32.mrb[0].mxu0
    %v4515 = vadd.f32 %v4370, %v4514
    %v4516 = vpop.f32.mrb[0].mxu0
    %v4517 = vpop.f32.mrb[0].mxu0
    %v4518 = vadd.f32 %v4370, %v4517
    %v4519 = vpop.f32.mrb[0].mxu0
    %4520 = vdwg.mxu0
    %v4521 = vadd.f32 %v4206, %v4515
    %v4522 = vadd.f32 %v4207, %v4518
    %s4523 = scalar_lea.vmem %s13, 3
    %v4524 = vld [vmem:[%s4523] sm:$0x1]
    %s4525 = scalar_lea.vmem %s14, 3
    %v4526 = vld [vmem:[%s4525] sm:$0x1]
    %v4527 = vsel %vm157, %v4521, 0.0
    %4528 = vadd.xlane.f32.xlu0 %v4527
    %v4529 = vpop.xlane.xlu0 %4528
    %v4530 = vsel %vm157, %v4522, 0.0
    %4531 = vadd.xlane.f32.xlu0 %v4530
    %v4532 = vpop.xlane.xlu0 %4531
    %v4533 = vmul.f32 %v4529, %v820
    %v4534 = vmul.f32 %v4532, %v820
    %v4535 = vsub.f32 %v4521, %v4533
    %v4536 = vsub.f32 %v4522, %v4534
    %v4537 = vmul.f32 %v4535, %v4535
    %v4538 = vmul.f32 %v4536, %v4536
    %v4539 = vsel %vm157, %v4537, 0.0
    %4540 = vadd.xlane.f32.xlu0 %v4539
    %v4541 = vpop.xlane.xlu0 %4540
    %v4542 = vsel %vm157, %v4538, 0.0
    %4543 = vadd.xlane.f32.xlu0 %v4542
    %v4544 = vpop.xlane.xlu0 %4543
    %v4545 = vmul.f32 %v4541, %v820
    %v4546 = vmul.f32 %v4544, %v820
    %v4547 = vadd.f32 %v4545, 1e-05
    %v4548 = vadd.f32 %v4546, 1e-05
    %v4549 = vrsqrt.pop %v4547
    %v4550 = vrsqrt.pop %v4548
    %v4551 = vmul.f32 %v4535, %v4549
    %v4552 = vmul.f32 %v4536, %v4550
    %v4554 = vlaneseq
    %v4555 = vshrl.u32 %v4554, 7
    %v4556 = vsub.s32 0, %v4555
    %v4557 = vrot.slane %v4524, %v4556
    %v4559 = vmul.f32 %v4551, %v4557
    %v4560 = vmul.f32 %v4552, %v4557
    %v4562 = vlaneseq
    %v4563 = vshrl.u32 %v4562, 7
    %v4564 = vsub.s32 0, %v4563
    %v4565 = vrot.slane %v4526, %v4564
    %v4567 = vadd.f32 %v4559, %v4565
    %v4568 = vadd.f32 %v4560, %v4565
    %v4569 = vpack.c.bf16 %v4567, %v4567
    %v4570 = vpack.c.bf16 %v4568, %v4568
    %v4571 = vld [vmem:[%s15] sm:$0xf]
    %v4572 = vld [vmem:[%s15 + $0x4] sm:$0xf]
    %v4573 = vld [vmem:[%s15 + $0x8] sm:$0xf]
    %v4574 = vld [vmem:[%s15 + $0xc] sm:$0xf]
    %v4575 = vld [vmem:[%s15 + $0x10] sm:$0xf]
    %v4576 = vld [vmem:[%s15 + $0x14] sm:$0xf]
    %v4577 = vld [vmem:[%s15 + $0x18] sm:$0xf]
    %v4578 = vld [vmem:[%s15 + $0x1c] sm:$0xf]
    %v4579 = vld [vmem:[%s16] sm:$0x1]
    %v4581 = vlaneseq
    %v4582 = vshrl.u32 %v4581, 7
    %v4583 = vsub.s32 0, %v4582
    %v4584 = vrot.slane %v4579, %v4583
    %v4588 = vunpack.c.l.b16 %v4569
    %v4589 = vunpack.c.l.b16 %v4570
    %v4590 = vpack.c.b16 %v4589, %v4588
    %v4599 = vunpack.c.l.b16 %v4571
    %v4600 = vunpack.c.l.b16 %v4572
    %v4601 = vunpack.c.l.b16 %v4573
    %v4602 = vunpack.c.l.b16 %v4574
    %v4603 = vunpack.c.l.b16 %v4575
    %v4604 = vunpack.c.l.b16 %v4576
    %v4605 = vunpack.c.l.b16 %v4577
    %v4606 = vunpack.c.l.b16 %v4578
    %v4607 = vpack.c.b16 %v4600, %v4599
    %v4608 = vpack.c.b16 %v4602, %v4601
    %v4609 = vpack.c.b16 %v4604, %v4603
    %v4610 = vpack.c.b16 %v4606, %v4605
    %v4616 = vsel %vm157, %v4590, 0
    %4618 = vmatprep.subr.bf16.mxu0 0
    %4619 = vmatpush1.bf16.msra.mxu0 %v4607
    %4620 = vmatprep.subr.bf16.mxu0 0
    %4621 = vmatpush1.bf16.msra.mxu0 %v4608
    %4622 = vmatprep.subr.bf16.mxu0 0
    %4623 = vmatpush1.bf16.msra.mxu0 %v4609
    %4624 = vmatprep.subr.bf16.mxu0 0
    %4625 = vmatpush1.bf16.msra.mxu0 %v4610
    %4626 = vmatprep.subr.bf16.mxu0 0
    %4627 = vmatpush1.bf16.msra.mxu0 0
    %4628 = vmatprep.subr.bf16.mxu0 0
    %4629 = vmatpush1.bf16.msra.mxu0 0
    %4630 = vmatprep.subr.bf16.mxu0 0
    %4631 = vmatpush1.bf16.msra.mxu0 0
    %4632 = vmatprep.subr.bf16.mxu0 0
    %4633 = vmatpush1.bf16.msra.mxu0 0
    %4634 = vmatprep.subr.bf16.mxu0 0
    %4635 = vmatpush1.bf16.msra.mxu0 0
    %4636 = vmatprep.subr.bf16.mxu0 0
    %4637 = vmatpush1.bf16.msra.mxu0 0
    %4638 = vmatprep.subr.bf16.mxu0 0
    %4639 = vmatpush1.bf16.msra.mxu0 0
    %4640 = vmatprep.subr.bf16.mxu0 0
    %4641 = vmatpush1.bf16.msra.mxu0 0
    %4642 = vmatprep.subr.bf16.mxu0 0
    %4643 = vmatpush1.bf16.msra.mxu0 0
    %4644 = vmatprep.subr.bf16.mxu0 0
    %4645 = vmatpush1.bf16.msra.mxu0 0
    %4646 = vmatprep.subr.bf16.mxu0 0
    %4647 = vmatpush1.bf16.msra.mxu0 0
    %4648 = vmatprep.subr.bf16.mxu0 0
    %4649 = vmatpush1.bf16.msra.mxu0 0
    %4650 = vmatprep.mubr.bf16.mxu0 0
    %4651 = vmatmul.mubr.bf16.gmra.mrb[0].mxu0 %v4616
    %v4652 = vpop.f32.mrb[0].mxu0
    %v4653 = vadd.f32 %v4584, %v4652
    %v4654 = vpop.f32.mrb[0].mxu0
    %v4655 = vpop.f32.mrb[0].mxu0
    %v4656 = vadd.f32 %v4584, %v4655
    %v4657 = vpop.f32.mrb[0].mxu0
    %4658 = vdwg.mxu0
    %v4659 = vld [vmem:[%s17] sm:$0xf]
    %v4660 = vld [vmem:[%s17 + $0x4] sm:$0xf]
    %v4661 = vld [vmem:[%s18] sm:$0x1]
    %v4662 = vpack.c.bf16 %v4653, %v4653
    %v4663 = vpack.c.bf16 %v4656, %v4656
    %4665 = vrot.lane.b32.xlu0 %v4662, 112
    %v4666 = vpop.permute.xlu0 %4665
    %v4668 = vsel %vm330, %v4662, 0
    %v4671 = vsel %vm330, %v4666, 0
    %4673 = vmatprep.subr.bf16.mxu0 0
    %4674 = vmatpush1.bf16.xpose.msra.mxu0 %v4671
    %4675 = vmatprep.subr.bf16.mxu0 0
    %4676 = vmatpush1.bf16.xpose.msra.mxu0 0
    %4677 = vmatprep.subr.bf16.mxu0 0
    %4678 = vmatpush1.bf16.xpose.msra.mxu0 0
    %4679 = vmatprep.subr.bf16.mxu0 0
    %4680 = vmatpush1.bf16.xpose.msra.mxu0 0
    %4681 = vmatprep.subr.bf16.mxu0 0
    %4682 = vmatpush1.bf16.xpose.msra.mxu0 0
    %4683 = vmatprep.subr.bf16.mxu0 0
    %4684 = vmatpush1.bf16.xpose.msra.mxu0 0
    %4685 = vmatprep.subr.bf16.mxu0 0
    %4686 = vmatpush1.bf16.xpose.msra.mxu0 0
    %4687 = vmatprep.subr.bf16.mxu0 0
    %4688 = vmatpush1.bf16.xpose.msra.mxu0 0
    %4689 = vmatprep.subr.bf16.mxu0 0
    %4690 = vmatpush1.bf16.xpose.msra.mxu0 0
    %4691 = vmatprep.subr.bf16.mxu0 0
    %4692 = vmatpush1.bf16.xpose.msra.mxu0 0
    %4693 = vmatprep.subr.bf16.mxu0 0
    %4694 = vmatpush1.bf16.xpose.msra.mxu0 0
    %4695 = vmatprep.subr.bf16.mxu0 0
    %4696 = vmatpush1.bf16.xpose.msra.mxu0 0
    %4697 = vmatprep.subr.bf16.mxu0 0
    %4698 = vmatpush1.bf16.xpose.msra.mxu0 0
    %4699 = vmatprep.subr.bf16.mxu0 0
    %4700 = vmatpush1.bf16.xpose.msra.mxu0 0
    %4701 = vmatprep.subr.bf16.mxu0 0
    %4702 = vmatpush1.bf16.xpose.msra.mxu0 0
    %4703 = vmatprep.subr.bf16.mxu0 0
    %4704 = vmatpush1.bf16.xpose.msra.mxu0 0
    %4705 = vmatprep.mubr.bf16.mxu0 0
    %4706 = vmatmul.mubr.bf16.gmra.mrb[0].mxu0 %v4668
    %v4707 = vpop.f32.mrb[0].mxu0
    %v4708 = vadd.f32 0.0, %v4707
    %v4709 = vpop.f32.mrb[0].mxu0
    %v4710 = vpop.f32.mrb[0].mxu0
    %v4711 = vpop.f32.mrb[0].mxu0
    %4712 = vdwg.mxu0
    %4714 = vrot.lane.b32.xlu0 %v4663, 112
    %v4715 = vpop.permute.xlu0 %4714
    %v4717 = vsel %vm330, %v4663, 0
    %v4720 = vsel %vm330, %v4715, 0
    %4722 = vmatprep.subr.bf16.mxu0 0
    %4723 = vmatpush1.bf16.xpose.msra.mxu0 %v4720
    %4724 = vmatprep.subr.bf16.mxu0 0
    %4725 = vmatpush1.bf16.xpose.msra.mxu0 0
    %4726 = vmatprep.subr.bf16.mxu0 0
    %4727 = vmatpush1.bf16.xpose.msra.mxu0 0
    %4728 = vmatprep.subr.bf16.mxu0 0
    %4729 = vmatpush1.bf16.xpose.msra.mxu0 0
    %4730 = vmatprep.subr.bf16.mxu0 0
    %4731 = vmatpush1.bf16.xpose.msra.mxu0 0
    %4732 = vmatprep.subr.bf16.mxu0 0
    %4733 = vmatpush1.bf16.xpose.msra.mxu0 0
    %4734 = vmatprep.subr.bf16.mxu0 0
    %4735 = vmatpush1.bf16.xpose.msra.mxu0 0
    %4736 = vmatprep.subr.bf16.mxu0 0
    %4737 = vmatpush1.bf16.xpose.msra.mxu0 0
    %4738 = vmatprep.subr.bf16.mxu0 0
    %4739 = vmatpush1.bf16.xpose.msra.mxu0 0
    %4740 = vmatprep.subr.bf16.mxu0 0
    %4741 = vmatpush1.bf16.xpose.msra.mxu0 0
    %4742 = vmatprep.subr.bf16.mxu0 0
    %4743 = vmatpush1.bf16.xpose.msra.mxu0 0
    %4744 = vmatprep.subr.bf16.mxu0 0
    %4745 = vmatpush1.bf16.xpose.msra.mxu0 0
    %4746 = vmatprep.subr.bf16.mxu0 0
    %4747 = vmatpush1.bf16.xpose.msra.mxu0 0
    %4748 = vmatprep.subr.bf16.mxu0 0
    %4749 = vmatpush1.bf16.xpose.msra.mxu0 0
    %4750 = vmatprep.subr.bf16.mxu0 0
    %4751 = vmatpush1.bf16.xpose.msra.mxu0 0
    %4752 = vmatprep.subr.bf16.mxu0 0
    %4753 = vmatpush1.bf16.xpose.msra.mxu0 0
    %4754 = vmatprep.mubr.bf16.mxu0 0
    %4755 = vmatmul.mubr.bf16.gmra.mrb[0].mxu0 %v4717
    %v4756 = vpop.f32.mrb[0].mxu0
    %v4757 = vadd.f32 0.0, %v4756
    %v4758 = vpop.f32.mrb[0].mxu0
    %v4759 = vpop.f32.mrb[0].mxu0
    %v4760 = vpop.f32.mrb[0].mxu0
    %4761 = vdwg.mxu0
    %v4762 = vmul.f32 %v4708, 0.35355338
    %v4763 = vmul.f32 %v4757, 0.35355338
    %v4764 = vadd.f32 %v4762, %v321
    %v4765 = vadd.f32 %v4763, %v325
    %v4766 = vsel %vm330, %v4764, -inf
    %4767 = vmax.xlane.f32.xlu0 %v4766
    %v4768 = vpop.xlane.xlu0 %4767
    %v4769 = vsel %vm330, %v4765, -inf
    %4770 = vmax.xlane.f32.xlu0 %v4769
    %v4771 = vpop.xlane.xlu0 %4770
    %v4772 = vsub.f32 %v4764, %v4768
    %v4773 = vsub.f32 %v4765, %v4771
    %v4774 = vmul.f32 %v4772, 1.442695
    %v4775 = vpow.pop %v4774
    %v4776 = vmul.f32 %v4773, 1.442695
    %v4777 = vpow.pop %v4776
    %v4778 = vsel %vm330, %v4775, 0.0
    %4779 = vadd.xlane.f32.xlu0 %v4778
    %v4780 = vpop.xlane.xlu0 %4779
    %v4781 = vsel %vm330, %v4777, 0.0
    %4782 = vadd.xlane.f32.xlu0 %v4781
    %v4783 = vpop.xlane.xlu0 %4782
    %v4784 = vrcp.pop %v4780
    %v4785 = vrcp.pop %v4783
    %v4786 = vmul.f32 %v4775, %v4784
    %v4787 = vmul.f32 %v4777, %v4785
    %v4788 = vpack.c.bf16 %v4786, %v4786
    %v4789 = vpack.c.bf16 %v4787, %v4787
    %4790 = vrot.lane.b32.xlu0 %v4662, 96
    %v4791 = vpop.permute.xlu0 %4790
    %v4793 = vsel %vm330, %v4788, 0
    %v4796 = vsel %vm358, %v4791, 0
    %4798 = vmatprep.subr.bf16.mxu0 0
    %4799 = vmatpush1.bf16.msra.mxu0 %v4796
    %4800 = vmatprep.subr.bf16.mxu0 0
    %4801 = vmatpush1.bf16.msra.mxu0 0
    %4802 = vmatprep.subr.bf16.mxu0 0
    %4803 = vmatpush1.bf16.msra.mxu0 0
    %4804 = vmatprep.subr.bf16.mxu0 0
    %4805 = vmatpush1.bf16.msra.mxu0 0
    %4806 = vmatprep.subr.bf16.mxu0 0
    %4807 = vmatpush1.bf16.msra.mxu0 0
    %4808 = vmatprep.subr.bf16.mxu0 0
    %4809 = vmatpush1.bf16.msra.mxu0 0
    %4810 = vmatprep.subr.bf16.mxu0 0
    %4811 = vmatpush1.bf16.msra.mxu0 0
    %4812 = vmatprep.subr.bf16.mxu0 0
    %4813 = vmatpush1.bf16.msra.mxu0 0
    %4814 = vmatprep.subr.bf16.mxu0 0
    %4815 = vmatpush1.bf16.msra.mxu0 0
    %4816 = vmatprep.subr.bf16.mxu0 0
    %4817 = vmatpush1.bf16.msra.mxu0 0
    %4818 = vmatprep.subr.bf16.mxu0 0
    %4819 = vmatpush1.bf16.msra.mxu0 0
    %4820 = vmatprep.subr.bf16.mxu0 0
    %4821 = vmatpush1.bf16.msra.mxu0 0
    %4822 = vmatprep.subr.bf16.mxu0 0
    %4823 = vmatpush1.bf16.msra.mxu0 0
    %4824 = vmatprep.subr.bf16.mxu0 0
    %4825 = vmatpush1.bf16.msra.mxu0 0
    %4826 = vmatprep.subr.bf16.mxu0 0
    %4827 = vmatpush1.bf16.msra.mxu0 0
    %4828 = vmatprep.subr.bf16.mxu0 0
    %4829 = vmatpush1.bf16.msra.mxu0 0
    %4830 = vmatprep.mubr.bf16.mxu0 0
    %4831 = vmatmul.mubr.bf16.gmra.mrb[0].mxu0 %v4793
    %v4832 = vpop.f32.mrb[0].mxu0
    %v4833 = vadd.f32 0.0, %v4832
    %v4834 = vpop.f32.mrb[0].mxu0
    %v4835 = vpop.f32.mrb[0].mxu0
    %v4836 = vpop.f32.mrb[0].mxu0
    %4837 = vdwg.mxu0
    %4838 = vrot.lane.b32.xlu0 %v4663, 96
    %v4839 = vpop.permute.xlu0 %4838
    %v4841 = vsel %vm330, %v4789, 0
    %v4844 = vsel %vm358, %v4839, 0
    %4846 = vmatprep.subr.bf16.mxu0 0
    %4847 = vmatpush1.bf16.msra.mxu0 %v4844
    %4848 = vmatprep.subr.bf16.mxu0 0
    %4849 = vmatpush1.bf16.msra.mxu0 0
    %4850 = vmatprep.subr.bf16.mxu0 0
    %4851 = vmatpush1.bf16.msra.mxu0 0
    %4852 = vmatprep.subr.bf16.mxu0 0
    %4853 = vmatpush1.bf16.msra.mxu0 0
    %4854 = vmatprep.subr.bf16.mxu0 0
    %4855 = vmatpush1.bf16.msra.mxu0 0
    %4856 = vmatprep.subr.bf16.mxu0 0
    %4857 = vmatpush1.bf16.msra.mxu0 0
    %4858 = vmatprep.subr.bf16.mxu0 0
    %4859 = vmatpush1.bf16.msra.mxu0 0
    %4860 = vmatprep.subr.bf16.mxu0 0
    %4861 = vmatpush1.bf16.msra.mxu0 0
    %4862 = vmatprep.subr.bf16.mxu0 0
    %4863 = vmatpush1.bf16.msra.mxu0 0
    %4864 = vmatprep.subr.bf16.mxu0 0
    %4865 = vmatpush1.bf16.msra.mxu0 0
    %4866 = vmatprep.subr.bf16.mxu0 0
    %4867 = vmatpush1.bf16.msra.mxu0 0
    %4868 = vmatprep.subr.bf16.mxu0 0
    %4869 = vmatpush1.bf16.msra.mxu0 0
    %4870 = vmatprep.subr.bf16.mxu0 0
    %4871 = vmatpush1.bf16.msra.mxu0 0
    %4872 = vmatprep.subr.bf16.mxu0 0
    %4873 = vmatpush1.bf16.msra.mxu0 0
    %4874 = vmatprep.subr.bf16.mxu0 0
    %4875 = vmatpush1.bf16.msra.mxu0 0
    %4876 = vmatprep.subr.bf16.mxu0 0
    %4877 = vmatpush1.bf16.msra.mxu0 0
    %4878 = vmatprep.mubr.bf16.mxu0 0
    %4879 = vmatmul.mubr.bf16.gmra.mrb[0].mxu0 %v4841
    %v4880 = vpop.f32.mrb[0].mxu0
    %v4881 = vadd.f32 0.0, %v4880
    %v4882 = vpop.f32.mrb[0].mxu0
    %v4883 = vpop.f32.mrb[0].mxu0
    %v4884 = vpop.f32.mrb[0].mxu0
    %4885 = vdwg.mxu0
    %v4886 = vpack.c.bf16 %v4833, %v4833
    %v4887 = vpack.c.bf16 %v4881, %v4881
    %v4890 = vunpack.c.l.b16 %v4886
    %v4891 = vunpack.c.l.b16 %v4887
    %v4892 = vpack.c.b16 %v4891, %v4890
    %v4894 = vsel %vm330, %v4892, 0
    %v4897 = vsel %vm358, %v4659, 0
    %4899 = vmatprep.subr.bf16.mxu0 0
    %4900 = vmatpush1.bf16.msra.mxu0 %v4897
    %4901 = vmatprep.subr.bf16.mxu0 0
    %4902 = vmatpush1.bf16.msra.mxu0 0
    %4903 = vmatprep.subr.bf16.mxu0 0
    %4904 = vmatpush1.bf16.msra.mxu0 0
    %4905 = vmatprep.subr.bf16.mxu0 0
    %4906 = vmatpush1.bf16.msra.mxu0 0
    %4907 = vmatprep.subr.bf16.mxu0 0
    %4908 = vmatpush1.bf16.msra.mxu0 0
    %4909 = vmatprep.subr.bf16.mxu0 0
    %4910 = vmatpush1.bf16.msra.mxu0 0
    %4911 = vmatprep.subr.bf16.mxu0 0
    %4912 = vmatpush1.bf16.msra.mxu0 0
    %4913 = vmatprep.subr.bf16.mxu0 0
    %4914 = vmatpush1.bf16.msra.mxu0 0
    %4915 = vmatprep.subr.bf16.mxu0 0
    %4916 = vmatpush1.bf16.msra.mxu0 0
    %4917 = vmatprep.subr.bf16.mxu0 0
    %4918 = vmatpush1.bf16.msra.mxu0 0
    %4919 = vmatprep.subr.bf16.mxu0 0
    %4920 = vmatpush1.bf16.msra.mxu0 0
    %4921 = vmatprep.subr.bf16.mxu0 0
    %4922 = vmatpush1.bf16.msra.mxu0 0
    %4923 = vmatprep.subr.bf16.mxu0 0
    %4924 = vmatpush1.bf16.msra.mxu0 0
    %4925 = vmatprep.subr.bf16.mxu0 0
    %4926 = vmatpush1.bf16.msra.mxu0 0
    %4927 = vmatprep.subr.bf16.mxu0 0
    %4928 = vmatpush1.bf16.msra.mxu0 0
    %4929 = vmatprep.subr.bf16.mxu0 0
    %4930 = vmatpush1.bf16.msra.mxu0 0
    %4931 = vmatprep.mubr.bf16.mxu0 0
    %4932 = vmatmul.mubr.bf16.gmra.mrb[0].mxu0 %v4894
    %v4933 = vpop.f32.mrb[0].mxu0
    %v4934 = vadd.f32 0.0, %v4933
    %v4935 = vpop.f32.mrb[0].mxu0
    %v4936 = vpop.f32.mrb[0].mxu0
    %v4937 = vadd.f32 0.0, %v4936
    %v4938 = vpop.f32.mrb[0].mxu0
    %4939 = vdwg.mxu0
    %v4941 = vlaneseq
    %v4942 = vshrl.u32 %v4941, 7
    %v4943 = vsub.s32 0, %v4942
    %v4944 = vrot.slane %v4661, %v4943
    %v4946 = vadd.f32 %v4944, %v4934
    %v4947 = vadd.f32 %v4944, %v4937
    %4948 = vrot.lane.b32.xlu0 %v4662, 120
    %v4949 = vpop.permute.xlu0 %4948
    %4950 = vrot.lane.b32.xlu0 %v4662, 104
    %v4951 = vpop.permute.xlu0 %4950
    %v4953 = vsel %vm330, %v4949, 0
    %v4956 = vsel %vm330, %v4951, 0
    %4958 = vmatprep.subr.bf16.mxu0 0
    %4959 = vmatpush1.bf16.xpose.msra.mxu0 %v4956
    %4960 = vmatprep.subr.bf16.mxu0 0
    %4961 = vmatpush1.bf16.xpose.msra.mxu0 0
    %4962 = vmatprep.subr.bf16.mxu0 0
    %4963 = vmatpush1.bf16.xpose.msra.mxu0 0
    %4964 = vmatprep.subr.bf16.mxu0 0
    %4965 = vmatpush1.bf16.xpose.msra.mxu0 0
    %4966 = vmatprep.subr.bf16.mxu0 0
    %4967 = vmatpush1.bf16.xpose.msra.mxu0 0
    %4968 = vmatprep.subr.bf16.mxu0 0
    %4969 = vmatpush1.bf16.xpose.msra.mxu0 0
    %4970 = vmatprep.subr.bf16.mxu0 0
    %4971 = vmatpush1.bf16.xpose.msra.mxu0 0
    %4972 = vmatprep.subr.bf16.mxu0 0
    %4973 = vmatpush1.bf16.xpose.msra.mxu0 0
    %4974 = vmatprep.subr.bf16.mxu0 0
    %4975 = vmatpush1.bf16.xpose.msra.mxu0 0
    %4976 = vmatprep.subr.bf16.mxu0 0
    %4977 = vmatpush1.bf16.xpose.msra.mxu0 0
    %4978 = vmatprep.subr.bf16.mxu0 0
    %4979 = vmatpush1.bf16.xpose.msra.mxu0 0
    %4980 = vmatprep.subr.bf16.mxu0 0
    %4981 = vmatpush1.bf16.xpose.msra.mxu0 0
    %4982 = vmatprep.subr.bf16.mxu0 0
    %4983 = vmatpush1.bf16.xpose.msra.mxu0 0
    %4984 = vmatprep.subr.bf16.mxu0 0
    %4985 = vmatpush1.bf16.xpose.msra.mxu0 0
    %4986 = vmatprep.subr.bf16.mxu0 0
    %4987 = vmatpush1.bf16.xpose.msra.mxu0 0
    %4988 = vmatprep.subr.bf16.mxu0 0
    %4989 = vmatpush1.bf16.xpose.msra.mxu0 0
    %4990 = vmatprep.mubr.bf16.mxu0 0
    %4991 = vmatmul.mubr.bf16.gmra.mrb[0].mxu0 %v4953
    %v4992 = vpop.f32.mrb[0].mxu0
    %v4993 = vadd.f32 0.0, %v4992
    %v4994 = vpop.f32.mrb[0].mxu0
    %v4995 = vpop.f32.mrb[0].mxu0
    %v4996 = vpop.f32.mrb[0].mxu0
    %4997 = vdwg.mxu0
    %4998 = vrot.lane.b32.xlu0 %v4663, 120
    %v4999 = vpop.permute.xlu0 %4998
    %5000 = vrot.lane.b32.xlu0 %v4663, 104
    %v5001 = vpop.permute.xlu0 %5000
    %v5003 = vsel %vm330, %v4999, 0
    %v5006 = vsel %vm330, %v5001, 0
    %5008 = vmatprep.subr.bf16.mxu0 0
    %5009 = vmatpush1.bf16.xpose.msra.mxu0 %v5006
    %5010 = vmatprep.subr.bf16.mxu0 0
    %5011 = vmatpush1.bf16.xpose.msra.mxu0 0
    %5012 = vmatprep.subr.bf16.mxu0 0
    %5013 = vmatpush1.bf16.xpose.msra.mxu0 0
    %5014 = vmatprep.subr.bf16.mxu0 0
    %5015 = vmatpush1.bf16.xpose.msra.mxu0 0
    %5016 = vmatprep.subr.bf16.mxu0 0
    %5017 = vmatpush1.bf16.xpose.msra.mxu0 0
    %5018 = vmatprep.subr.bf16.mxu0 0
    %5019 = vmatpush1.bf16.xpose.msra.mxu0 0
    %5020 = vmatprep.subr.bf16.mxu0 0
    %5021 = vmatpush1.bf16.xpose.msra.mxu0 0
    %5022 = vmatprep.subr.bf16.mxu0 0
    %5023 = vmatpush1.bf16.xpose.msra.mxu0 0
    %5024 = vmatprep.subr.bf16.mxu0 0
    %5025 = vmatpush1.bf16.xpose.msra.mxu0 0
    %5026 = vmatprep.subr.bf16.mxu0 0
    %5027 = vmatpush1.bf16.xpose.msra.mxu0 0
    %5028 = vmatprep.subr.bf16.mxu0 0
    %5029 = vmatpush1.bf16.xpose.msra.mxu0 0
    %5030 = vmatprep.subr.bf16.mxu0 0
    %5031 = vmatpush1.bf16.xpose.msra.mxu0 0
    %5032 = vmatprep.subr.bf16.mxu0 0
    %5033 = vmatpush1.bf16.xpose.msra.mxu0 0
    %5034 = vmatprep.subr.bf16.mxu0 0
    %5035 = vmatpush1.bf16.xpose.msra.mxu0 0
    %5036 = vmatprep.subr.bf16.mxu0 0
    %5037 = vmatpush1.bf16.xpose.msra.mxu0 0
    %5038 = vmatprep.subr.bf16.mxu0 0
    %5039 = vmatpush1.bf16.xpose.msra.mxu0 0
    %5040 = vmatprep.mubr.bf16.mxu0 0
    %5041 = vmatmul.mubr.bf16.gmra.mrb[0].mxu0 %v5003
    %v5042 = vpop.f32.mrb[0].mxu0
    %v5043 = vadd.f32 0.0, %v5042
    %v5044 = vpop.f32.mrb[0].mxu0
    %v5045 = vpop.f32.mrb[0].mxu0
    %v5046 = vpop.f32.mrb[0].mxu0
    %5047 = vdwg.mxu0
    %v5048 = vmul.f32 %v4993, 0.35355338
    %v5049 = vmul.f32 %v5043, 0.35355338
    %v5050 = vadd.f32 %v5048, %v321
    %v5051 = vadd.f32 %v5049, %v325
    %v5052 = vsel %vm330, %v5050, -inf
    %5053 = vmax.xlane.f32.xlu0 %v5052
    %v5054 = vpop.xlane.xlu0 %5053
    %v5055 = vsel %vm330, %v5051, -inf
    %5056 = vmax.xlane.f32.xlu0 %v5055
    %v5057 = vpop.xlane.xlu0 %5056
    %v5058 = vsub.f32 %v5050, %v5054
    %v5059 = vsub.f32 %v5051, %v5057
    %v5060 = vmul.f32 %v5058, 1.442695
    %v5061 = vpow.pop %v5060
    %v5062 = vmul.f32 %v5059, 1.442695
    %v5063 = vpow.pop %v5062
    %v5064 = vsel %vm330, %v5061, 0.0
    %5065 = vadd.xlane.f32.xlu0 %v5064
    %v5066 = vpop.xlane.xlu0 %5065
    %v5067 = vsel %vm330, %v5063, 0.0
    %5068 = vadd.xlane.f32.xlu0 %v5067
    %v5069 = vpop.xlane.xlu0 %5068
    %v5070 = vrcp.pop %v5066
    %v5071 = vrcp.pop %v5069
    %v5072 = vmul.f32 %v5061, %v5070
    %v5073 = vmul.f32 %v5063, %v5071
    %v5074 = vpack.c.bf16 %v5072, %v5072
    %v5075 = vpack.c.bf16 %v5073, %v5073
    %5076 = vrot.lane.b32.xlu0 %v4662, 88
    %v5077 = vpop.permute.xlu0 %5076
    %v5079 = vsel %vm330, %v5074, 0
    %v5082 = vsel %vm358, %v5077, 0
    %5084 = vmatprep.subr.bf16.mxu0 0
    %5085 = vmatpush1.bf16.msra.mxu0 %v5082
    %5086 = vmatprep.subr.bf16.mxu0 0
    %5087 = vmatpush1.bf16.msra.mxu0 0
    %5088 = vmatprep.subr.bf16.mxu0 0
    %5089 = vmatpush1.bf16.msra.mxu0 0
    %5090 = vmatprep.subr.bf16.mxu0 0
    %5091 = vmatpush1.bf16.msra.mxu0 0
    %5092 = vmatprep.subr.bf16.mxu0 0
    %5093 = vmatpush1.bf16.msra.mxu0 0
    %5094 = vmatprep.subr.bf16.mxu0 0
    %5095 = vmatpush1.bf16.msra.mxu0 0
    %5096 = vmatprep.subr.bf16.mxu0 0
    %5097 = vmatpush1.bf16.msra.mxu0 0
    %5098 = vmatprep.subr.bf16.mxu0 0
    %5099 = vmatpush1.bf16.msra.mxu0 0
    %5100 = vmatprep.subr.bf16.mxu0 0
    %5101 = vmatpush1.bf16.msra.mxu0 0
    %5102 = vmatprep.subr.bf16.mxu0 0
    %5103 = vmatpush1.bf16.msra.mxu0 0
    %5104 = vmatprep.subr.bf16.mxu0 0
    %5105 = vmatpush1.bf16.msra.mxu0 0
    %5106 = vmatprep.subr.bf16.mxu0 0
    %5107 = vmatpush1.bf16.msra.mxu0 0
    %5108 = vmatprep.subr.bf16.mxu0 0
    %5109 = vmatpush1.bf16.msra.mxu0 0
    %5110 = vmatprep.subr.bf16.mxu0 0
    %5111 = vmatpush1.bf16.msra.mxu0 0
    %5112 = vmatprep.subr.bf16.mxu0 0
    %5113 = vmatpush1.bf16.msra.mxu0 0
    %5114 = vmatprep.subr.bf16.mxu0 0
    %5115 = vmatpush1.bf16.msra.mxu0 0
    %5116 = vmatprep.mubr.bf16.mxu0 0
    %5117 = vmatmul.mubr.bf16.gmra.mrb[0].mxu0 %v5079
    %v5118 = vpop.f32.mrb[0].mxu0
    %v5119 = vadd.f32 0.0, %v5118
    %v5120 = vpop.f32.mrb[0].mxu0
    %v5121 = vpop.f32.mrb[0].mxu0
    %v5122 = vpop.f32.mrb[0].mxu0
    %5123 = vdwg.mxu0
    %5124 = vrot.lane.b32.xlu0 %v4663, 88
    %v5125 = vpop.permute.xlu0 %5124
    %v5127 = vsel %vm330, %v5075, 0
    %v5130 = vsel %vm358, %v5125, 0
    %5132 = vmatprep.subr.bf16.mxu0 0
    %5133 = vmatpush1.bf16.msra.mxu0 %v5130
    %5134 = vmatprep.subr.bf16.mxu0 0
    %5135 = vmatpush1.bf16.msra.mxu0 0
    %5136 = vmatprep.subr.bf16.mxu0 0
    %5137 = vmatpush1.bf16.msra.mxu0 0
    %5138 = vmatprep.subr.bf16.mxu0 0
    %5139 = vmatpush1.bf16.msra.mxu0 0
    %5140 = vmatprep.subr.bf16.mxu0 0
    %5141 = vmatpush1.bf16.msra.mxu0 0
    %5142 = vmatprep.subr.bf16.mxu0 0
    %5143 = vmatpush1.bf16.msra.mxu0 0
    %5144 = vmatprep.subr.bf16.mxu0 0
    %5145 = vmatpush1.bf16.msra.mxu0 0
    %5146 = vmatprep.subr.bf16.mxu0 0
    %5147 = vmatpush1.bf16.msra.mxu0 0
    %5148 = vmatprep.subr.bf16.mxu0 0
    %5149 = vmatpush1.bf16.msra.mxu0 0
    %5150 = vmatprep.subr.bf16.mxu0 0
    %5151 = vmatpush1.bf16.msra.mxu0 0
    %5152 = vmatprep.subr.bf16.mxu0 0
    %5153 = vmatpush1.bf16.msra.mxu0 0
    %5154 = vmatprep.subr.bf16.mxu0 0
    %5155 = vmatpush1.bf16.msra.mxu0 0
    %5156 = vmatprep.subr.bf16.mxu0 0
    %5157 = vmatpush1.bf16.msra.mxu0 0
    %5158 = vmatprep.subr.bf16.mxu0 0
    %5159 = vmatpush1.bf16.msra.mxu0 0
    %5160 = vmatprep.subr.bf16.mxu0 0
    %5161 = vmatpush1.bf16.msra.mxu0 0
    %5162 = vmatprep.subr.bf16.mxu0 0
    %5163 = vmatpush1.bf16.msra.mxu0 0
    %5164 = vmatprep.mubr.bf16.mxu0 0
    %5165 = vmatmul.mubr.bf16.gmra.mrb[0].mxu0 %v5127
    %v5166 = vpop.f32.mrb[0].mxu0
    %v5167 = vadd.f32 0.0, %v5166
    %v5168 = vpop.f32.mrb[0].mxu0
    %v5169 = vpop.f32.mrb[0].mxu0
    %v5170 = vpop.f32.mrb[0].mxu0
    %5171 = vdwg.mxu0
    %v5172 = vpack.c.bf16 %v5119, %v5119
    %v5173 = vpack.c.bf16 %v5167, %v5167
    %v5176 = vunpack.c.l.b16 %v5172
    %v5177 = vunpack.c.l.b16 %v5173
    %v5178 = vpack.c.b16 %v5177, %v5176
    %v5180 = vsel %vm330, %v5178, 0
    %v5183 = vsel %vm358, %v4660, 0
    %5185 = vmatprep.subr.bf16.mxu0 0
    %5186 = vmatpush1.bf16.msra.mxu0 %v5183
    %5187 = vmatprep.subr.bf16.mxu0 0
    %5188 = vmatpush1.bf16.msra.mxu0 0
    %5189 = vmatprep.subr.bf16.mxu0 0
    %5190 = vmatpush1.bf16.msra.mxu0 0
    %5191 = vmatprep.subr.bf16.mxu0 0
    %5192 = vmatpush1.bf16.msra.mxu0 0
    %5193 = vmatprep.subr.bf16.mxu0 0
    %5194 = vmatpush1.bf16.msra.mxu0 0
    %5195 = vmatprep.subr.bf16.mxu0 0
    %5196 = vmatpush1.bf16.msra.mxu0 0
    %5197 = vmatprep.subr.bf16.mxu0 0
    %5198 = vmatpush1.bf16.msra.mxu0 0
    %5199 = vmatprep.subr.bf16.mxu0 0
    %5200 = vmatpush1.bf16.msra.mxu0 0
    %5201 = vmatprep.subr.bf16.mxu0 0
    %5202 = vmatpush1.bf16.msra.mxu0 0
    %5203 = vmatprep.subr.bf16.mxu0 0
    %5204 = vmatpush1.bf16.msra.mxu0 0
    %5205 = vmatprep.subr.bf16.mxu0 0
    %5206 = vmatpush1.bf16.msra.mxu0 0
    %5207 = vmatprep.subr.bf16.mxu0 0
    %5208 = vmatpush1.bf16.msra.mxu0 0
    %5209 = vmatprep.subr.bf16.mxu0 0
    %5210 = vmatpush1.bf16.msra.mxu0 0
    %5211 = vmatprep.subr.bf16.mxu0 0
    %5212 = vmatpush1.bf16.msra.mxu0 0
    %5213 = vmatprep.subr.bf16.mxu0 0
    %5214 = vmatpush1.bf16.msra.mxu0 0
    %5215 = vmatprep.subr.bf16.mxu0 0
    %5216 = vmatpush1.bf16.msra.mxu0 0
    %5217 = vmatprep.mubr.bf16.mxu0 0
    %5218 = vmatmul.mubr.bf16.gmra.mrb[0].mxu0 %v5180
    %v5219 = vpop.f32.mrb[0].mxu0
    %v5220 = vadd.f32 0.0, %v5219
    %v5221 = vpop.f32.mrb[0].mxu0
    %v5222 = vpop.f32.mrb[0].mxu0
    %v5223 = vadd.f32 0.0, %v5222
    %v5224 = vpop.f32.mrb[0].mxu0
    %5225 = vdwg.mxu0
    %v5226 = vadd.f32 %v4946, %v5220
    %v5227 = vadd.f32 %v4947, %v5223
    %v5228 = vld [vmem:[%s2] sm:$0x3]
    %v5229 = vlaneseq
    %v5230 = vshrl.u32 %v5229, 7
    %v5231 = vsub.s32 0, %v5230
    %v5232 = vrot.slane %v5228, %v5231
    %5234 = vbcast.lane.b32.xlu0 %v5232, 256
    %v5235 = vpop.permute.xlu0 %5234
    %v5236 = vlaneseq
    %v5237 = vshrl.u32 %v5236, 7
    %v5238 = vsub.s32 1, %v5237
    %v5239 = vrot.slane %v5228, %v5238
    %5241 = vbcast.lane.b32.xlu0 %v5239, 256
    %v5242 = vpop.permute.xlu0 %5241
    %v5243 = vmul.f32 %v5235, %v5226
    %v5244 = vmul.f32 %v5242, %v5227
    %vm5245 = vcmask 130048
    %v5246 = vsel %vm5245, %v5243, 0.0
    %v5247 = vrot.slane %v5246, 4
    %v5248 = vadd.f32 %v5246, %v5247
    %v5249 = vrot.slane %v5248, 2
    %v5250 = vadd.f32 %v5248, %v5249
    %v5251 = vrot.slane %v5250, 1
    %v5252 = vadd.f32 %v5250, %v5251
    %v5253 = vsel %vm5245, %v5244, 0.0
    %v5254 = vrot.slane %v5253, 4
    %v5255 = vadd.f32 %v5253, %v5254
    %v5256 = vrot.slane %v5255, 2
    %v5257 = vadd.f32 %v5255, %v5256
    %v5258 = vrot.slane %v5257, 1
    %v5259 = vadd.f32 %v5257, %v5258
    %vm5260 = vcmask 58368
    %v5261 = vsel %vm5260, %v5228, 0.0
    %5262 = vadd.xlane.f32.xlu0 %v5261
    %v5263 = vpop.xlane.xlu0 %5262
    %v5264 = vadd.f32 %v5263, 1e-06
    %v5265 = vrcp.pop %v5264
    %v5267 = vrot.slane %v5265, 1
    %v5270 = vmul.f32 %v5252, %v5265
    %v5271 = vmul.f32 %v5259, %v5267
    %v5274 = vrot.slane %v5271, 7
    %vm5275 = vcmask 1041409
    %v5276 = vsel %vm5275, %v5274, %v5270
    %vm5278 = vcmask 123904
    %5279 = vst.msk [vmem:[#allocation2] sm:$0x3] %vm5278, %v5276
    // Predicated region
    $region78: #{tpu_custom_call.1} parent=1 // pred_check
      _
    $region79: #{tpu_custom_call.1} parent=1 // pred_check_branch
      %5281 = sbr.rel (0) target = $region81
    $region80: #{tpu_custom_call.1} parent=1 // pred_region
      %s5283 = ssub.s32 32, 32
      %5284 = vsyncadd [#allocation3], %s5283
      %s5286 = sshll.u32 [#allocation2], 4
      %s5287 = int_to_ptr.vmem [resolvable:$true] %s5286
      %5289 = dma.vmem_to_hbm [thread:$0]  %s5287, 32, %s19, [#allocation3]
    $region81: #{tpu_custom_call.1} parent=1 // pred_fallthru
      _
    // Predicated region
    $region82: #{tpu_custom_call.1} parent=1 // pred_check
      _
    $region83: #{tpu_custom_call.1} parent=1 // pred_check_branch
      %5291 = sbr.rel (0) target = $region85
    $region84: #{tpu_custom_call.1} parent=1 // pred_region
      %5292 = dma.done [#allocation3], 32
    $region85: #{tpu_custom_call.1} parent=1 // pred_fallthru
      _
    %5293 = vsyncpa [#allocation3], 1

</llo_original>
